<compile_context>
chip_gen: v5e
topology: v5e:2x2
jax: 0.10.0
libtpu: 0.0.40
codegen_flags: <defaults>
</compile_context>

<pallas_src>
import math

import jax
import jax.numpy as jnp
import numpy as np
from jax import lax
from jax.experimental import pallas as pl
from jax.experimental.pallas import tpu as pltpu
from jax.scipy.linalg import block_diag


F32 = jnp.float32
BF16 = jnp.bfloat16
_VMEM = pl.BlockSpec(memory_space=pltpu.MemorySpace.VMEM)


# Ordered input-ref names for the single fused kernel.
_IN_NAMES = (
    # per-call graph data
    "b_shape", "b_iou", "org_size", "org_pos", "x", "bsl", "bscale", "eps",
    # static graph operators (precomputed once outside the per-call path)
    "agg", "mask", "pool",
    # fused node-feature init
    "w_in_shape", "w_in_iou", "w_in_size", "w_in_pos", "w_in_x", "n0_const",
    # encoder message-passing convs
    "wi_e1", "wj_e1", "b_e1", "wi_e2", "wj_e2", "b_e2", "wi_e3", "wj_e3", "b_e3",
    # block-shape / block-scale encoders
    "wbs0", "bbs0", "wbs1", "bbs1", "wbsc", "bbsc",
    # aggregate row-split + bias
    "wa0", "wa1", "wa2", "wa3", "wa4bs", "wa4sc", "bagg",
    # fc_mu / fc_var
    "wmu", "bmu", "wvar", "bvar",
    # d_ft_init (per-node weight blocks + selection matrices + bias)
    "wdft3", "adft", "cdft",
    # decoder conv1 (one-hot folded) and conv2/3
    "wi_d1", "wj_d1", "ci_d1", "cj_d1", "b_d1",
    "wi_d2", "wj_d2", "b_d2", "wi_d3", "wj_d3", "b_d3",
    # decode heads (one wide hidden matmul, per-head output matmuls)
    "wh0", "bh0",
    "wh1_ex", "bh1_ex", "wh1_pos", "bh1_pos", "wh1_size", "bh1_size",
    "wh1_shape", "bh1_shape", "wh1_iou", "bh1_iou",
)


# ------------------------------- Pallas kernel ------------------------------ #

def _fused_kernel(*refs):
    r = dict(zip(_IN_NAMES, refs[: len(_IN_NAMES)]))
    (exist_ref, pos_ref, size_ref, mu_ref, logvar_ref,
     bshape_ref, biou_ref) = refs[len(_IN_NAMES):]

    def mm(x, w):
        # bf16 MXU matmul with f32 accumulation (weights are bf16).
        return jnp.dot(x.astype(w.dtype), w, preferred_element_type=F32)

    agg = r["agg"][...]          # [Nn, Nn] dense mean-aggregation operator
    mk = r["mask"][...]          # [Nn, 1]  (in_degree > 0)

    # -------- encode: fused node-feature init (all *_init linears) -------- #
    # columns: [shape C/4 | iou C/4 | size C/2 | pos C/2 | ft C/2]
    h = (mm(r["b_shape"][...], r["w_in_shape"][...])
         + r["b_iou"][...] * r["w_in_iou"][...]           # K=1 dot as broadcast mul
         + mm(r["org_size"][...], r["w_in_size"][...])
         + mm(r["org_pos"][...], r["w_in_pos"][...])
         + mm(r["x"][...], r["w_in_x"][...])
         + r["n0_const"][...])
    col = lax.broadcasted_iota(jnp.int32, h.shape, 1)
    # ReLU only on the size / pos / ft column blocks (cols >= C/2); the
    # shape/iou encodings are not activated in the reference.
    n0 = jnp.where(col >= h.shape[1] // 4, jnp.maximum(h, 0.0), h)

    # -------- message passing (NaiveMsgPass, mean aggregation) -------- #
    def conv(x, wi, wj, b):
        xb = x.astype(wi.dtype)
        sp = jnp.dot(xb, wi, preferred_element_type=F32)
        nb = jnp.dot(agg, jnp.dot(xb, wj, preferred_element_type=F32),
                     preferred_element_type=F32)
        return jnp.maximum(mk * (sp + b) + nb, 0.0)

    n1 = conv(n0, r["wi_e1"][...], r["wj_e1"][...], r["b_e1"][...])
    n2 = conv(n1, r["wi_e2"][...], r["wj_e2"][...], r["b_e2"][...])
    n3 = conv(n2, r["wi_e3"][...], r["wj_e3"][...], r["b_e3"][...])

    # -------- global mean pool + aggregate + mu / logvar + reparameterize ---- #
    # cat(g0,g1,g2,g3) @ W_agg == pool @ (n0@Wa0 + n1@Wa1 + n2@Wa2 + n3@Wa3)
    s = (mm(n0, r["wa0"][...]) + mm(n1, r["wa1"][...])
         + mm(n2, r["wa2"][...]) + mm(n3, r["wa3"][...]))
    pooled = jnp.dot(r["pool"][...], s, preferred_element_type=F32)

    obs = jnp.maximum(mm(r["bsl"][...], r["wbs0"][...]) + r["bbs0"][...], 0.0)
    obs = mm(obs, r["wbs1"][...]) + r["bbs1"][...]
    osc = r["bscale"][...] * r["wbsc"][...] + r["bbsc"][...]

    latent = (pooled + mm(obs, r["wa4bs"][...]) + mm(osc, r["wa4sc"][...])
              + r["bagg"][...])
    mu = mm(latent, r["wmu"][...]) + r["bmu"][...]
    logvar = mm(latent, r["wvar"][...]) + r["bvar"][...]
    mu_ref[...] = mu
    logvar_ref[...] = logvar
    z = r["eps"][...] * jnp.exp(0.5 * logvar) + mu

    # -------- d_ft_init: [B, N*C] -> [B*N, C] without any reshape --------- #
    # For node n, rows {b*N+n} get z[b] @ Wdft[:, nC:(n+1)C]; 0/1 selection
    # matrices place the [B, C] blocks into the right rows (disjoint support,
    # so the single ReLU after the sum is exact).
    acc = r["cdft"][...]
    for n in range(r["wdft3"].shape[0]):
        wn = r["wdft3"][n]                                                 # [L, C]
        zw = jnp.dot(z.astype(wn.dtype), wn, preferred_element_type=F32)   # [B, C]
        acc = acc + jnp.dot(r["adft"][n], zw, preferred_element_type=F32)  # [Nn, C]
    d0 = jnp.maximum(acc, 0.0)

    # -------- decode convs (one-hot block folded into ci_d1 / cj_d1) ------- #
    wi_d1 = r["wi_d1"][...]
    d0b = d0.astype(wi_d1.dtype)
    sp = jnp.dot(d0b, wi_d1, preferred_element_type=F32) + r["ci_d1"][...]
    nbp = jnp.dot(d0b, r["wj_d1"][...], preferred_element_type=F32) + r["cj_d1"][...]
    d1 = jnp.maximum(mk * (sp + r["b_d1"][...])
                     + jnp.dot(agg, nbp, preferred_element_type=F32), 0.0)
    d2 = conv(d1, r["wi_d2"][...], r["wj_d2"][...], r["b_d2"][...])
    d3 = conv(d2, r["wi_d3"][...], r["wj_d3"][...], r["b_d3"][...])

    # -------- decode heads: one wide hidden matmul, then per-head outputs --- #
    # wh0 = [I | Wpx0 | Wpy0 | Wsx0 | Wsy0 | Wsh0 | Wio0]; the identity block
    # passes d3 straight through so d_exist_1 can live in the 2nd layer.
    hid = jnp.maximum(mm(d3, r["wh0"][...]) + r["bh0"][...], 0.0)
    hb = hid.astype(r["wh1_ex"][...].dtype)
    exist_ref[...] = (jnp.dot(hb, r["wh1_ex"][...], preferred_element_type=F32)
                      + r["bh1_ex"][...])
    pos_ref[...] = (jnp.dot(hb, r["wh1_pos"][...], preferred_element_type=F32)
                    + r["bh1_pos"][...])
    size_ref[...] = (jnp.dot(hb, r["wh1_size"][...], preferred_element_type=F32)
                     + r["bh1_size"][...])
    bshape_ref[...] = (jnp.dot(hb, r["wh1_shape"][...], preferred_element_type=F32)
                       + r["bh1_shape"][...])
    biou_ref[...] = (jnp.dot(hb, r["wh1_iou"][...], preferred_element_type=F32)
                     + r["bh1_iou"][...])


def fused_forward(tensors):
    ops = [tensors[nm] for nm in _IN_NAMES]
    nn_ = tensors["agg"].shape[0]
    b_, l_ = tensors["eps"].shape
    out_shape = (
        jax.ShapeDtypeStruct((nn_, 1), F32),   # exist
        jax.ShapeDtypeStruct((nn_, 2), F32),   # pos
        jax.ShapeDtypeStruct((nn_, 2), F32),   # size
        jax.ShapeDtypeStruct((b_, l_), F32),   # mu
        jax.ShapeDtypeStruct((b_, l_), F32),   # log_var
        jax.ShapeDtypeStruct((nn_, 6), F32),   # b_shape
        jax.ShapeDtypeStruct((nn_, 1), F32),   # b_iou
    )
    return pl.pallas_call(
        _fused_kernel,
        out_shape=out_shape,
        in_specs=[_VMEM] * len(ops),
        out_specs=tuple(_VMEM for _ in out_shape),
    )(*ops)


# ------------------------------- parameters -------------------------------- #

def _make_linear(key, fan_in, fan_out):
    """Deterministic xavier-uniform (relu gain) weights + uniform bias."""
    kw, kb = jax.random.split(key)
    gain = math.sqrt(2.0)
    limit = gain * math.sqrt(6.0 / (fan_in + fan_out))
    w = jax.random.uniform(kw, (fan_in, fan_out), F32, -limit, limit)
    bb = 1.0 / math.sqrt(fan_in)
    b = jax.random.uniform(kb, (1, fan_out), F32, -bb, bb)
    return w, b


def _make_conv(key, in_ch, out_ch):
    """NaiveMsgPass.lin == Linear(2*in_ch, out_ch); split into Wi (x_i) / Wj (x_j)."""
    w, b = _make_linear(key, 2 * in_ch, out_ch)
    return w[:in_ch, :], w[in_ch:, :], b


def init_params(key, N, latent_ch, latent_dim, block_latent_dim):
    C, L = latent_ch, latent_dim
    # enc_asp_rto / enc_long_side / d_exist_0 exist in the reference but their
    # outputs are never used -> omitted (dead code).
    names = [
        ("ex_init", 2, C // 4), ("ft_init", C // 4 + N, C // 2),
        ("pos_init", 2, C // 2), ("size_init", 2, C // 2),
        ("d_ft_init", L, C * N),
        ("aggregate", int(C * (2.5 + 3)), L),
        ("fc_mu", L, L), ("fc_var", L, L),
        ("d_exist_1", C, 1),
        ("d_posx_0", C, C), ("d_posx_1", C, 1),
        ("d_posy_0", C, C), ("d_posy_1", C, 1),
        ("d_sizex_0", C, C), ("d_sizex_1", C, 1),
        ("d_sizey_0", C, C), ("d_sizey_1", C, 1),
        ("enc_shape", 6, C // 4), ("enc_iou", 1, C // 4),
        ("d_shape_0", C, C), ("d_shape_1", C, 6),
        ("d_iou_0", C, C), ("d_iou_1", C, 1),
        ("enc_block_shape_0", block_latent_dim, C // 4),
        ("enc_block_shape_1", C // 4, C // 4),
        ("enc_block_scale", 1, C // 4),
    ]
    convs = [
        ("e_conv1", int(C * 2.0), C), ("e_conv2", C, C), ("e_conv3", C, C),
        ("d_conv1", C + N, C), ("d_conv2", C, C), ("d_conv3", C, C),
    ]
    keys = jax.random.split(key, len(names) + len(convs))
    params = {}
    for (nm, fi, fo), k in zip(names, keys[: len(names)]):
        params[nm] = _make_linear(k, fi, fo)
    for (nm, fi, fo), k in zip(convs, keys[len(names):]):
        params[nm] = _make_conv(k, fi, fo)
    return params


def prepare_fused_params(params, N, B, C, L):
    """Host-side (one-time) weight fusion: block-diagonals, row/column splits,
    one-hot identity folds, per-node d_ft_init blocks; weights cast to bf16."""
    c4, c2 = C // 4, C // 2
    f = {}

    # encoder node-feature init: one matmul-sum over the raw feature arrays.
    wsh, bsh = params["enc_shape"]
    wio, bio = params["enc_iou"]
    wsz, bsz = params["size_init"]
    wps, bps = params["pos_init"]
    wex, bex = params["ex_init"]
    wft, bft = params["ft_init"]
    wx2ft = wex @ wft[:c4]                       # ex_init composed with ft_init
    w_init = block_diag(wsh, wio, wsz, wps, wx2ft)      # [13, 2C]
    f["w_in_shape"] = w_init[0:6].astype(BF16)
    f["w_in_iou"] = w_init[6:7].astype(BF16)
    f["w_in_size"] = w_init[7:9].astype(BF16)
    f["w_in_pos"] = w_init[9:11].astype(BF16)
    f["w_in_x"] = w_init[11:13].astype(BF16)
    base = jnp.concatenate([bsh, bio, bsz, bps, bex @ wft[:c4] + bft], axis=1)
    n0c = jnp.tile(base, (B * N, 1))
    n0c = n0c.at[:, 3 * c2:].add(jnp.tile(wft[c4:], (B, 1)))  # one-hot rows per node
    f["n0_const"] = n0c.astype(F32)

    # message-passing convs
    def put_conv(name, prefix):
        wi, wj, b = params[name]
        f["wi_" + prefix] = wi.astype(BF16)
        f["wj_" + prefix] = wj.astype(BF16)
        f["b_" + prefix] = b.astype(F32)
    put_conv("e_conv1", "e1"); put_conv("e_conv2", "e2"); put_conv("e_conv3", "e3")
    put_conv("d_conv2", "d2"); put_conv("d_conv3", "d3")

    wi1, wj1, b1 = params["d_conv1"]
    f["wi_d1"] = wi1[:C].astype(BF16)
    f["wj_d1"] = wj1[:C].astype(BF16)
    f["ci_d1"] = jnp.tile(wi1[C:], (B, 1)).astype(F32)   # one-hot block folded
    f["cj_d1"] = jnp.tile(wj1[C:], (B, 1)).astype(F32)
    f["b_d1"] = b1.astype(F32)

    # block-shape / block-scale encoders
    f["wbs0"] = params["enc_block_shape_0"][0].astype(BF16)
    f["bbs0"] = params["enc_block_shape_0"][1].astype(F32)
    f["wbs1"] = params["enc_block_shape_1"][0].astype(BF16)
    f["bbs1"] = params["enc_block_shape_1"][1].astype(F32)
    f["wbsc"] = params["enc_block_scale"][0].astype(BF16)
    f["bbsc"] = params["enc_block_scale"][1].astype(F32)

    # aggregate row-split: cat(g0,g1,g2,g3,ogf)@W -> sum of per-part dots
    wagg, bagg = params["aggregate"]
    f["wa0"] = wagg[: 2 * C].astype(BF16)
    f["wa1"] = wagg[2 * C: 3 * C].astype(BF16)
    f["wa2"] = wagg[3 * C: 4 * C].astype(BF16)
    f["wa3"] = wagg[4 * C: 5 * C].astype(BF16)
    f["wa4bs"] = wagg[5 * C: 5 * C + c4].astype(BF16)
    f["wa4sc"] = wagg[5 * C + c4:].astype(BF16)
    f["bagg"] = bagg.astype(F32)

    f["wmu"] = params["fc_mu"][0].astype(BF16)
    f["bmu"] = params["fc_mu"][1].astype(F32)
    f["wvar"] = params["fc_var"][0].astype(BF16)
    f["bvar"] = params["fc_var"][1].astype(F32)

    # d_ft_init: per-node [L, C] weight blocks + 0/1 row-selection matrices so
    # the [B, N*C] -> [B*N, C] reshape never happens (not in XLA, not in-kernel).
    wdft, bdft = params["d_ft_init"]
    f["wdft3"] = jnp.transpose(wdft.reshape(L, N, C), (1, 0, 2)).astype(BF16)  # [N,L,C]
    f["cdft"] = jnp.tile(bdft.reshape(N, C), (B, 1)).astype(F32)               # [Nn,C]
    sel = np.zeros((N, B * N, B), np.float32)
    for n in range(N):
        for b in range(B):
            sel[n, b * N + n, b] = 1.0
    f["adft"] = jnp.asarray(sel)                                               # [N,Nn,B]

    # decode heads: 13 linears -> 1 wide hidden matmul + per-head 2nd layers
    f["wh0"] = jnp.concatenate(
        [jnp.eye(C, dtype=F32), params["d_posx_0"][0], params["d_posy_0"][0],
         params["d_sizex_0"][0], params["d_sizey_0"][0],
         params["d_shape_0"][0], params["d_iou_0"][0]], axis=1).astype(BF16)
    f["bh0"] = jnp.concatenate(
        [jnp.zeros((1, C), F32), params["d_posx_0"][1], params["d_posy_0"][1],
         params["d_sizex_0"][1], params["d_sizey_0"][1],
         params["d_shape_0"][1], params["d_iou_0"][1]], axis=1).astype(F32)
    wh1 = block_diag(params["d_exist_1"][0], params["d_posx_1"][0],
                     params["d_posy_1"][0], params["d_sizex_1"][0],
                     params["d_sizey_1"][0], params["d_shape_1"][0],
                     params["d_iou_1"][0])                                     # [7C, 12]
    bh1 = jnp.concatenate(
        [params["d_exist_1"][1], params["d_posx_1"][1], params["d_posy_1"][1],
         params["d_sizex_1"][1], params["d_sizey_1"][1],
         params["d_shape_1"][1], params["d_iou_1"][1]], axis=1)                # [1, 12]
    f["wh1_ex"] = wh1[:, 0:1].astype(BF16);   f["bh1_ex"] = bh1[:, 0:1].astype(F32)
    f["wh1_pos"] = wh1[:, 1:3].astype(BF16);  f["bh1_pos"] = bh1[:, 1:3].astype(F32)
    f["wh1_size"] = wh1[:, 3:5].astype(BF16); f["bh1_size"] = bh1[:, 3:5].astype(F32)
    f["wh1_shape"] = wh1[:, 5:11].astype(BF16)
    f["bh1_shape"] = bh1[:, 5:11].astype(F32)
    f["wh1_iou"] = wh1[:, 11:12].astype(BF16)
    f["bh1_iou"] = bh1[:, 11:12].astype(F32)
    return f


# ------------------------------ glue / model -------------------------------- #

def build_agg(edge_index, num_nodes):
    src, dst = edge_index[0], edge_index[1]
    counts = jnp.zeros((num_nodes, num_nodes), F32).at[dst, src].add(1.0)
    deg = counts.sum(axis=1, keepdims=True)
    mask = (deg > 0).astype(F32)
    agg = counts / jnp.maximum(deg, 1.0)
    return agg, mask


def build_pool(batch, num_graphs):
    onehot = jax.nn.one_hot(batch, num_graphs, dtype=F32)   # [Nn, B]
    counts = onehot.sum(axis=0)                             # [B]
    return onehot.T / jnp.maximum(counts, 1.0)[:, None]     # [B, Nn]


@jax.jit
def block_generator_forward(fused, data, graph_ops, eps):
    """Whole forward = exactly one pallas_call (plus two trivial reshapes)."""
    agg, mask, pool = graph_ops
    B = eps.shape[0]
    tensors = dict(fused)
    tensors.update(
        b_shape=data["b_shape"], b_iou=data["b_iou"],
        org_size=data["org_node_size"], org_pos=data["org_node_pos"],
        x=data["x"],
        bsl=data["blockshape_latent_gt"].reshape(B, -1),
        bscale=data["block_scale_gt"].reshape(B, 1),
        eps=eps, agg=agg, mask=mask, pool=pool,
    )
    return fused_forward(tensors)


# --------------------------------- main ------------------------------------ #

if __name__ == "__main__":
    # small, forward-consistent config
    B = 2                  # number of graphs in the batch
    N = 8                  # nodes per graph
    LATENT_CH = 32         # opt['n_ft_dim']   (divisible by 4)
    LATENT_DIM = 32        # opt['latent_dim']
    BLOCK_LATENT_DIM = 16  # opt['block_latent_dim']
    NUM_NODES = B * N

    key = jax.random.PRNGKey(0)
    k_param, k_data, k_eps = jax.random.split(key, 3)
    params = init_params(k_param, N, LATENT_CH, LATENT_DIM, BLOCK_LATENT_DIM)
    fused = prepare_fused_params(params, N, B, LATENT_CH, LATENT_DIM)

    # deterministic bidirectional ring within each sub-graph
    edges = []
    for b in range(B):
        for i in range(N):
            s, d = b * N + i, b * N + (i + 1) % N
            edges.append((s, d))
            edges.append((d, s))
    edge_index = jnp.asarray(np.array(edges, dtype=np.int32).T)  # [2, E]
    batch = jnp.repeat(jnp.arange(B, dtype=jnp.int32), N)

    # graph topology is static -> build the dense mean-aggregation / pooling
    # operators ONCE, outside the per-call (jitted) path.
    agg, mask = build_agg(edge_index, NUM_NODES)
    pool = build_pool(batch, B)
    graph_ops = (jax.block_until_ready(agg), jax.block_until_ready(mask),
                 jax.block_until_ready(pool))

    dk = jax.random.split(k_data, 9)
    data = {
        "x": jax.random.normal(dk[0], (NUM_NODES, 2), F32),
        "edge_index": edge_index,                                    # topology (pre-folded)
        "b_shape": jax.random.normal(dk[1], (NUM_NODES, 6), F32),
        "b_iou": jax.random.normal(dk[2], (NUM_NODES, 1), F32),
        "org_node_pos": jax.random.normal(dk[3], (NUM_NODES, 2), F32),
        "org_node_size": jax.random.normal(dk[4], (NUM_NODES, 2), F32),
        "asp_rto_gt": jax.random.normal(dk[5], (B,), F32),           # unused (as in reference)
        "long_side_gt": jax.random.normal(dk[6], (B,), F32),         # unused (as in reference)
        "blockshape_latent_gt": jax.random.normal(dk[7], (B, BLOCK_LATENT_DIM), F32),
        "block_scale_gt": jax.random.normal(dk[8], (B,), F32),
        "batch": batch,
        "ptr": jnp.arange(B + 1, dtype=jnp.int32) * N,
    }

    # TODO(synk): torch.randn_like(eps) in reparameterize has no shared RNG with
    # JAX; a fixed PRNGKey-derived eps is used instead (deterministic here).
    eps = jax.random.normal(k_eps, (B, LATENT_DIM), F32)

    outs = block_generator_forward(fused, data, graph_ops, eps)
    outs = jax.block_until_ready(outs)

    exist, pos, size, mu, log_var, b_shape_o, b_iou_o = outs
    assert exist.shape == (NUM_NODES, 1)
    assert pos.shape == (NUM_NODES, 2) and size.shape == (NUM_NODES, 2)
    assert mu.shape == (B, LATENT_DIM) and log_var.shape == (B, LATENT_DIM)
    assert b_shape_o.shape == (NUM_NODES, 6) and b_iou_o.shape == (NUM_NODES, 1)
    assert all(bool(jnp.all(jnp.isfinite(o))) for o in outs)
    print("KERNEL_OK")
</pallas_src>

<mosaic_0001>
module attributes {stable_mosaic.version = 11 : i64} {
  func.func @_fused_kernel(%arg0: memref<16x6xf32, #tpu.memory_space<vmem>>, %arg1: memref<16x1xf32, #tpu.memory_space<vmem>>, %arg2: memref<16x2xf32, #tpu.memory_space<vmem>>, %arg3: memref<16x2xf32, #tpu.memory_space<vmem>>, %arg4: memref<16x2xf32, #tpu.memory_space<vmem>>, %arg5: memref<2x16xf32, #tpu.memory_space<vmem>>, %arg6: memref<2x1xf32, #tpu.memory_space<vmem>>, %arg7: memref<2x32xf32, #tpu.memory_space<vmem>>, %arg8: memref<16x16xf32, #tpu.memory_space<vmem>>, %arg9: memref<16x1xf32, #tpu.memory_space<vmem>>, %arg10: memref<2x16xf32, #tpu.memory_space<vmem>>, %arg11: memref<6x64xbf16, #tpu.memory_space<vmem>>, %arg12: memref<1x64xbf16, #tpu.memory_space<vmem>>, %arg13: memref<2x64xbf16, #tpu.memory_space<vmem>>, %arg14: memref<2x64xbf16, #tpu.memory_space<vmem>>, %arg15: memref<2x64xbf16, #tpu.memory_space<vmem>>, %arg16: memref<16x64xf32, #tpu.memory_space<vmem>>, %arg17: memref<64x32xbf16, #tpu.memory_space<vmem>>, %arg18: memref<64x32xbf16, #tpu.memory_space<vmem>>, %arg19: memref<1x32xf32, #tpu.memory_space<vmem>>, %arg20: memref<32x32xbf16, #tpu.memory_space<vmem>>, %arg21: memref<32x32xbf16, #tpu.memory_space<vmem>>, %arg22: memref<1x32xf32, #tpu.memory_space<vmem>>, %arg23: memref<32x32xbf16, #tpu.memory_space<vmem>>, %arg24: memref<32x32xbf16, #tpu.memory_space<vmem>>, %arg25: memref<1x32xf32, #tpu.memory_space<vmem>>, %arg26: memref<16x8xbf16, #tpu.memory_space<vmem>>, %arg27: memref<1x8xf32, #tpu.memory_space<vmem>>, %arg28: memref<8x8xbf16, #tpu.memory_space<vmem>>, %arg29: memref<1x8xf32, #tpu.memory_space<vmem>>, %arg30: memref<1x8xbf16, #tpu.memory_space<vmem>>, %arg31: memref<1x8xf32, #tpu.memory_space<vmem>>, %arg32: memref<64x32xbf16, #tpu.memory_space<vmem>>, %arg33: memref<32x32xbf16, #tpu.memory_space<vmem>>, %arg34: memref<32x32xbf16, #tpu.memory_space<vmem>>, %arg35: memref<32x32xbf16, #tpu.memory_space<vmem>>, %arg36: memref<8x32xbf16, #tpu.memory_space<vmem>>, %arg37: memref<8x32xbf16, #tpu.memory_space<vmem>>, %arg38: memref<1x32xf32, #tpu.memory_space<vmem>>, %arg39: memref<32x32xbf16, #tpu.memory_space<vmem>>, %arg40: memref<1x32xf32, #tpu.memory_space<vmem>>, %arg41: memref<32x32xbf16, #tpu.memory_space<vmem>>, %arg42: memref<1x32xf32, #tpu.memory_space<vmem>>, %arg43: memref<8x32x32xbf16, #tpu.memory_space<vmem>>, %arg44: memref<8x16x2xf32, #tpu.memory_space<vmem>>, %arg45: memref<16x32xf32, #tpu.memory_space<vmem>>, %arg46: memref<32x32xbf16, #tpu.memory_space<vmem>>, %arg47: memref<32x32xbf16, #tpu.memory_space<vmem>>, %arg48: memref<16x32xf32, #tpu.memory_space<vmem>>, %arg49: memref<16x32xf32, #tpu.memory_space<vmem>>, %arg50: memref<1x32xf32, #tpu.memory_space<vmem>>, %arg51: memref<32x32xbf16, #tpu.memory_space<vmem>>, %arg52: memref<32x32xbf16, #tpu.memory_space<vmem>>, %arg53: memref<1x32xf32, #tpu.memory_space<vmem>>, %arg54: memref<32x32xbf16, #tpu.memory_space<vmem>>, %arg55: memref<32x32xbf16, #tpu.memory_space<vmem>>, %arg56: memref<1x32xf32, #tpu.memory_space<vmem>>, %arg57: memref<32x224xbf16, #tpu.memory_space<vmem>>, %arg58: memref<1x224xf32, #tpu.memory_space<vmem>>, %arg59: memref<224x1xbf16, #tpu.memory_space<vmem>>, %arg60: memref<1x1xf32, #tpu.memory_space<vmem>>, %arg61: memref<224x2xbf16, #tpu.memory_space<vmem>>, %arg62: memref<1x2xf32, #tpu.memory_space<vmem>>, %arg63: memref<224x2xbf16, #tpu.memory_space<vmem>>, %arg64: memref<1x2xf32, #tpu.memory_space<vmem>>, %arg65: memref<224x6xbf16, #tpu.memory_space<vmem>>, %arg66: memref<1x6xf32, #tpu.memory_space<vmem>>, %arg67: memref<224x1xbf16, #tpu.memory_space<vmem>>, %arg68: memref<1x1xf32, #tpu.memory_space<vmem>>, %arg69: memref<16x1xf32, #tpu.memory_space<vmem>>, %arg70: memref<16x2xf32, #tpu.memory_space<vmem>>, %arg71: memref<16x2xf32, #tpu.memory_space<vmem>>, %arg72: memref<2x32xf32, #tpu.memory_space<vmem>>, %arg73: memref<2x32xf32, #tpu.memory_space<vmem>>, %arg74: memref<16x6xf32, #tpu.memory_space<vmem>>, %arg75: memref<16x1xf32, #tpu.memory_space<vmem>>) attributes {dimension_semantics = [], scalar_prefetch = 0 : i64, scratch_operands = 0 : i64, tpu.core_type = #tpu.core_type<tc>} {
    %c0 = arith.constant 0 : index
    %c0_0 = arith.constant 0 : index
    %0 = vector.load %arg8[%c0, %c0_0] : memref<16x16xf32, #tpu.memory_space<vmem>>, vector<16x16xf32>
    %c0_1 = arith.constant 0 : index
    %c0_2 = arith.constant 0 : index
    %1 = vector.load %arg9[%c0_1, %c0_2] : memref<16x1xf32, #tpu.memory_space<vmem>>, vector<16x1xf32>
    %c0_3 = arith.constant 0 : index
    %c0_4 = arith.constant 0 : index
    %2 = vector.load %arg0[%c0_3, %c0_4] : memref<16x6xf32, #tpu.memory_space<vmem>>, vector<16x6xf32>
    %c0_5 = arith.constant 0 : index
    %c0_6 = arith.constant 0 : index
    %3 = vector.load %arg11[%c0_5, %c0_6] : memref<6x64xbf16, #tpu.memory_space<vmem>>, vector<6x64xbf16>
    %4 = arith.truncf %2 : vector<16x6xf32> to vector<16x6xbf16>
    %cst = arith.constant dense<0.000000e+00> : vector<16x64xf32>
    %5 = tpu.matmul %4, %3, %cst {dimension_numbers = #tpu.dot_dimension_numbers<[1], [0], [0], [1], [0, 0, 1, 1], [], []>} : vector<16x6xbf16>, vector<6x64xbf16>, vector<16x64xf32> -> vector<16x64xf32>
    %c0_7 = arith.constant 0 : index
    %c0_8 = arith.constant 0 : index
    %6 = vector.load %arg1[%c0_7, %c0_8] : memref<16x1xf32, #tpu.memory_space<vmem>>, vector<16x1xf32>
    %c0_9 = arith.constant 0 : index
    %c0_10 = arith.constant 0 : index
    %7 = vector.load %arg12[%c0_9, %c0_10] : memref<1x64xbf16, #tpu.memory_space<vmem>>, vector<1x64xbf16>
    %8 = arith.extf %7 : vector<1x64xbf16> to vector<1x64xf32>
    %9 = vector.broadcast %6 : vector<16x1xf32> to vector<16x64xf32>
    %10 = vector.broadcast %8 : vector<1x64xf32> to vector<16x64xf32>
    %11 = arith.mulf %9, %10 : vector<16x64xf32>
    %12 = arith.addf %5, %11 : vector<16x64xf32>
    %c0_11 = arith.constant 0 : index
    %c0_12 = arith.constant 0 : index
    %13 = vector.load %arg2[%c0_11, %c0_12] : memref<16x2xf32, #tpu.memory_space<vmem>>, vector<16x2xf32>
    %c0_13 = arith.constant 0 : index
    %c0_14 = arith.constant 0 : index
    %14 = vector.load %arg13[%c0_13, %c0_14] : memref<2x64xbf16, #tpu.memory_space<vmem>>, vector<2x64xbf16>
    %15 = arith.truncf %13 : vector<16x2xf32> to vector<16x2xbf16>
    %cst_15 = arith.constant dense<0.000000e+00> : vector<16x64xf32>
    %16 = tpu.matmul %15, %14, %cst_15 {dimension_numbers = #tpu.dot_dimension_numbers<[1], [0], [0], [1], [0, 0, 1, 1], [], []>} : vector<16x2xbf16>, vector<2x64xbf16>, vector<16x64xf32> -> vector<16x64xf32>
    %17 = arith.addf %12, %16 : vector<16x64xf32>
    %c0_16 = arith.constant 0 : index
    %c0_17 = arith.constant 0 : index
    %18 = vector.load %arg3[%c0_16, %c0_17] : memref<16x2xf32, #tpu.memory_space<vmem>>, vector<16x2xf32>
    %c0_18 = arith.constant 0 : index
    %c0_19 = arith.constant 0 : index
    %19 = vector.load %arg14[%c0_18, %c0_19] : memref<2x64xbf16, #tpu.memory_space<vmem>>, vector<2x64xbf16>
    %20 = arith.truncf %18 : vector<16x2xf32> to vector<16x2xbf16>
    %cst_20 = arith.constant dense<0.000000e+00> : vector<16x64xf32>
    %21 = tpu.matmul %20, %19, %cst_20 {dimension_numbers = #tpu.dot_dimension_numbers<[1], [0], [0], [1], [0, 0, 1, 1], [], []>} : vector<16x2xbf16>, vector<2x64xbf16>, vector<16x64xf32> -> vector<16x64xf32>
    %22 = arith.addf %17, %21 : vector<16x64xf32>
    %c0_21 = arith.constant 0 : index
    %c0_22 = arith.constant 0 : index
    %23 = vector.load %arg4[%c0_21, %c0_22] : memref<16x2xf32, #tpu.memory_space<vmem>>, vector<16x2xf32>
    %c0_23 = arith.constant 0 : index
    %c0_24 = arith.constant 0 : index
    %24 = vector.load %arg15[%c0_23, %c0_24] : memref<2x64xbf16, #tpu.memory_space<vmem>>, vector<2x64xbf16>
    %25 = arith.truncf %23 : vector<16x2xf32> to vector<16x2xbf16>
    %cst_25 = arith.constant dense<0.000000e+00> : vector<16x64xf32>
    %26 = tpu.matmul %25, %24, %cst_25 {dimension_numbers = #tpu.dot_dimension_numbers<[1], [0], [0], [1], [0, 0, 1, 1], [], []>} : vector<16x2xbf16>, vector<2x64xbf16>, vector<16x64xf32> -> vector<16x64xf32>
    %27 = arith.addf %22, %26 : vector<16x64xf32>
    %c0_26 = arith.constant 0 : index
    %c0_27 = arith.constant 0 : index
    %28 = vector.load %arg16[%c0_26, %c0_27] : memref<16x64xf32, #tpu.memory_space<vmem>>, vector<16x64xf32>
    %29 = arith.addf %27, %28 : vector<16x64xf32>
    %30 = tpu.iota {dimensions = array<i32: 1>} : vector<16x64xi32>
    %c16_i32 = arith.constant 16 : i32
    %31 = vector.broadcast %c16_i32 : i32 to vector<16x64xi32>
    %32 = arith.cmpi sge, %30, %31 : vector<16x64xi32>
    %cst_28 = arith.constant 0.000000e+00 : f32
    %33 = vector.broadcast %cst_28 : f32 to vector<16x64xf32>
    %34 = arith.maximumf %29, %33 : vector<16x64xf32>
    %35 = arith.select %32, %34, %29 : vector<16x64xi1>, vector<16x64xf32>
    %c0_29 = arith.constant 0 : index
    %c0_30 = arith.constant 0 : index
    %36 = vector.load %arg17[%c0_29, %c0_30] : memref<64x32xbf16, #tpu.memory_space<vmem>>, vector<64x32xbf16>
    %c0_31 = arith.constant 0 : index
    %c0_32 = arith.constant 0 : index
    %37 = vector.load %arg18[%c0_31, %c0_32] : memref<64x32xbf16, #tpu.memory_space<vmem>>, vector<64x32xbf16>
    %c0_33 = arith.constant 0 : index
    %c0_34 = arith.constant 0 : index
    %38 = vector.load %arg19[%c0_33, %c0_34] : memref<1x32xf32, #tpu.memory_space<vmem>>, vector<1x32xf32>
    %39 = arith.truncf %35 : vector<16x64xf32> to vector<16x64xbf16>
    %cst_35 = arith.constant dense<0.000000e+00> : vector<16x32xf32>
    %40 = tpu.matmul %39, %36, %cst_35 {dimension_numbers = #tpu.dot_dimension_numbers<[1], [0], [0], [1], [0, 0, 1, 1], [], []>} : vector<16x64xbf16>, vector<64x32xbf16>, vector<16x32xf32> -> vector<16x32xf32>
    %cst_36 = arith.constant dense<0.000000e+00> : vector<16x32xf32>
    %41 = tpu.matmul %39, %37, %cst_36 {dimension_numbers = #tpu.dot_dimension_numbers<[1], [0], [0], [1], [0, 0, 1, 1], [], []>} : vector<16x64xbf16>, vector<64x32xbf16>, vector<16x32xf32> -> vector<16x32xf32>
    %cst_37 = arith.constant dense<0.000000e+00> : vector<16x32xf32>
    %42 = tpu.matmul %0, %41, %cst_37 {dimension_numbers = #tpu.dot_dimension_numbers<[1], [0], [0], [1], [0, 0, 1, 1], [], []>} : vector<16x16xf32>, vector<16x32xf32>, vector<16x32xf32> -> vector<16x32xf32>
    %43 = vector.broadcast %38 : vector<1x32xf32> to vector<16x32xf32>
    %44 = arith.addf %40, %43 : vector<16x32xf32>
    %45 = vector.broadcast %1 : vector<16x1xf32> to vector<16x32xf32>
    %46 = arith.mulf %45, %44 : vector<16x32xf32>
    %47 = arith.addf %46, %42 : vector<16x32xf32>
    %cst_38 = arith.constant 0.000000e+00 : f32
    %48 = vector.broadcast %cst_38 : f32 to vector<16x32xf32>
    %49 = arith.maximumf %47, %48 : vector<16x32xf32>
    %c0_39 = arith.constant 0 : index
    %c0_40 = arith.constant 0 : index
    %50 = vector.load %arg20[%c0_39, %c0_40] : memref<32x32xbf16, #tpu.memory_space<vmem>>, vector<32x32xbf16>
    %c0_41 = arith.constant 0 : index
    %c0_42 = arith.constant 0 : index
    %51 = vector.load %arg21[%c0_41, %c0_42] : memref<32x32xbf16, #tpu.memory_space<vmem>>, vector<32x32xbf16>
    %c0_43 = arith.constant 0 : index
    %c0_44 = arith.constant 0 : index
    %52 = vector.load %arg22[%c0_43, %c0_44] : memref<1x32xf32, #tpu.memory_space<vmem>>, vector<1x32xf32>
    %53 = arith.truncf %49 : vector<16x32xf32> to vector<16x32xbf16>
    %cst_45 = arith.constant dense<0.000000e+00> : vector<16x32xf32>
    %54 = tpu.matmul %53, %50, %cst_45 {dimension_numbers = #tpu.dot_dimension_numbers<[1], [0], [0], [1], [0, 0, 1, 1], [], []>} : vector<16x32xbf16>, vector<32x32xbf16>, vector<16x32xf32> -> vector<16x32xf32>
    %cst_46 = arith.constant dense<0.000000e+00> : vector<16x32xf32>
    %55 = tpu.matmul %53, %51, %cst_46 {dimension_numbers = #tpu.dot_dimension_numbers<[1], [0], [0], [1], [0, 0, 1, 1], [], []>} : vector<16x32xbf16>, vector<32x32xbf16>, vector<16x32xf32> -> vector<16x32xf32>
    %cst_47 = arith.constant dense<0.000000e+00> : vector<16x32xf32>
    %56 = tpu.matmul %0, %55, %cst_47 {dimension_numbers = #tpu.dot_dimension_numbers<[1], [0], [0], [1], [0, 0, 1, 1], [], []>} : vector<16x16xf32>, vector<16x32xf32>, vector<16x32xf32> -> vector<16x32xf32>
    %57 = vector.broadcast %52 : vector<1x32xf32> to vector<16x32xf32>
    %58 = arith.addf %54, %57 : vector<16x32xf32>
    %59 = vector.broadcast %1 : vector<16x1xf32> to vector<16x32xf32>
    %60 = arith.mulf %59, %58 : vector<16x32xf32>
    %61 = arith.addf %60, %56 : vector<16x32xf32>
    %cst_48 = arith.constant 0.000000e+00 : f32
    %62 = vector.broadcast %cst_48 : f32 to vector<16x32xf32>
    %63 = arith.maximumf %61, %62 : vector<16x32xf32>
    %c0_49 = arith.constant 0 : index
    %c0_50 = arith.constant 0 : index
    %64 = vector.load %arg23[%c0_49, %c0_50] : memref<32x32xbf16, #tpu.memory_space<vmem>>, vector<32x32xbf16>
    %c0_51 = arith.constant 0 : index
    %c0_52 = arith.constant 0 : index
    %65 = vector.load %arg24[%c0_51, %c0_52] : memref<32x32xbf16, #tpu.memory_space<vmem>>, vector<32x32xbf16>
    %c0_53 = arith.constant 0 : index
    %c0_54 = arith.constant 0 : index
    %66 = vector.load %arg25[%c0_53, %c0_54] : memref<1x32xf32, #tpu.memory_space<vmem>>, vector<1x32xf32>
    %67 = arith.truncf %63 : vector<16x32xf32> to vector<16x32xbf16>
    %cst_55 = arith.constant dense<0.000000e+00> : vector<16x32xf32>
    %68 = tpu.matmul %67, %64, %cst_55 {dimension_numbers = #tpu.dot_dimension_numbers<[1], [0], [0], [1], [0, 0, 1, 1], [], []>} : vector<16x32xbf16>, vector<32x32xbf16>, vector<16x32xf32> -> vector<16x32xf32>
    %cst_56 = arith.constant dense<0.000000e+00> : vector<16x32xf32>
    %69 = tpu.matmul %67, %65, %cst_56 {dimension_numbers = #tpu.dot_dimension_numbers<[1], [0], [0], [1], [0, 0, 1, 1], [], []>} : vector<16x32xbf16>, vector<32x32xbf16>, vector<16x32xf32> -> vector<16x32xf32>
    %cst_57 = arith.constant dense<0.000000e+00> : vector<16x32xf32>
    %70 = tpu.matmul %0, %69, %cst_57 {dimension_numbers = #tpu.dot_dimension_numbers<[1], [0], [0], [1], [0, 0, 1, 1], [], []>} : vector<16x16xf32>, vector<16x32xf32>, vector<16x32xf32> -> vector<16x32xf32>
    %71 = vector.broadcast %66 : vector<1x32xf32> to vector<16x32xf32>
    %72 = arith.addf %68, %71 : vector<16x32xf32>
    %73 = vector.broadcast %1 : vector<16x1xf32> to vector<16x32xf32>
    %74 = arith.mulf %73, %72 : vector<16x32xf32>
    %75 = arith.addf %74, %70 : vector<16x32xf32>
    %cst_58 = arith.constant 0.000000e+00 : f32
    %76 = vector.broadcast %cst_58 : f32 to vector<16x32xf32>
    %77 = arith.maximumf %75, %76 : vector<16x32xf32>
    %c0_59 = arith.constant 0 : index
    %c0_60 = arith.constant 0 : index
    %78 = vector.load %arg32[%c0_59, %c0_60] : memref<64x32xbf16, #tpu.memory_space<vmem>>, vector<64x32xbf16>
    %79 = arith.truncf %35 : vector<16x64xf32> to vector<16x64xbf16>
    %cst_61 = arith.constant dense<0.000000e+00> : vector<16x32xf32>
    %80 = tpu.matmul %79, %78, %cst_61 {dimension_numbers = #tpu.dot_dimension_numbers<[1], [0], [0], [1], [0, 0, 1, 1], [], []>} : vector<16x64xbf16>, vector<64x32xbf16>, vector<16x32xf32> -> vector<16x32xf32>
    %c0_62 = arith.constant 0 : index
    %c0_63 = arith.constant 0 : index
    %81 = vector.load %arg33[%c0_62, %c0_63] : memref<32x32xbf16, #tpu.memory_space<vmem>>, vector<32x32xbf16>
    %82 = arith.truncf %49 : vector<16x32xf32> to vector<16x32xbf16>
    %cst_64 = arith.constant dense<0.000000e+00> : vector<16x32xf32>
    %83 = tpu.matmul %82, %81, %cst_64 {dimension_numbers = #tpu.dot_dimension_numbers<[1], [0], [0], [1], [0, 0, 1, 1], [], []>} : vector<16x32xbf16>, vector<32x32xbf16>, vector<16x32xf32> -> vector<16x32xf32>
    %84 = arith.addf %80, %83 : vector<16x32xf32>
    %c0_65 = arith.constant 0 : index
    %c0_66 = arith.constant 0 : index
    %85 = vector.load %arg34[%c0_65, %c0_66] : memref<32x32xbf16, #tpu.memory_space<vmem>>, vector<32x32xbf16>
    %86 = arith.truncf %63 : vector<16x32xf32> to vector<16x32xbf16>
    %cst_67 = arith.constant dense<0.000000e+00> : vector<16x32xf32>
    %87 = tpu.matmul %86, %85, %cst_67 {dimension_numbers = #tpu.dot_dimension_numbers<[1], [0], [0], [1], [0, 0, 1, 1], [], []>} : vector<16x32xbf16>, vector<32x32xbf16>, vector<16x32xf32> -> vector<16x32xf32>
    %88 = arith.addf %84, %87 : vector<16x32xf32>
    %c0_68 = arith.constant 0 : index
    %c0_69 = arith.constant 0 : index
    %89 = vector.load %arg35[%c0_68, %c0_69] : memref<32x32xbf16, #tpu.memory_space<vmem>>, vector<32x32xbf16>
    %90 = arith.truncf %77 : vector<16x32xf32> to vector<16x32xbf16>
    %cst_70 = arith.constant dense<0.000000e+00> : vector<16x32xf32>
    %91 = tpu.matmul %90, %89, %cst_70 {dimension_numbers = #tpu.dot_dimension_numbers<[1], [0], [0], [1], [0, 0, 1, 1], [], []>} : vector<16x32xbf16>, vector<32x32xbf16>, vector<16x32xf32> -> vector<16x32xf32>
    %92 = arith.addf %88, %91 : vector<16x32xf32>
    %c0_71 = arith.constant 0 : index
    %c0_72 = arith.constant 0 : index
    %93 = vector.load %arg10[%c0_71, %c0_72] : memref<2x16xf32, #tpu.memory_space<vmem>>, vector<2x16xf32>
    %cst_73 = arith.constant dense<0.000000e+00> : vector<2x32xf32>
    %94 = tpu.matmul %93, %92, %cst_73 {dimension_numbers = #tpu.dot_dimension_numbers<[1], [0], [0], [1], [0, 0, 1, 1], [], []>} : vector<2x16xf32>, vector<16x32xf32>, vector<2x32xf32> -> vector<2x32xf32>
    %c0_74 = arith.constant 0 : index
    %c0_75 = arith.constant 0 : index
    %95 = vector.load %arg5[%c0_74, %c0_75] : memref<2x16xf32, #tpu.memory_space<vmem>>, vector<2x16xf32>
    %c0_76 = arith.constant 0 : index
    %c0_77 = arith.constant 0 : index
    %96 = vector.load %arg26[%c0_76, %c0_77] : memref<16x8xbf16, #tpu.memory_space<vmem>>, vector<16x8xbf16>
    %97 = arith.truncf %95 : vector<2x16xf32> to vector<2x16xbf16>
    %cst_78 = arith.constant dense<0.000000e+00> : vector<2x8xf32>
    %98 = tpu.matmul %97, %96, %cst_78 {dimension_numbers = #tpu.dot_dimension_numbers<[1], [0], [0], [1], [0, 0, 1, 1], [], []>} : vector<2x16xbf16>, vector<16x8xbf16>, vector<2x8xf32> -> vector<2x8xf32>
    %c0_79 = arith.constant 0 : index
    %c0_80 = arith.constant 0 : index
    %99 = vector.load %arg27[%c0_79, %c0_80] : memref<1x8xf32, #tpu.memory_space<vmem>>, vector<1x8xf32>
    %100 = vector.broadcast %99 : vector<1x8xf32> to vector<2x8xf32>
    %101 = arith.addf %98, %100 : vector<2x8xf32>
    %cst_81 = arith.constant 0.000000e+00 : f32
    %102 = vector.broadcast %cst_81 : f32 to vector<2x8xf32>
    %103 = arith.maximumf %101, %102 : vector<2x8xf32>
    %c0_82 = arith.constant 0 : index
    %c0_83 = arith.constant 0 : index
    %104 = vector.load %arg28[%c0_82, %c0_83] : memref<8x8xbf16, #tpu.memory_space<vmem>>, vector<8x8xbf16>
    %105 = arith.truncf %103 : vector<2x8xf32> to vector<2x8xbf16>
    %cst_84 = arith.constant dense<0.000000e+00> : vector<2x8xf32>
    %106 = tpu.matmul %105, %104, %cst_84 {dimension_numbers = #tpu.dot_dimension_numbers<[1], [0], [0], [1], [0, 0, 1, 1], [], []>} : vector<2x8xbf16>, vector<8x8xbf16>, vector<2x8xf32> -> vector<2x8xf32>
    %c0_85 = arith.constant 0 : index
    %c0_86 = arith.constant 0 : index
    %107 = vector.load %arg29[%c0_85, %c0_86] : memref<1x8xf32, #tpu.memory_space<vmem>>, vector<1x8xf32>
    %108 = vector.broadcast %107 : vector<1x8xf32> to vector<2x8xf32>
    %109 = arith.addf %106, %108 : vector<2x8xf32>
    %c0_87 = arith.constant 0 : index
    %c0_88 = arith.constant 0 : index
    %110 = vector.load %arg6[%c0_87, %c0_88] : memref<2x1xf32, #tpu.memory_space<vmem>>, vector<2x1xf32>
    %c0_89 = arith.constant 0 : index
    %c0_90 = arith.constant 0 : index
    %111 = vector.load %arg30[%c0_89, %c0_90] : memref<1x8xbf16, #tpu.memory_space<vmem>>, vector<1x8xbf16>
    %112 = arith.extf %111 : vector<1x8xbf16> to vector<1x8xf32>
    %113 = vector.broadcast %110 : vector<2x1xf32> to vector<2x8xf32>
    %114 = vector.broadcast %112 : vector<1x8xf32> to vector<2x8xf32>
    %115 = arith.mulf %113, %114 : vector<2x8xf32>
    %c0_91 = arith.constant 0 : index
    %c0_92 = arith.constant 0 : index
    %116 = vector.load %arg31[%c0_91, %c0_92] : memref<1x8xf32, #tpu.memory_space<vmem>>, vector<1x8xf32>
    %117 = vector.broadcast %116 : vector<1x8xf32> to vector<2x8xf32>
    %118 = arith.addf %115, %117 : vector<2x8xf32>
    %c0_93 = arith.constant 0 : index
    %c0_94 = arith.constant 0 : index
    %119 = vector.load %arg36[%c0_93, %c0_94] : memref<8x32xbf16, #tpu.memory_space<vmem>>, vector<8x32xbf16>
    %120 = arith.truncf %109 : vector<2x8xf32> to vector<2x8xbf16>
    %cst_95 = arith.constant dense<0.000000e+00> : vector<2x32xf32>
    %121 = tpu.matmul %120, %119, %cst_95 {dimension_numbers = #tpu.dot_dimension_numbers<[1], [0], [0], [1], [0, 0, 1, 1], [], []>} : vector<2x8xbf16>, vector<8x32xbf16>, vector<2x32xf32> -> vector<2x32xf32>
    %122 = arith.addf %94, %121 : vector<2x32xf32>
    %c0_96 = arith.constant 0 : index
    %c0_97 = arith.constant 0 : index
    %123 = vector.load %arg37[%c0_96, %c0_97] : memref<8x32xbf16, #tpu.memory_space<vmem>>, vector<8x32xbf16>
    %124 = arith.truncf %118 : vector<2x8xf32> to vector<2x8xbf16>
    %cst_98 = arith.constant dense<0.000000e+00> : vector<2x32xf32>
    %125 = tpu.matmul %124, %123, %cst_98 {dimension_numbers = #tpu.dot_dimension_numbers<[1], [0], [0], [1], [0, 0, 1, 1], [], []>} : vector<2x8xbf16>, vector<8x32xbf16>, vector<2x32xf32> -> vector<2x32xf32>
    %126 = arith.addf %122, %125 : vector<2x32xf32>
    %c0_99 = arith.constant 0 : index
    %c0_100 = arith.constant 0 : index
    %127 = vector.load %arg38[%c0_99, %c0_100] : memref<1x32xf32, #tpu.memory_space<vmem>>, vector<1x32xf32>
    %128 = vector.broadcast %127 : vector<1x32xf32> to vector<2x32xf32>
    %129 = arith.addf %126, %128 : vector<2x32xf32>
    %c0_101 = arith.constant 0 : index
    %c0_102 = arith.constant 0 : index
    %130 = vector.load %arg39[%c0_101, %c0_102] : memref<32x32xbf16, #tpu.memory_space<vmem>>, vector<32x32xbf16>
    %131 = arith.truncf %129 : vector<2x32xf32> to vector<2x32xbf16>
    %cst_103 = arith.constant dense<0.000000e+00> : vector<2x32xf32>
    %132 = tpu.matmul %131, %130, %cst_103 {dimension_numbers = #tpu.dot_dimension_numbers<[1], [0], [0], [1], [0, 0, 1, 1], [], []>} : vector<2x32xbf16>, vector<32x32xbf16>, vector<2x32xf32> -> vector<2x32xf32>
    %c0_104 = arith.constant 0 : index
    %c0_105 = arith.constant 0 : index
    %133 = vector.load %arg40[%c0_104, %c0_105] : memref<1x32xf32, #tpu.memory_space<vmem>>, vector<1x32xf32>
    %134 = vector.broadcast %133 : vector<1x32xf32> to vector<2x32xf32>
    %135 = arith.addf %132, %134 : vector<2x32xf32>
    %c0_106 = arith.constant 0 : index
    %c0_107 = arith.constant 0 : index
    %136 = vector.load %arg41[%c0_106, %c0_107] : memref<32x32xbf16, #tpu.memory_space<vmem>>, vector<32x32xbf16>
    %137 = arith.truncf %129 : vector<2x32xf32> to vector<2x32xbf16>
    %cst_108 = arith.constant dense<0.000000e+00> : vector<2x32xf32>
    %138 = tpu.matmul %137, %136, %cst_108 {dimension_numbers = #tpu.dot_dimension_numbers<[1], [0], [0], [1], [0, 0, 1, 1], [], []>} : vector<2x32xbf16>, vector<32x32xbf16>, vector<2x32xf32> -> vector<2x32xf32>
    %c0_109 = arith.constant 0 : index
    %c0_110 = arith.constant 0 : index
    %139 = vector.load %arg42[%c0_109, %c0_110] : memref<1x32xf32, #tpu.memory_space<vmem>>, vector<1x32xf32>
    %140 = vector.broadcast %139 : vector<1x32xf32> to vector<2x32xf32>
    %141 = arith.addf %138, %140 : vector<2x32xf32>
    %c0_111 = arith.constant 0 : index
    %c0_112 = arith.constant 0 : index
    %142 = vector.load %arg72[%c0_111, %c0_112] : memref<2x32xf32, #tpu.memory_space<vmem>>, vector<2x32xf32>
    tpu.vector_store %arg72[%c0_111, %c0_112], %135 {strides = array<i32>} : memref<2x32xf32, #tpu.memory_space<vmem>>, vector<2x32xf32>,
    %c0_113 = arith.constant 0 : index
    %c0_114 = arith.constant 0 : index
    %143 = vector.load %arg73[%c0_113, %c0_114] : memref<2x32xf32, #tpu.memory_space<vmem>>, vector<2x32xf32>
    tpu.vector_store %arg73[%c0_113, %c0_114], %141 {strides = array<i32>} : memref<2x32xf32, #tpu.memory_space<vmem>>, vector<2x32xf32>,
    %c0_115 = arith.constant 0 : index
    %c0_116 = arith.constant 0 : index
    %144 = vector.load %arg7[%c0_115, %c0_116] : memref<2x32xf32, #tpu.memory_space<vmem>>, vector<2x32xf32>
    %cst_117 = arith.constant 5.000000e-01 : f32
    %145 = vector.broadcast %cst_117 : f32 to vector<2x32xf32>
    %146 = arith.mulf %145, %141 : vector<2x32xf32>
    %147 = math.exp %146 : vector<2x32xf32>
    %148 = arith.mulf %144, %147 : vector<2x32xf32>
    %149 = arith.addf %148, %135 : vector<2x32xf32>
    %c0_118 = arith.constant 0 : index
    %c0_119 = arith.constant 0 : index
    %150 = vector.load %arg45[%c0_118, %c0_119] : memref<16x32xf32, #tpu.memory_space<vmem>>, vector<16x32xf32>
    %c0_120 = arith.constant 0 : index
    %c0_121 = arith.constant 0 : index
    %c0_122 = arith.constant 0 : index
    %151 = vector.load %arg43[%c0_120, %c0_121, %c0_122] : memref<8x32x32xbf16, #tpu.memory_space<vmem>>, vector<1x32x32xbf16>
    %152 = vector.shape_cast %151 : vector<1x32x32xbf16> to vector<32x32xbf16>
    %153 = arith.truncf %149 : vector<2x32xf32> to vector<2x32xbf16>
    %cst_123 = arith.constant dense<0.000000e+00> : vector<2x32xf32>
    %154 = tpu.matmul %153, %152, %cst_123 {dimension_numbers = #tpu.dot_dimension_numbers<[1], [0], [0], [1], [0, 0, 1, 1], [], []>} : vector<2x32xbf16>, vector<32x32xbf16>, vector<2x32xf32> -> vector<2x32xf32>
    %c0_124 = arith.constant 0 : index
    %c0_125 = arith.constant 0 : index
    %c0_126 = arith.constant 0 : index
    %155 = vector.load %arg44[%c0_124, %c0_125, %c0_126] : memref<8x16x2xf32, #tpu.memory_space<vmem>>, vector<1x16x2xf32>
    %156 = vector.shape_cast %155 : vector<1x16x2xf32> to vector<16x2xf32>
    %cst_127 = arith.constant dense<0.000000e+00> : vector<16x32xf32>
    %157 = tpu.matmul %156, %154, %cst_127 {dimension_numbers = #tpu.dot_dimension_numbers<[1], [0], [0], [1], [0, 0, 1, 1], [], []>} : vector<16x2xf32>, vector<2x32xf32>, vector<16x32xf32> -> vector<16x32xf32>
    %158 = arith.addf %150, %157 : vector<16x32xf32>
    %c1 = arith.constant 1 : index
    %c0_128 = arith.constant 0 : index
    %c0_129 = arith.constant 0 : index
    %159 = vector.load %arg43[%c1, %c0_128, %c0_129] : memref<8x32x32xbf16, #tpu.memory_space<vmem>>, vector<1x32x32xbf16>
    %160 = vector.shape_cast %159 : vector<1x32x32xbf16> to vector<32x32xbf16>
    %161 = arith.truncf %149 : vector<2x32xf32> to vector<2x32xbf16>
    %cst_130 = arith.constant dense<0.000000e+00> : vector<2x32xf32>
    %162 = tpu.matmul %161, %160, %cst_130 {dimension_numbers = #tpu.dot_dimension_numbers<[1], [0], [0], [1], [0, 0, 1, 1], [], []>} : vector<2x32xbf16>, vector<32x32xbf16>, vector<2x32xf32> -> vector<2x32xf32>
    %c1_131 = arith.constant 1 : index
    %c0_132 = arith.constant 0 : index
    %c0_133 = arith.constant 0 : index
    %163 = vector.load %arg44[%c1_131, %c0_132, %c0_133] : memref<8x16x2xf32, #tpu.memory_space<vmem>>, vector<1x16x2xf32>
    %164 = vector.shape_cast %163 : vector<1x16x2xf32> to vector<16x2xf32>
    %cst_134 = arith.constant dense<0.000000e+00> : vector<16x32xf32>
    %165 = tpu.matmul %164, %162, %cst_134 {dimension_numbers = #tpu.dot_dimension_numbers<[1], [0], [0], [1], [0, 0, 1, 1], [], []>} : vector<16x2xf32>, vector<2x32xf32>, vector<16x32xf32> -> vector<16x32xf32>
    %166 = arith.addf %158, %165 : vector<16x32xf32>
    %c2 = arith.constant 2 : index
    %c0_135 = arith.constant 0 : index
    %c0_136 = arith.constant 0 : index
    %167 = vector.load %arg43[%c2, %c0_135, %c0_136] : memref<8x32x32xbf16, #tpu.memory_space<vmem>>, vector<1x32x32xbf16>
    %168 = vector.shape_cast %167 : vector<1x32x32xbf16> to vector<32x32xbf16>
    %169 = arith.truncf %149 : vector<2x32xf32> to vector<2x32xbf16>
    %cst_137 = arith.constant dense<0.000000e+00> : vector<2x32xf32>
    %170 = tpu.matmul %169, %168, %cst_137 {dimension_numbers = #tpu.dot_dimension_numbers<[1], [0], [0], [1], [0, 0, 1, 1], [], []>} : vector<2x32xbf16>, vector<32x32xbf16>, vector<2x32xf32> -> vector<2x32xf32>
    %c2_138 = arith.constant 2 : index
    %c0_139 = arith.constant 0 : index
    %c0_140 = arith.constant 0 : index
    %171 = vector.load %arg44[%c2_138, %c0_139, %c0_140] : memref<8x16x2xf32, #tpu.memory_space<vmem>>, vector<1x16x2xf32>
    %172 = vector.shape_cast %171 : vector<1x16x2xf32> to vector<16x2xf32>
    %cst_141 = arith.constant dense<0.000000e+00> : vector<16x32xf32>
    %173 = tpu.matmul %172, %170, %cst_141 {dimension_numbers = #tpu.dot_dimension_numbers<[1], [0], [0], [1], [0, 0, 1, 1], [], []>} : vector<16x2xf32>, vector<2x32xf32>, vector<16x32xf32> -> vector<16x32xf32>
    %174 = arith.addf %166, %173 : vector<16x32xf32>
    %c3 = arith.constant 3 : index
    %c0_142 = arith.constant 0 : index
    %c0_143 = arith.constant 0 : index
    %175 = vector.load %arg43[%c3, %c0_142, %c0_143] : memref<8x32x32xbf16, #tpu.memory_space<vmem>>, vector<1x32x32xbf16>
    %176 = vector.shape_cast %175 : vector<1x32x32xbf16> to vector<32x32xbf16>
    %177 = arith.truncf %149 : vector<2x32xf32> to vector<2x32xbf16>
    %cst_144 = arith.constant dense<0.000000e+00> : vector<2x32xf32>
    %178 = tpu.matmul %177, %176, %cst_144 {dimension_numbers = #tpu.dot_dimension_numbers<[1], [0], [0], [1], [0, 0, 1, 1], [], []>} : vector<2x32xbf16>, vector<32x32xbf16>, vector<2x32xf32> -> vector<2x32xf32>
    %c3_145 = arith.constant 3 : index
    %c0_146 = arith.constant 0 : index
    %c0_147 = arith.constant 0 : index
    %179 = vector.load %arg44[%c3_145, %c0_146, %c0_147] : memref<8x16x2xf32, #tpu.memory_space<vmem>>, vector<1x16x2xf32>
    %180 = vector.shape_cast %179 : vector<1x16x2xf32> to vector<16x2xf32>
    %cst_148 = arith.constant dense<0.000000e+00> : vector<16x32xf32>
    %181 = tpu.matmul %180, %178, %cst_148 {dimension_numbers = #tpu.dot_dimension_numbers<[1], [0], [0], [1], [0, 0, 1, 1], [], []>} : vector<16x2xf32>, vector<2x32xf32>, vector<16x32xf32> -> vector<16x32xf32>
    %182 = arith.addf %174, %181 : vector<16x32xf32>
    %c4 = arith.constant 4 : index
    %c0_149 = arith.constant 0 : index
    %c0_150 = arith.constant 0 : index
    %183 = vector.load %arg43[%c4, %c0_149, %c0_150] : memref<8x32x32xbf16, #tpu.memory_space<vmem>>, vector<1x32x32xbf16>
    %184 = vector.shape_cast %183 : vector<1x32x32xbf16> to vector<32x32xbf16>
    %185 = arith.truncf %149 : vector<2x32xf32> to vector<2x32xbf16>
    %cst_151 = arith.constant dense<0.000000e+00> : vector<2x32xf32>
    %186 = tpu.matmul %185, %184, %cst_151 {dimension_numbers = #tpu.dot_dimension_numbers<[1], [0], [0], [1], [0, 0, 1, 1], [], []>} : vector<2x32xbf16>, vector<32x32xbf16>, vector<2x32xf32> -> vector<2x32xf32>
    %c4_152 = arith.constant 4 : index
    %c0_153 = arith.constant 0 : index
    %c0_154 = arith.constant 0 : index
    %187 = vector.load %arg44[%c4_152, %c0_153, %c0_154] : memref<8x16x2xf32, #tpu.memory_space<vmem>>, vector<1x16x2xf32>
    %188 = vector.shape_cast %187 : vector<1x16x2xf32> to vector<16x2xf32>
    %cst_155 = arith.constant dense<0.000000e+00> : vector<16x32xf32>
    %189 = tpu.matmul %188, %186, %cst_155 {dimension_numbers = #tpu.dot_dimension_numbers<[1], [0], [0], [1], [0, 0, 1, 1], [], []>} : vector<16x2xf32>, vector<2x32xf32>, vector<16x32xf32> -> vector<16x32xf32>
    %190 = arith.addf %182, %189 : vector<16x32xf32>
    %c5 = arith.constant 5 : index
    %c0_156 = arith.constant 0 : index
    %c0_157 = arith.constant 0 : index
    %191 = vector.load %arg43[%c5, %c0_156, %c0_157] : memref<8x32x32xbf16, #tpu.memory_space<vmem>>, vector<1x32x32xbf16>
    %192 = vector.shape_cast %191 : vector<1x32x32xbf16> to vector<32x32xbf16>
    %193 = arith.truncf %149 : vector<2x32xf32> to vector<2x32xbf16>
    %cst_158 = arith.constant dense<0.000000e+00> : vector<2x32xf32>
    %194 = tpu.matmul %193, %192, %cst_158 {dimension_numbers = #tpu.dot_dimension_numbers<[1], [0], [0], [1], [0, 0, 1, 1], [], []>} : vector<2x32xbf16>, vector<32x32xbf16>, vector<2x32xf32> -> vector<2x32xf32>
    %c5_159 = arith.constant 5 : index
    %c0_160 = arith.constant 0 : index
    %c0_161 = arith.constant 0 : index
    %195 = vector.load %arg44[%c5_159, %c0_160, %c0_161] : memref<8x16x2xf32, #tpu.memory_space<vmem>>, vector<1x16x2xf32>
    %196 = vector.shape_cast %195 : vector<1x16x2xf32> to vector<16x2xf32>
    %cst_162 = arith.constant dense<0.000000e+00> : vector<16x32xf32>
    %197 = tpu.matmul %196, %194, %cst_162 {dimension_numbers = #tpu.dot_dimension_numbers<[1], [0], [0], [1], [0, 0, 1, 1], [], []>} : vector<16x2xf32>, vector<2x32xf32>, vector<16x32xf32> -> vector<16x32xf32>
    %198 = arith.addf %190, %197 : vector<16x32xf32>
    %c6 = arith.constant 6 : index
    %c0_163 = arith.constant 0 : index
    %c0_164 = arith.constant 0 : index
    %199 = vector.load %arg43[%c6, %c0_163, %c0_164] : memref<8x32x32xbf16, #tpu.memory_space<vmem>>, vector<1x32x32xbf16>
    %200 = vector.shape_cast %199 : vector<1x32x32xbf16> to vector<32x32xbf16>
    %201 = arith.truncf %149 : vector<2x32xf32> to vector<2x32xbf16>
    %cst_165 = arith.constant dense<0.000000e+00> : vector<2x32xf32>
    %202 = tpu.matmul %201, %200, %cst_165 {dimension_numbers = #tpu.dot_dimension_numbers<[1], [0], [0], [1], [0, 0, 1, 1], [], []>} : vector<2x32xbf16>, vector<32x32xbf16>, vector<2x32xf32> -> vector<2x32xf32>
    %c6_166 = arith.constant 6 : index
    %c0_167 = arith.constant 0 : index
    %c0_168 = arith.constant 0 : index
    %203 = vector.load %arg44[%c6_166, %c0_167, %c0_168] : memref<8x16x2xf32, #tpu.memory_space<vmem>>, vector<1x16x2xf32>
    %204 = vector.shape_cast %203 : vector<1x16x2xf32> to vector<16x2xf32>
    %cst_169 = arith.constant dense<0.000000e+00> : vector<16x32xf32>
    %205 = tpu.matmul %204, %202, %cst_169 {dimension_numbers = #tpu.dot_dimension_numbers<[1], [0], [0], [1], [0, 0, 1, 1], [], []>} : vector<16x2xf32>, vector<2x32xf32>, vector<16x32xf32> -> vector<16x32xf32>
    %206 = arith.addf %198, %205 : vector<16x32xf32>
    %c7 = arith.constant 7 : index
    %c0_170 = arith.constant 0 : index
    %c0_171 = arith.constant 0 : index
    %207 = vector.load %arg43[%c7, %c0_170, %c0_171] : memref<8x32x32xbf16, #tpu.memory_space<vmem>>, vector<1x32x32xbf16>
    %208 = vector.shape_cast %207 : vector<1x32x32xbf16> to vector<32x32xbf16>
    %209 = arith.truncf %149 : vector<2x32xf32> to vector<2x32xbf16>
    %cst_172 = arith.constant dense<0.000000e+00> : vector<2x32xf32>
    %210 = tpu.matmul %209, %208, %cst_172 {dimension_numbers = #tpu.dot_dimension_numbers<[1], [0], [0], [1], [0, 0, 1, 1], [], []>} : vector<2x32xbf16>, vector<32x32xbf16>, vector<2x32xf32> -> vector<2x32xf32>
    %c7_173 = arith.constant 7 : index
    %c0_174 = arith.constant 0 : index
    %c0_175 = arith.constant 0 : index
    %211 = vector.load %arg44[%c7_173, %c0_174, %c0_175] : memref<8x16x2xf32, #tpu.memory_space<vmem>>, vector<1x16x2xf32>
    %212 = vector.shape_cast %211 : vector<1x16x2xf32> to vector<16x2xf32>
    %cst_176 = arith.constant dense<0.000000e+00> : vector<16x32xf32>
    %213 = tpu.matmul %212, %210, %cst_176 {dimension_numbers = #tpu.dot_dimension_numbers<[1], [0], [0], [1], [0, 0, 1, 1], [], []>} : vector<16x2xf32>, vector<2x32xf32>, vector<16x32xf32> -> vector<16x32xf32>
    %214 = arith.addf %206, %213 : vector<16x32xf32>
    %cst_177 = arith.constant 0.000000e+00 : f32
    %215 = vector.broadcast %cst_177 : f32 to vector<16x32xf32>
    %216 = arith.maximumf %214, %215 : vector<16x32xf32>
    %c0_178 = arith.constant 0 : index
    %c0_179 = arith.constant 0 : index
    %217 = vector.load %arg46[%c0_178, %c0_179] : memref<32x32xbf16, #tpu.memory_space<vmem>>, vector<32x32xbf16>
    %218 = arith.truncf %216 : vector<16x32xf32> to vector<16x32xbf16>
    %cst_180 = arith.constant dense<0.000000e+00> : vector<16x32xf32>
    %219 = tpu.matmul %218, %217, %cst_180 {dimension_numbers = #tpu.dot_dimension_numbers<[1], [0], [0], [1], [0, 0, 1, 1], [], []>} : vector<16x32xbf16>, vector<32x32xbf16>, vector<16x32xf32> -> vector<16x32xf32>
    %c0_181 = arith.constant 0 : index
    %c0_182 = arith.constant 0 : index
    %220 = vector.load %arg48[%c0_181, %c0_182] : memref<16x32xf32, #tpu.memory_space<vmem>>, vector<16x32xf32>
    %221 = arith.addf %219, %220 : vector<16x32xf32>
    %c0_183 = arith.constant 0 : index
    %c0_184 = arith.constant 0 : index
    %222 = vector.load %arg47[%c0_183, %c0_184] : memref<32x32xbf16, #tpu.memory_space<vmem>>, vector<32x32xbf16>
    %cst_185 = arith.constant dense<0.000000e+00> : vector<16x32xf32>
    %223 = tpu.matmul %218, %222, %cst_185 {dimension_numbers = #tpu.dot_dimension_numbers<[1], [0], [0], [1], [0, 0, 1, 1], [], []>} : vector<16x32xbf16>, vector<32x32xbf16>, vector<16x32xf32> -> vector<16x32xf32>
    %c0_186 = arith.constant 0 : index
    %c0_187 = arith.constant 0 : index
    %224 = vector.load %arg49[%c0_186, %c0_187] : memref<16x32xf32, #tpu.memory_space<vmem>>, vector<16x32xf32>
    %225 = arith.addf %223, %224 : vector<16x32xf32>
    %c0_188 = arith.constant 0 : index
    %c0_189 = arith.constant 0 : index
    %226 = vector.load %arg50[%c0_188, %c0_189] : memref<1x32xf32, #tpu.memory_space<vmem>>, vector<1x32xf32>
    %227 = vector.broadcast %226 : vector<1x32xf32> to vector<16x32xf32>
    %228 = arith.addf %221, %227 : vector<16x32xf32>
    %229 = vector.broadcast %1 : vector<16x1xf32> to vector<16x32xf32>
    %230 = arith.mulf %229, %228 : vector<16x32xf32>
    %cst_190 = arith.constant dense<0.000000e+00> : vector<16x32xf32>
    %231 = tpu.matmul %0, %225, %cst_190 {dimension_numbers = #tpu.dot_dimension_numbers<[1], [0], [0], [1], [0, 0, 1, 1], [], []>} : vector<16x16xf32>, vector<16x32xf32>, vector<16x32xf32> -> vector<16x32xf32>
    %232 = arith.addf %230, %231 : vector<16x32xf32>
    %cst_191 = arith.constant 0.000000e+00 : f32
    %233 = vector.broadcast %cst_191 : f32 to vector<16x32xf32>
    %234 = arith.maximumf %232, %233 : vector<16x32xf32>
    %c0_192 = arith.constant 0 : index
    %c0_193 = arith.constant 0 : index
    %235 = vector.load %arg51[%c0_192, %c0_193] : memref<32x32xbf16, #tpu.memory_space<vmem>>, vector<32x32xbf16>
    %c0_194 = arith.constant 0 : index
    %c0_195 = arith.constant 0 : index
    %236 = vector.load %arg52[%c0_194, %c0_195] : memref<32x32xbf16, #tpu.memory_space<vmem>>, vector<32x32xbf16>
    %c0_196 = arith.constant 0 : index
    %c0_197 = arith.constant 0 : index
    %237 = vector.load %arg53[%c0_196, %c0_197] : memref<1x32xf32, #tpu.memory_space<vmem>>, vector<1x32xf32>
    %238 = arith.truncf %234 : vector<16x32xf32> to vector<16x32xbf16>
    %cst_198 = arith.constant dense<0.000000e+00> : vector<16x32xf32>
    %239 = tpu.matmul %238, %235, %cst_198 {dimension_numbers = #tpu.dot_dimension_numbers<[1], [0], [0], [1], [0, 0, 1, 1], [], []>} : vector<16x32xbf16>, vector<32x32xbf16>, vector<16x32xf32> -> vector<16x32xf32>
    %cst_199 = arith.constant dense<0.000000e+00> : vector<16x32xf32>
    %240 = tpu.matmul %238, %236, %cst_199 {dimension_numbers = #tpu.dot_dimension_numbers<[1], [0], [0], [1], [0, 0, 1, 1], [], []>} : vector<16x32xbf16>, vector<32x32xbf16>, vector<16x32xf32> -> vector<16x32xf32>
    %cst_200 = arith.constant dense<0.000000e+00> : vector<16x32xf32>
    %241 = tpu.matmul %0, %240, %cst_200 {dimension_numbers = #tpu.dot_dimension_numbers<[1], [0], [0], [1], [0, 0, 1, 1], [], []>} : vector<16x16xf32>, vector<16x32xf32>, vector<16x32xf32> -> vector<16x32xf32>
    %242 = vector.broadcast %237 : vector<1x32xf32> to vector<16x32xf32>
    %243 = arith.addf %239, %242 : vector<16x32xf32>
    %244 = vector.broadcast %1 : vector<16x1xf32> to vector<16x32xf32>
    %245 = arith.mulf %244, %243 : vector<16x32xf32>
    %246 = arith.addf %245, %241 : vector<16x32xf32>
    %cst_201 = arith.constant 0.000000e+00 : f32
    %247 = vector.broadcast %cst_201 : f32 to vector<16x32xf32>
    %248 = arith.maximumf %246, %247 : vector<16x32xf32>
    %c0_202 = arith.constant 0 : index
    %c0_203 = arith.constant 0 : index
    %249 = vector.load %arg54[%c0_202, %c0_203] : memref<32x32xbf16, #tpu.memory_space<vmem>>, vector<32x32xbf16>
    %c0_204 = arith.constant 0 : index
    %c0_205 = arith.constant 0 : index
    %250 = vector.load %arg55[%c0_204, %c0_205] : memref<32x32xbf16, #tpu.memory_space<vmem>>, vector<32x32xbf16>
    %c0_206 = arith.constant 0 : index
    %c0_207 = arith.constant 0 : index
    %251 = vector.load %arg56[%c0_206, %c0_207] : memref<1x32xf32, #tpu.memory_space<vmem>>, vector<1x32xf32>
    %252 = arith.truncf %248 : vector<16x32xf32> to vector<16x32xbf16>
    %cst_208 = arith.constant dense<0.000000e+00> : vector<16x32xf32>
    %253 = tpu.matmul %252, %249, %cst_208 {dimension_numbers = #tpu.dot_dimension_numbers<[1], [0], [0], [1], [0, 0, 1, 1], [], []>} : vector<16x32xbf16>, vector<32x32xbf16>, vector<16x32xf32> -> vector<16x32xf32>
    %cst_209 = arith.constant dense<0.000000e+00> : vector<16x32xf32>
    %254 = tpu.matmul %252, %250, %cst_209 {dimension_numbers = #tpu.dot_dimension_numbers<[1], [0], [0], [1], [0, 0, 1, 1], [], []>} : vector<16x32xbf16>, vector<32x32xbf16>, vector<16x32xf32> -> vector<16x32xf32>
    %cst_210 = arith.constant dense<0.000000e+00> : vector<16x32xf32>
    %255 = tpu.matmul %0, %254, %cst_210 {dimension_numbers = #tpu.dot_dimension_numbers<[1], [0], [0], [1], [0, 0, 1, 1], [], []>} : vector<16x16xf32>, vector<16x32xf32>, vector<16x32xf32> -> vector<16x32xf32>
    %256 = vector.broadcast %251 : vector<1x32xf32> to vector<16x32xf32>
    %257 = arith.addf %253, %256 : vector<16x32xf32>
    %258 = vector.broadcast %1 : vector<16x1xf32> to vector<16x32xf32>
    %259 = arith.mulf %258, %257 : vector<16x32xf32>
    %260 = arith.addf %259, %255 : vector<16x32xf32>
    %cst_211 = arith.constant 0.000000e+00 : f32
    %261 = vector.broadcast %cst_211 : f32 to vector<16x32xf32>
    %262 = arith.maximumf %260, %261 : vector<16x32xf32>
    %c0_212 = arith.constant 0 : index
    %c0_213 = arith.constant 0 : index
    %263 = vector.load %arg57[%c0_212, %c0_213] : memref<32x224xbf16, #tpu.memory_space<vmem>>, vector<32x224xbf16>
    %264 = arith.truncf %262 : vector<16x32xf32> to vector<16x32xbf16>
    %cst_214 = arith.constant dense<0.000000e+00> : vector<16x224xf32>
    %265 = tpu.matmul %264, %263, %cst_214 {dimension_numbers = #tpu.dot_dimension_numbers<[1], [0], [0], [1], [0, 0, 1, 1], [], []>} : vector<16x32xbf16>, vector<32x224xbf16>, vector<16x224xf32> -> vector<16x224xf32>
    %c0_215 = arith.constant 0 : index
    %c0_216 = arith.constant 0 : index
    %266 = vector.load %arg58[%c0_215, %c0_216] : memref<1x224xf32, #tpu.memory_space<vmem>>, vector<1x224xf32>
    %267 = vector.broadcast %266 : vector<1x224xf32> to vector<16x224xf32>
    %268 = arith.addf %265, %267 : vector<16x224xf32>
    %cst_217 = arith.constant 0.000000e+00 : f32
    %269 = vector.broadcast %cst_217 : f32 to vector<16x224xf32>
    %270 = arith.maximumf %268, %269 : vector<16x224xf32>
    %271 = arith.truncf %270 : vector<16x224xf32> to vector<16x224xbf16>
    %c0_218 = arith.constant 0 : index
    %c0_219 = arith.constant 0 : index
    %272 = vector.load %arg59[%c0_218, %c0_219] : memref<224x1xbf16, #tpu.memory_space<vmem>>, vector<224x1xbf16>
    %cst_220 = arith.constant dense<0.000000e+00> : vector<16x1xf32>
    %273 = tpu.matmul %271, %272, %cst_220 {dimension_numbers = #tpu.dot_dimension_numbers<[1], [0], [0], [1], [0, 0, 1, 1], [], []>} : vector<16x224xbf16>, vector<224x1xbf16>, vector<16x1xf32> -> vector<16x1xf32>
    %c0_221 = arith.constant 0 : index
    %c0_222 = arith.constant 0 : index
    %274 = vector.load %arg60[%c0_221, %c0_222] : memref<1x1xf32, #tpu.memory_space<vmem>>, vector<1x1xf32>
    %275 = vector.broadcast %274 : vector<1x1xf32> to vector<16x1xf32>
    %276 = arith.addf %273, %275 : vector<16x1xf32>
    %c0_223 = arith.constant 0 : index
    %c0_224 = arith.constant 0 : index
    %277 = vector.load %arg69[%c0_223, %c0_224] : memref<16x1xf32, #tpu.memory_space<vmem>>, vector<16x1xf32>
    tpu.vector_store %arg69[%c0_223, %c0_224], %276 {strides = array<i32>} : memref<16x1xf32, #tpu.memory_space<vmem>>, vector<16x1xf32>,
    %c0_225 = arith.constant 0 : index
    %c0_226 = arith.constant 0 : index
    %278 = vector.load %arg61[%c0_225, %c0_226] : memref<224x2xbf16, #tpu.memory_space<vmem>>, vector<224x2xbf16>
    %cst_227 = arith.constant dense<0.000000e+00> : vector<16x2xf32>
    %279 = tpu.matmul %271, %278, %cst_227 {dimension_numbers = #tpu.dot_dimension_numbers<[1], [0], [0], [1], [0, 0, 1, 1], [], []>} : vector<16x224xbf16>, vector<224x2xbf16>, vector<16x2xf32> -> vector<16x2xf32>
    %c0_228 = arith.constant 0 : index
    %c0_229 = arith.constant 0 : index
    %280 = vector.load %arg62[%c0_228, %c0_229] : memref<1x2xf32, #tpu.memory_space<vmem>>, vector<1x2xf32>
    %281 = vector.broadcast %280 : vector<1x2xf32> to vector<16x2xf32>
    %282 = arith.addf %279, %281 : vector<16x2xf32>
    %c0_230 = arith.constant 0 : index
    %c0_231 = arith.constant 0 : index
    %283 = vector.load %arg70[%c0_230, %c0_231] : memref<16x2xf32, #tpu.memory_space<vmem>>, vector<16x2xf32>
    tpu.vector_store %arg70[%c0_230, %c0_231], %282 {strides = array<i32>} : memref<16x2xf32, #tpu.memory_space<vmem>>, vector<16x2xf32>,
    %c0_232 = arith.constant 0 : index
    %c0_233 = arith.constant 0 : index
    %284 = vector.load %arg63[%c0_232, %c0_233] : memref<224x2xbf16, #tpu.memory_space<vmem>>, vector<224x2xbf16>
    %cst_234 = arith.constant dense<0.000000e+00> : vector<16x2xf32>
    %285 = tpu.matmul %271, %284, %cst_234 {dimension_numbers = #tpu.dot_dimension_numbers<[1], [0], [0], [1], [0, 0, 1, 1], [], []>} : vector<16x224xbf16>, vector<224x2xbf16>, vector<16x2xf32> -> vector<16x2xf32>
    %c0_235 = arith.constant 0 : index
    %c0_236 = arith.constant 0 : index
    %286 = vector.load %arg64[%c0_235, %c0_236] : memref<1x2xf32, #tpu.memory_space<vmem>>, vector<1x2xf32>
    %287 = vector.broadcast %286 : vector<1x2xf32> to vector<16x2xf32>
    %288 = arith.addf %285, %287 : vector<16x2xf32>
    %c0_237 = arith.constant 0 : index
    %c0_238 = arith.constant 0 : index
    %289 = vector.load %arg71[%c0_237, %c0_238] : memref<16x2xf32, #tpu.memory_space<vmem>>, vector<16x2xf32>
    tpu.vector_store %arg71[%c0_237, %c0_238], %288 {strides = array<i32>} : memref<16x2xf32, #tpu.memory_space<vmem>>, vector<16x2xf32>,
    %c0_239 = arith.constant 0 : index
    %c0_240 = arith.constant 0 : index
    %290 = vector.load %arg65[%c0_239, %c0_240] : memref<224x6xbf16, #tpu.memory_space<vmem>>, vector<224x6xbf16>
    %cst_241 = arith.constant dense<0.000000e+00> : vector<16x6xf32>
    %291 = tpu.matmul %271, %290, %cst_241 {dimension_numbers = #tpu.dot_dimension_numbers<[1], [0], [0], [1], [0, 0, 1, 1], [], []>} : vector<16x224xbf16>, vector<224x6xbf16>, vector<16x6xf32> -> vector<16x6xf32>
    %c0_242 = arith.constant 0 : index
    %c0_243 = arith.constant 0 : index
    %292 = vector.load %arg66[%c0_242, %c0_243] : memref<1x6xf32, #tpu.memory_space<vmem>>, vector<1x6xf32>
    %293 = vector.broadcast %292 : vector<1x6xf32> to vector<16x6xf32>
    %294 = arith.addf %291, %293 : vector<16x6xf32>
    %c0_244 = arith.constant 0 : index
    %c0_245 = arith.constant 0 : index
    %295 = vector.load %arg74[%c0_244, %c0_245] : memref<16x6xf32, #tpu.memory_space<vmem>>, vector<16x6xf32>
    tpu.vector_store %arg74[%c0_244, %c0_245], %294 {strides = array<i32>} : memref<16x6xf32, #tpu.memory_space<vmem>>, vector<16x6xf32>,
    %c0_246 = arith.constant 0 : index
    %c0_247 = arith.constant 0 : index
    %296 = vector.load %arg67[%c0_246, %c0_247] : memref<224x1xbf16, #tpu.memory_space<vmem>>, vector<224x1xbf16>
    %cst_248 = arith.constant dense<0.000000e+00> : vector<16x1xf32>
    %297 = tpu.matmul %271, %296, %cst_248 {dimension_numbers = #tpu.dot_dimension_numbers<[1], [0], [0], [1], [0, 0, 1, 1], [], []>} : vector<16x224xbf16>, vector<224x1xbf16>, vector<16x1xf32> -> vector<16x1xf32>
    %c0_249 = arith.constant 0 : index
    %c0_250 = arith.constant 0 : index
    %298 = vector.load %arg68[%c0_249, %c0_250] : memref<1x1xf32, #tpu.memory_space<vmem>>, vector<1x1xf32>
    %299 = vector.broadcast %298 : vector<1x1xf32> to vector<16x1xf32>
    %300 = arith.addf %297, %299 : vector<16x1xf32>
    %c0_251 = arith.constant 0 : index
    %c0_252 = arith.constant 0 : index
    %301 = vector.load %arg75[%c0_251, %c0_252] : memref<16x1xf32, #tpu.memory_space<vmem>>, vector<16x1xf32>
    tpu.vector_store %arg75[%c0_251, %c0_252], %300 {strides = array<i32>} : memref<16x1xf32, #tpu.memory_space<vmem>>, vector<16x1xf32>,
    return
  }
}

</mosaic_0001>

<llo_original>
// kernel: block_generator_forward.1
$region0: #{block_generator_forward.1}
  #allocation0 [shape = 'u32[]', space=smem, size = 0x4, offset = 0x4, fixed_abs, tag = 'smem constant byte address 0x4 - core index']
  #allocation1 [shape = 'u32[72,128]{1,0:T(1,128)}', space=vmem, size = 0x9000, scoped, tag = 'internal scratch']
  #allocation2 [shape = 'f32[1,1]{1,0:T(1,128)S(1)}', space=vmem, size = 0x200, scoped, tag = 'scoped memory for block_generator_forward.1']
  #allocation3 [shape = 'f32[1,1]{1,0:T(1,128)S(1)}', space=vmem, size = 0x200, scoped, tag = 'scoped memory for block_generator_forward.1']
  %s0 = inlined_call_operand.smem [shape: u32[76], index: -1, kind: input, shape index: {}]
  %s1 = sld [smem:[%s0]]
  %s2 = scalar_lea.smem %s0, 1
  %s3 = sld [smem:[%s2]]
  %s4 = scalar_lea.smem %s0, 2
  %s5 = sld [smem:[%s4]]
  %s6 = scalar_lea.smem %s0, 3
  %s7 = sld [smem:[%s6]]
  %s8 = scalar_lea.smem %s0, 4
  %s9 = sld [smem:[%s8]]
  %s10 = scalar_lea.smem %s0, 5
  %s11 = sld [smem:[%s10]]
  %s12 = scalar_lea.smem %s0, 6
  %s13 = sld [smem:[%s12]]
  %s14 = scalar_lea.smem %s0, 7
  %s15 = sld [smem:[%s14]]
  %s16 = scalar_lea.smem %s0, 8
  %s17 = sld [smem:[%s16]]
  %s18 = scalar_lea.smem %s0, 9
  %s19 = sld [smem:[%s18]]
  %s20 = scalar_lea.smem %s0, 10
  %s21 = sld [smem:[%s20]]
  %s22 = scalar_lea.smem %s0, 11
  %s23 = sld [smem:[%s22]]
  %s24 = scalar_lea.smem %s0, 12
  %s25 = sld [smem:[%s24]]
  %s26 = scalar_lea.smem %s0, 13
  %s27 = sld [smem:[%s26]]
  %s28 = scalar_lea.smem %s0, 14
  %s29 = sld [smem:[%s28]]
  %s30 = scalar_lea.smem %s0, 15
  %s31 = sld [smem:[%s30]]
  %s32 = scalar_lea.smem %s0, 16
  %s33 = sld [smem:[%s32]]
  %s34 = scalar_lea.smem %s0, 17
  %s35 = sld [smem:[%s34]]
  %s36 = scalar_lea.smem %s0, 18
  %s37 = sld [smem:[%s36]]
  %s38 = scalar_lea.smem %s0, 19
  %s39 = sld [smem:[%s38]]
  %s40 = scalar_lea.smem %s0, 20
  %s41 = sld [smem:[%s40]]
  %s42 = scalar_lea.smem %s0, 21
  %s43 = sld [smem:[%s42]]
  %s44 = scalar_lea.smem %s0, 22
  %s45 = sld [smem:[%s44]]
  %s46 = scalar_lea.smem %s0, 23
  %s47 = sld [smem:[%s46]]
  %s48 = scalar_lea.smem %s0, 24
  %s49 = sld [smem:[%s48]]
  %s50 = scalar_lea.smem %s0, 25
  %s51 = sld [smem:[%s50]]
  %s52 = scalar_lea.smem %s0, 26
  %s53 = sld [smem:[%s52]]
  %s54 = scalar_lea.smem %s0, 27
  %s55 = sld [smem:[%s54]]
  %s56 = scalar_lea.smem %s0, 28
  %s57 = sld [smem:[%s56]]
  %s58 = scalar_lea.smem %s0, 29
  %s59 = sld [smem:[%s58]]
  %s60 = scalar_lea.smem %s0, 30
  %s61 = sld [smem:[%s60]]
  %s62 = scalar_lea.smem %s0, 31
  %s63 = sld [smem:[%s62]]
  %s64 = scalar_lea.smem %s0, 32
  %s65 = sld [smem:[%s64]]
  %s66 = scalar_lea.smem %s0, 33
  %s67 = sld [smem:[%s66]]
  %s68 = scalar_lea.smem %s0, 34
  %s69 = sld [smem:[%s68]]
  %s70 = scalar_lea.smem %s0, 35
  %s71 = sld [smem:[%s70]]
  %s72 = scalar_lea.smem %s0, 36
  %s73 = sld [smem:[%s72]]
  %s74 = scalar_lea.smem %s0, 37
  %s75 = sld [smem:[%s74]]
  %s76 = scalar_lea.smem %s0, 38
  %s77 = sld [smem:[%s76]]
  %s78 = scalar_lea.smem %s0, 39
  %s79 = sld [smem:[%s78]]
  %s80 = scalar_lea.smem %s0, 40
  %s81 = sld [smem:[%s80]]
  %s82 = scalar_lea.smem %s0, 41
  %s83 = sld [smem:[%s82]]
  %s84 = scalar_lea.smem %s0, 42
  %s85 = sld [smem:[%s84]]
  %s86 = scalar_lea.smem %s0, 43
  %s87 = sld [smem:[%s86]]
  %s88 = scalar_lea.smem %s0, 44
  %s89 = sld [smem:[%s88]]
  %s90 = scalar_lea.smem %s0, 45
  %s91 = sld [smem:[%s90]]
  %s92 = scalar_lea.smem %s0, 46
  %s93 = sld [smem:[%s92]]
  %s94 = scalar_lea.smem %s0, 47
  %s95 = sld [smem:[%s94]]
  %s96 = scalar_lea.smem %s0, 48
  %s97 = sld [smem:[%s96]]
  %s98 = scalar_lea.smem %s0, 49
  %s99 = sld [smem:[%s98]]
  %s100 = scalar_lea.smem %s0, 50
  %s101 = sld [smem:[%s100]]
  %s102 = scalar_lea.smem %s0, 51
  %s103 = sld [smem:[%s102]]
  %s104 = scalar_lea.smem %s0, 52
  %s105 = sld [smem:[%s104]]
  %s106 = scalar_lea.smem %s0, 53
  %s107 = sld [smem:[%s106]]
  %s108 = scalar_lea.smem %s0, 54
  %s109 = sld [smem:[%s108]]
  %s110 = scalar_lea.smem %s0, 55
  %s111 = sld [smem:[%s110]]
  %s112 = scalar_lea.smem %s0, 56
  %s113 = sld [smem:[%s112]]
  %s114 = scalar_lea.smem %s0, 57
  %s115 = sld [smem:[%s114]]
  %s116 = scalar_lea.smem %s0, 58
  %s117 = sld [smem:[%s116]]
  %s118 = scalar_lea.smem %s0, 59
  %s119 = sld [smem:[%s118]]
  %s120 = scalar_lea.smem %s0, 60
  %s121 = sld [smem:[%s120]]
  %s122 = scalar_lea.smem %s0, 61
  %s123 = sld [smem:[%s122]]
  %s124 = scalar_lea.smem %s0, 62
  %s125 = sld [smem:[%s124]]
  %s126 = scalar_lea.smem %s0, 63
  %s127 = sld [smem:[%s126]]
  %s128 = scalar_lea.smem %s0, 64
  %s129 = sld [smem:[%s128]]
  %s130 = scalar_lea.smem %s0, 65
  %s131 = sld [smem:[%s130]]
  %s132 = scalar_lea.smem %s0, 66
  %s133 = sld [smem:[%s132]]
  %s134 = scalar_lea.smem %s0, 67
  %s135 = sld [smem:[%s134]]
  %s136 = scalar_lea.smem %s0, 68
  %s137 = sld [smem:[%s136]]
  %s138 = scalar_lea.smem %s0, 69
  %s139 = sld [smem:[%s138]]
  %s140 = scalar_lea.smem %s0, 70
  %s141 = sld [smem:[%s140]]
  %s142 = scalar_lea.smem %s0, 71
  %s143 = sld [smem:[%s142]]
  %s144 = scalar_lea.smem %s0, 72
  %s145 = sld [smem:[%s144]]
  %s146 = scalar_lea.smem %s0, 73
  %s147 = sld [smem:[%s146]]
  %s148 = scalar_lea.smem %s0, 74
  %s149 = sld [smem:[%s148]]
  %s150 = scalar_lea.smem %s0, 75
  %s151 = sld [smem:[%s150]]
  %152 = xla_tuple %s139, %s141, %s143, %s145, %s147, %s149, %s151
  %s153 = sld [smem:[#allocation0]]
  $region398: #{block_generator_forward.1} parent=0
    _
  %s155 = ssub.s32 1, %s153
  %s156 = scalar_select 0, %s155, %s153
  %v157 = vstv %s121
  %158 = vst [vmem:[#allocation2] sm:$0x1] %v157
  %v159 = vstv %s137
  %160 = vst [vmem:[#allocation3] sm:$0x1] %v159
  $region1: #{block_generator_forward.1} parent=0
    #allocation4 [shape = 'u8[512]{0}', space=vmem, size = 0x400, scoped, tag = 'input window, operand 19, single buffered']
    #allocation5 [shape = 's32[1]{0}', space=sflag, size = 0x4, scoped, tag = 'scoped memory for block_generator_forward.1']
    #allocation6 [shape = 's32[1]{0}', space=sflag, size = 0x4, scoped, tag = 'scoped memory for block_generator_forward.1']
    #allocation7 [shape = 'u8[512]{0}', space=vmem, size = 0x400, scoped, tag = 'input window, operand 22, single buffered']
    #allocation8 [shape = 's32[1]{0}', space=sflag, size = 0x4, scoped, tag = 'scoped memory for block_generator_forward.1']
    #allocation9 [shape = 'u8[512]{0}', space=vmem, size = 0x400, scoped, tag = 'input window, operand 25, single buffered']
    #allocation10 [shape = 'u8[512]{0}', space=vmem, size = 0x400, scoped, tag = 'input window, operand 27, single buffered']
    #allocation11 [shape = 's32[1]{0}', space=sflag, size = 0x4, scoped, tag = 'scoped memory for block_generator_forward.1']
    #allocation12 [shape = 'u8[512]{0}', space=vmem, size = 0x400, scoped, tag = 'input window, operand 29, single buffered']
    #allocation13 [shape = 'u8[512]{0}', space=vmem, size = 0x400, scoped, tag = 'input window, operand 30, single buffered']
    #allocation14 [shape = 's32[1]{0}', space=sflag, size = 0x4, scoped, tag = 'scoped memory for block_generator_forward.1']
    #allocation15 [shape = 'u8[512]{0}', space=vmem, size = 0x400, scoped, tag = 'input window, operand 31, single buffered']
    #allocation16 [shape = 'u8[512]{0}', space=vmem, size = 0x400, scoped, tag = 'input window, operand 38, single buffered']
    #allocation17 [shape = 's32[1]{0}', space=sflag, size = 0x4, scoped, tag = 'scoped memory for block_generator_forward.1']
    #allocation18 [shape = 'u8[512]{0}', space=vmem, size = 0x400, scoped, tag = 'input window, operand 40, single buffered']
    #allocation19 [shape = 'u8[512]{0}', space=vmem, size = 0x400, scoped, tag = 'input window, operand 42, single buffered']
    #allocation20 [shape = 's32[1]{0}', space=sflag, size = 0x4, scoped, tag = 'scoped memory for block_generator_forward.1']
    #allocation21 [shape = 'u8[512]{0}', space=vmem, size = 0x400, scoped, tag = 'input window, operand 50, single buffered']
    #allocation22 [shape = 'u8[512]{0}', space=vmem, size = 0x400, scoped, tag = 'input window, operand 53, single buffered']
    #allocation23 [shape = 's32[1]{0}', space=sflag, size = 0x4, scoped, tag = 'scoped memory for block_generator_forward.1']
    #allocation24 [shape = 'u8[512]{0}', space=vmem, size = 0x400, scoped, tag = 'input window, operand 56, single buffered']
    #allocation25 [shape = 'u8[512]{0}', space=vmem, size = 0x400, scoped, tag = 'input window, operand 62, single buffered']
    #allocation26 [shape = 's32[1]{0}', space=sflag, size = 0x4, scoped, tag = 'scoped memory for block_generator_forward.1']
    #allocation27 [shape = 'u8[512]{0}', space=vmem, size = 0x400, scoped, tag = 'input window, operand 64, single buffered']
    #allocation28 [shape = 'u8[512]{0}', space=vmem, size = 0x400, scoped, tag = 'input window, operand 66, single buffered']
    #allocation29 [shape = 's32[1]{0}', space=sflag, size = 0x4, scoped, tag = 'scoped memory for block_generator_forward.1']
    #allocation30 [shape = 'u8[1024]{0}', space=vmem, size = 0x400, scoped, tag = 'output window, operand 3, single buffered']
    #allocation31 [shape = 'u8[1024]{0}', space=vmem, size = 0x400, scoped, tag = 'output window, operand 4, single buffered']
    #allocation32 [shape = 's32[1]{0}', space=sflag, size = 0x4, scoped, tag = 'scoped memory for block_generator_forward.1']
    %161 = vsyncpa [#allocation5], 0
    %162 = vsyncpa [#allocation8], 0
    %163 = vsyncpa [#allocation11], 0
    %164 = vsyncpa [#allocation14], 0
    %165 = vsyncpa [#allocation17], 0
    %166 = vsyncpa [#allocation20], 0
    %167 = vsyncpa [#allocation23], 0
    %168 = vsyncpa [#allocation26], 0
    %169 = vsyncpa [#allocation29], 0
    %170 = vsyncpa [#allocation6], 0
    %171 = vsyncpa [#allocation32], 0
    // Predicated region
    $region2: #{block_generator_forward.1} parent=1 // pred_check
      _
    $region3: #{block_generator_forward.1} parent=1 // pred_check_branch
      %173 = sbr.rel (0) target = $region5
    $region4: #{block_generator_forward.1} parent=1 // pred_region
      _
    $region5: #{block_generator_forward.1} parent=1 // pred_fallthru
      _
    // Predicated region
    $region6: #{block_generator_forward.1} parent=1 // pred_check
      _
    $region7: #{block_generator_forward.1} parent=1 // pred_check_branch
      %175 = sbr.rel (0) target = $region9
    $region8: #{block_generator_forward.1} parent=1 // pred_region
      _
    $region9: #{block_generator_forward.1} parent=1 // pred_fallthru
      _
    // Predicated region
    $region10: #{block_generator_forward.1} parent=1 // pred_check
      _
    $region11: #{block_generator_forward.1} parent=1 // pred_check_branch
      %177 = sbr.rel (0) target = $region13
    $region12: #{block_generator_forward.1} parent=1 // pred_region
      _
    $region13: #{block_generator_forward.1} parent=1 // pred_fallthru
      _
    // Predicated region
    $region14: #{block_generator_forward.1} parent=1 // pred_check
      _
    $region15: #{block_generator_forward.1} parent=1 // pred_check_branch
      %179 = sbr.rel (0) target = $region17
    $region16: #{block_generator_forward.1} parent=1 // pred_region
      _
    $region17: #{block_generator_forward.1} parent=1 // pred_fallthru
      _
    // Predicated region
    $region18: #{block_generator_forward.1} parent=1 // pred_check
      _
    $region19: #{block_generator_forward.1} parent=1 // pred_check_branch
      %181 = sbr.rel (0) target = $region21
    $region20: #{block_generator_forward.1} parent=1 // pred_region
      _
    $region21: #{block_generator_forward.1} parent=1 // pred_fallthru
      _
    // Predicated region
    $region22: #{block_generator_forward.1} parent=1 // pred_check
      _
    $region23: #{block_generator_forward.1} parent=1 // pred_check_branch
      %183 = sbr.rel (0) target = $region25
    $region24: #{block_generator_forward.1} parent=1 // pred_region
      _
    $region25: #{block_generator_forward.1} parent=1 // pred_fallthru
      _
    // Predicated region
    $region26: #{block_generator_forward.1} parent=1 // pred_check
      _
    $region27: #{block_generator_forward.1} parent=1 // pred_check_branch
      %185 = sbr.rel (0) target = $region29
    $region28: #{block_generator_forward.1} parent=1 // pred_region
      _
    $region29: #{block_generator_forward.1} parent=1 // pred_fallthru
      _
    // Predicated region
    $region30: #{block_generator_forward.1} parent=1 // pred_check
      _
    $region31: #{block_generator_forward.1} parent=1 // pred_check_branch
      %187 = sbr.rel (0) target = $region33
    $region32: #{block_generator_forward.1} parent=1 // pred_region
      _
    $region33: #{block_generator_forward.1} parent=1 // pred_fallthru
      _
    // Predicated region
    $region34: #{block_generator_forward.1} parent=1 // pred_check
      _
    $region35: #{block_generator_forward.1} parent=1 // pred_check_branch
      %189 = sbr.rel (0) target = $region37
    $region36: #{block_generator_forward.1} parent=1 // pred_region
      _
    $region37: #{block_generator_forward.1} parent=1 // pred_fallthru
      _
    // Predicated region
    $region38: #{block_generator_forward.1} parent=1 // pred_check
      _
    $region39: #{block_generator_forward.1} parent=1 // pred_check_branch
      %191 = sbr.rel (0) target = $region41
    $region40: #{block_generator_forward.1} parent=1 // pred_region
      _
    $region41: #{block_generator_forward.1} parent=1 // pred_fallthru
      _
    // Predicated region
    $region42: #{block_generator_forward.1} parent=1 // pred_check
      _
    $region43: #{block_generator_forward.1} parent=1 // pred_check_branch
      %193 = sbr.rel (0) target = $region45
    $region44: #{block_generator_forward.1} parent=1 // pred_region
      _
    $region45: #{block_generator_forward.1} parent=1 // pred_fallthru
      _
    // Predicated region
    $region46: #{block_generator_forward.1} parent=1 // pred_check
      _
    $region47: #{block_generator_forward.1} parent=1 // pred_check_branch
      %195 = sbr.rel (0) target = $region49
    $region48: #{block_generator_forward.1} parent=1 // pred_region
      _
    $region49: #{block_generator_forward.1} parent=1 // pred_fallthru
      _
    // Predicated region
    $region50: #{block_generator_forward.1} parent=1 // pred_check
      _
    $region51: #{block_generator_forward.1} parent=1 // pred_check_branch
      %197 = sbr.rel (0) target = $region53
    $region52: #{block_generator_forward.1} parent=1 // pred_region
      _
    $region53: #{block_generator_forward.1} parent=1 // pred_fallthru
      _
    // Predicated region
    $region54: #{block_generator_forward.1} parent=1 // pred_check
      _
    $region55: #{block_generator_forward.1} parent=1 // pred_check_branch
      %199 = sbr.rel (0) target = $region57
    $region56: #{block_generator_forward.1} parent=1 // pred_region
      _
    $region57: #{block_generator_forward.1} parent=1 // pred_fallthru
      _
    // Predicated region
    $region58: #{block_generator_forward.1} parent=1 // pred_check
      _
    $region59: #{block_generator_forward.1} parent=1 // pred_check_branch
      %201 = sbr.rel (0) target = $region61
    $region60: #{block_generator_forward.1} parent=1 // pred_region
      _
    $region61: #{block_generator_forward.1} parent=1 // pred_fallthru
      _
    // Predicated region
    $region62: #{block_generator_forward.1} parent=1 // pred_check
      _
    $region63: #{block_generator_forward.1} parent=1 // pred_check_branch
      %203 = sbr.rel (0) target = $region65
    $region64: #{block_generator_forward.1} parent=1 // pred_region
      _
    $region65: #{block_generator_forward.1} parent=1 // pred_fallthru
      _
    // Predicated region
    $region66: #{block_generator_forward.1} parent=1 // pred_check
      _
    $region67: #{block_generator_forward.1} parent=1 // pred_check_branch
      %205 = sbr.rel (0) target = $region69
    $region68: #{block_generator_forward.1} parent=1 // pred_region
      _
    $region69: #{block_generator_forward.1} parent=1 // pred_fallthru
      _
    // Predicated region
    $region70: #{block_generator_forward.1} parent=1 // pred_check
      _
    $region71: #{block_generator_forward.1} parent=1 // pred_check_branch
      %207 = sbr.rel (0) target = $region73
    $region72: #{block_generator_forward.1} parent=1 // pred_region
      _
    $region73: #{block_generator_forward.1} parent=1 // pred_fallthru
      _
    // Predicated region
    $region74: #{block_generator_forward.1} parent=1 // pred_check
      _
    $region75: #{block_generator_forward.1} parent=1 // pred_check_branch
      %209 = sbr.rel (0) target = $region77
    $region76: #{block_generator_forward.1} parent=1 // pred_region
      _
    $region77: #{block_generator_forward.1} parent=1 // pred_fallthru
      _
    // Predicated region
    $region78: #{block_generator_forward.1} parent=1 // pred_check
      _
    $region79: #{block_generator_forward.1} parent=1 // pred_check_branch
      %211 = sbr.rel (0) target = $region81
    $region80: #{block_generator_forward.1} parent=1 // pred_region
      %213 = vsyncadd [#allocation5], 0
      %s215 = sshll.u32 %s39, 4
      %s216 = int_to_ptr.hbm [resolvable:$true] %s215
      %s217 = sshll.u32 [#allocation4], 4
      %s218 = int_to_ptr.vmem [resolvable:$true] %s217
      %220 = dma.hbm_to_vmem [thread:$0]  %s216, 16, %s218, [#allocation5]
    $region81: #{block_generator_forward.1} parent=1 // pred_fallthru
      _
    // Predicated region
    $region82: #{block_generator_forward.1} parent=1 // pred_check
      _
    $region83: #{block_generator_forward.1} parent=1 // pred_check_branch
      %222 = sbr.rel (0) target = $region85
    $region84: #{block_generator_forward.1} parent=1 // pred_region
      _
    $region85: #{block_generator_forward.1} parent=1 // pred_fallthru
      _
    // Predicated region
    $region86: #{block_generator_forward.1} parent=1 // pred_check
      _
    $region87: #{block_generator_forward.1} parent=1 // pred_check_branch
      %224 = sbr.rel (0) target = $region89
    $region88: #{block_generator_forward.1} parent=1 // pred_region
      _
    $region89: #{block_generator_forward.1} parent=1 // pred_fallthru
      _
    // Predicated region
    $region90: #{block_generator_forward.1} parent=1 // pred_check
      _
    $region91: #{block_generator_forward.1} parent=1 // pred_check_branch
      %226 = sbr.rel (0) target = $region93
    $region92: #{block_generator_forward.1} parent=1 // pred_region
      %228 = vsyncadd [#allocation8], 0
      %s230 = sshll.u32 %s45, 4
      %s231 = int_to_ptr.hbm [resolvable:$true] %s230
      %s232 = sshll.u32 [#allocation7], 4
      %s233 = int_to_ptr.vmem [resolvable:$true] %s232
      %235 = dma.hbm_to_vmem [thread:$0]  %s231, 16, %s233, [#allocation8]
    $region93: #{block_generator_forward.1} parent=1 // pred_fallthru
      _
    // Predicated region
    $region94: #{block_generator_forward.1} parent=1 // pred_check
      _
    $region95: #{block_generator_forward.1} parent=1 // pred_check_branch
      %237 = sbr.rel (0) target = $region97
    $region96: #{block_generator_forward.1} parent=1 // pred_region
      _
    $region97: #{block_generator_forward.1} parent=1 // pred_fallthru
      _
    // Predicated region
    $region98: #{block_generator_forward.1} parent=1 // pred_check
      _
    $region99: #{block_generator_forward.1} parent=1 // pred_check_branch
      %239 = sbr.rel (0) target = $region101
    $region100: #{block_generator_forward.1} parent=1 // pred_region
      _
    $region101: #{block_generator_forward.1} parent=1 // pred_fallthru
      _
    // Predicated region
    $region102: #{block_generator_forward.1} parent=1 // pred_check
      _
    $region103: #{block_generator_forward.1} parent=1 // pred_check_branch
      %241 = sbr.rel (0) target = $region105
    $region104: #{block_generator_forward.1} parent=1 // pred_region
      %243 = vsyncadd [#allocation8], 0
      %s245 = sshll.u32 %s51, 4
      %s246 = int_to_ptr.hbm [resolvable:$true] %s245
      %s247 = sshll.u32 [#allocation9], 4
      %s248 = int_to_ptr.vmem [resolvable:$true] %s247
      %250 = dma.hbm_to_vmem [thread:$0]  %s246, 16, %s248, [#allocation8]
    $region105: #{block_generator_forward.1} parent=1 // pred_fallthru
      _
    // Predicated region
    $region106: #{block_generator_forward.1} parent=1 // pred_check
      _
    $region107: #{block_generator_forward.1} parent=1 // pred_check_branch
      %252 = sbr.rel (0) target = $region109
    $region108: #{block_generator_forward.1} parent=1 // pred_region
      _
    $region109: #{block_generator_forward.1} parent=1 // pred_fallthru
      _
    // Predicated region
    $region110: #{block_generator_forward.1} parent=1 // pred_check
      _
    $region111: #{block_generator_forward.1} parent=1 // pred_check_branch
      %254 = sbr.rel (0) target = $region113
    $region112: #{block_generator_forward.1} parent=1 // pred_region
      %256 = vsyncadd [#allocation11], 0
      %s258 = sshll.u32 %s55, 4
      %s259 = int_to_ptr.hbm [resolvable:$true] %s258
      %s260 = sshll.u32 [#allocation10], 4
      %s261 = int_to_ptr.vmem [resolvable:$true] %s260
      %263 = dma.hbm_to_vmem [thread:$0]  %s259, 16, %s261, [#allocation11]
    $region113: #{block_generator_forward.1} parent=1 // pred_fallthru
      _
    // Predicated region
    $region114: #{block_generator_forward.1} parent=1 // pred_check
      _
    $region115: #{block_generator_forward.1} parent=1 // pred_check_branch
      %265 = sbr.rel (0) target = $region117
    $region116: #{block_generator_forward.1} parent=1 // pred_region
      _
    $region117: #{block_generator_forward.1} parent=1 // pred_fallthru
      _
    // Predicated region
    $region118: #{block_generator_forward.1} parent=1 // pred_check
      _
    $region119: #{block_generator_forward.1} parent=1 // pred_check_branch
      %267 = sbr.rel (0) target = $region121
    $region120: #{block_generator_forward.1} parent=1 // pred_region
      %269 = vsyncadd [#allocation11], 0
      %s271 = sshll.u32 %s59, 4
      %s272 = int_to_ptr.hbm [resolvable:$true] %s271
      %s273 = sshll.u32 [#allocation12], 4
      %s274 = int_to_ptr.vmem [resolvable:$true] %s273
      %276 = dma.hbm_to_vmem [thread:$0]  %s272, 16, %s274, [#allocation11]
    $region121: #{block_generator_forward.1} parent=1 // pred_fallthru
      _
    // Predicated region
    $region122: #{block_generator_forward.1} parent=1 // pred_check
      _
    $region123: #{block_generator_forward.1} parent=1 // pred_check_branch
      %278 = sbr.rel (0) target = $region125
    $region124: #{block_generator_forward.1} parent=1 // pred_region
      %280 = vsyncadd [#allocation14], 0
      %s282 = sshll.u32 %s61, 4
      %s283 = int_to_ptr.hbm [resolvable:$true] %s282
      %s284 = sshll.u32 [#allocation13], 4
      %s285 = int_to_ptr.vmem [resolvable:$true] %s284
      %287 = dma.hbm_to_vmem [thread:$0]  %s283, 16, %s285, [#allocation14]
    $region125: #{block_generator_forward.1} parent=1 // pred_fallthru
      _
    // Predicated region
    $region126: #{block_generator_forward.1} parent=1 // pred_check
      _
    $region127: #{block_generator_forward.1} parent=1 // pred_check_branch
      %289 = sbr.rel (0) target = $region129
    $region128: #{block_generator_forward.1} parent=1 // pred_region
      %291 = vsyncadd [#allocation14], 0
      %s293 = sshll.u32 %s63, 4
      %s294 = int_to_ptr.hbm [resolvable:$true] %s293
      %s295 = sshll.u32 [#allocation15], 4
      %s296 = int_to_ptr.vmem [resolvable:$true] %s295
      %298 = dma.hbm_to_vmem [thread:$0]  %s294, 16, %s296, [#allocation14]
    $region129: #{block_generator_forward.1} parent=1 // pred_fallthru
      _
    // Predicated region
    $region130: #{block_generator_forward.1} parent=1 // pred_check
      _
    $region131: #{block_generator_forward.1} parent=1 // pred_check_branch
      %300 = sbr.rel (0) target = $region133
    $region132: #{block_generator_forward.1} parent=1 // pred_region
      _
    $region133: #{block_generator_forward.1} parent=1 // pred_fallthru
      _
    // Predicated region
    $region134: #{block_generator_forward.1} parent=1 // pred_check
      _
    $region135: #{block_generator_forward.1} parent=1 // pred_check_branch
      %302 = sbr.rel (0) target = $region137
    $region136: #{block_generator_forward.1} parent=1 // pred_region
      _
    $region137: #{block_generator_forward.1} parent=1 // pred_fallthru
      _
    // Predicated region
    $region138: #{block_generator_forward.1} parent=1 // pred_check
      _
    $region139: #{block_generator_forward.1} parent=1 // pred_check_branch
      %304 = sbr.rel (0) target = $region141
    $region140: #{block_generator_forward.1} parent=1 // pred_region
      _
    $region141: #{block_generator_forward.1} parent=1 // pred_fallthru
      _
    // Predicated region
    $region142: #{block_generator_forward.1} parent=1 // pred_check
      _
    $region143: #{block_generator_forward.1} parent=1 // pred_check_branch
      %306 = sbr.rel (0) target = $region145
    $region144: #{block_generator_forward.1} parent=1 // pred_region
      _
    $region145: #{block_generator_forward.1} parent=1 // pred_fallthru
      _
    // Predicated region
    $region146: #{block_generator_forward.1} parent=1 // pred_check
      _
    $region147: #{block_generator_forward.1} parent=1 // pred_check_branch
      %308 = sbr.rel (0) target = $region149
    $region148: #{block_generator_forward.1} parent=1 // pred_region
      _
    $region149: #{block_generator_forward.1} parent=1 // pred_fallthru
      _
    // Predicated region
    $region150: #{block_generator_forward.1} parent=1 // pred_check
      _
    $region151: #{block_generator_forward.1} parent=1 // pred_check_branch
      %310 = sbr.rel (0) target = $region153
    $region152: #{block_generator_forward.1} parent=1 // pred_region
      _
    $region153: #{block_generator_forward.1} parent=1 // pred_fallthru
      _
    // Predicated region
    $region154: #{block_generator_forward.1} parent=1 // pred_check
      _
    $region155: #{block_generator_forward.1} parent=1 // pred_check_branch
      %312 = sbr.rel (0) target = $region157
    $region156: #{block_generator_forward.1} parent=1 // pred_region
      %314 = vsyncadd [#allocation17], 0
      %s316 = sshll.u32 %s77, 4
      %s317 = int_to_ptr.hbm [resolvable:$true] %s316
      %s318 = sshll.u32 [#allocation16], 4
      %s319 = int_to_ptr.vmem [resolvable:$true] %s318
      %321 = dma.hbm_to_vmem [thread:$0]  %s317, 16, %s319, [#allocation17]
    $region157: #{block_generator_forward.1} parent=1 // pred_fallthru
      _
    // Predicated region
    $region158: #{block_generator_forward.1} parent=1 // pred_check
      _
    $region159: #{block_generator_forward.1} parent=1 // pred_check_branch
      %323 = sbr.rel (0) target = $region161
    $region160: #{block_generator_forward.1} parent=1 // pred_region
      _
    $region161: #{block_generator_forward.1} parent=1 // pred_fallthru
      _
    // Predicated region
    $region162: #{block_generator_forward.1} parent=1 // pred_check
      _
    $region163: #{block_generator_forward.1} parent=1 // pred_check_branch
      %325 = sbr.rel (0) target = $region165
    $region164: #{block_generator_forward.1} parent=1 // pred_region
      %327 = vsyncadd [#allocation17], 0
      %s329 = sshll.u32 %s81, 4
      %s330 = int_to_ptr.hbm [resolvable:$true] %s329
      %s331 = sshll.u32 [#allocation18], 4
      %s332 = int_to_ptr.vmem [resolvable:$true] %s331
      %334 = dma.hbm_to_vmem [thread:$0]  %s330, 16, %s332, [#allocation17]
    $region165: #{block_generator_forward.1} parent=1 // pred_fallthru
      _
    // Predicated region
    $region166: #{block_generator_forward.1} parent=1 // pred_check
      _
    $region167: #{block_generator_forward.1} parent=1 // pred_check_branch
      %336 = sbr.rel (0) target = $region169
    $region168: #{block_generator_forward.1} parent=1 // pred_region
      _
    $region169: #{block_generator_forward.1} parent=1 // pred_fallthru
      _
    // Predicated region
    $region170: #{block_generator_forward.1} parent=1 // pred_check
      _
    $region171: #{block_generator_forward.1} parent=1 // pred_check_branch
      %338 = sbr.rel (0) target = $region173
    $region172: #{block_generator_forward.1} parent=1 // pred_region
      %340 = vsyncadd [#allocation20], 0
      %s342 = sshll.u32 %s85, 4
      %s343 = int_to_ptr.hbm [resolvable:$true] %s342
      %s344 = sshll.u32 [#allocation19], 4
      %s345 = int_to_ptr.vmem [resolvable:$true] %s344
      %347 = dma.hbm_to_vmem [thread:$0]  %s343, 16, %s345, [#allocation20]
    $region173: #{block_generator_forward.1} parent=1 // pred_fallthru
      _
    // Predicated region
    $region174: #{block_generator_forward.1} parent=1 // pred_check
      _
    $region175: #{block_generator_forward.1} parent=1 // pred_check_branch
      %349 = sbr.rel (0) target = $region177
    $region176: #{block_generator_forward.1} parent=1 // pred_region
      _
    $region177: #{block_generator_forward.1} parent=1 // pred_fallthru
      _
    // Predicated region
    $region178: #{block_generator_forward.1} parent=1 // pred_check
      _
    $region179: #{block_generator_forward.1} parent=1 // pred_check_branch
      %351 = sbr.rel (0) target = $region181
    $region180: #{block_generator_forward.1} parent=1 // pred_region
      _
    $region181: #{block_generator_forward.1} parent=1 // pred_fallthru
      _
    // Predicated region
    $region182: #{block_generator_forward.1} parent=1 // pred_check
      _
    $region183: #{block_generator_forward.1} parent=1 // pred_check_branch
      %353 = sbr.rel (0) target = $region185
    $region184: #{block_generator_forward.1} parent=1 // pred_region
      _
    $region185: #{block_generator_forward.1} parent=1 // pred_fallthru
      _
    // Predicated region
    $region186: #{block_generator_forward.1} parent=1 // pred_check
      _
    $region187: #{block_generator_forward.1} parent=1 // pred_check_branch
      %355 = sbr.rel (0) target = $region189
    $region188: #{block_generator_forward.1} parent=1 // pred_region
      _
    $region189: #{block_generator_forward.1} parent=1 // pred_fallthru
      _
    // Predicated region
    $region190: #{block_generator_forward.1} parent=1 // pred_check
      _
    $region191: #{block_generator_forward.1} parent=1 // pred_check_branch
      %357 = sbr.rel (0) target = $region193
    $region192: #{block_generator_forward.1} parent=1 // pred_region
      _
    $region193: #{block_generator_forward.1} parent=1 // pred_fallthru
      _
    // Predicated region
    $region194: #{block_generator_forward.1} parent=1 // pred_check
      _
    $region195: #{block_generator_forward.1} parent=1 // pred_check_branch
      %359 = sbr.rel (0) target = $region197
    $region196: #{block_generator_forward.1} parent=1 // pred_region
      _
    $region197: #{block_generator_forward.1} parent=1 // pred_fallthru
      _
    // Predicated region
    $region198: #{block_generator_forward.1} parent=1 // pred_check
      _
    $region199: #{block_generator_forward.1} parent=1 // pred_check_branch
      %361 = sbr.rel (0) target = $region201
    $region200: #{block_generator_forward.1} parent=1 // pred_region
      _
    $region201: #{block_generator_forward.1} parent=1 // pred_fallthru
      _
    // Predicated region
    $region202: #{block_generator_forward.1} parent=1 // pred_check
      _
    $region203: #{block_generator_forward.1} parent=1 // pred_check_branch
      %363 = sbr.rel (0) target = $region205
    $region204: #{block_generator_forward.1} parent=1 // pred_region
      %365 = vsyncadd [#allocation20], 0
      %s367 = sshll.u32 %s101, 4
      %s368 = int_to_ptr.hbm [resolvable:$true] %s367
      %s369 = sshll.u32 [#allocation21], 4
      %s370 = int_to_ptr.vmem [resolvable:$true] %s369
      %372 = dma.hbm_to_vmem [thread:$0]  %s368, 16, %s370, [#allocation20]
    $region205: #{block_generator_forward.1} parent=1 // pred_fallthru
      _
    // Predicated region
    $region206: #{block_generator_forward.1} parent=1 // pred_check
      _
    $region207: #{block_generator_forward.1} parent=1 // pred_check_branch
      %374 = sbr.rel (0) target = $region209
    $region208: #{block_generator_forward.1} parent=1 // pred_region
      _
    $region209: #{block_generator_forward.1} parent=1 // pred_fallthru
      _
    // Predicated region
    $region210: #{block_generator_forward.1} parent=1 // pred_check
      _
    $region211: #{block_generator_forward.1} parent=1 // pred_check_branch
      %376 = sbr.rel (0) target = $region213
    $region212: #{block_generator_forward.1} parent=1 // pred_region
      _
    $region213: #{block_generator_forward.1} parent=1 // pred_fallthru
      _
    // Predicated region
    $region214: #{block_generator_forward.1} parent=1 // pred_check
      _
    $region215: #{block_generator_forward.1} parent=1 // pred_check_branch
      %378 = sbr.rel (0) target = $region217
    $region216: #{block_generator_forward.1} parent=1 // pred_region
      %380 = vsyncadd [#allocation23], 0
      %s382 = sshll.u32 %s107, 4
      %s383 = int_to_ptr.hbm [resolvable:$true] %s382
      %s384 = sshll.u32 [#allocation22], 4
      %s385 = int_to_ptr.vmem [resolvable:$true] %s384
      %387 = dma.hbm_to_vmem [thread:$0]  %s383, 16, %s385, [#allocation23]
    $region217: #{block_generator_forward.1} parent=1 // pred_fallthru
      _
    // Predicated region
    $region218: #{block_generator_forward.1} parent=1 // pred_check
      _
    $region219: #{block_generator_forward.1} parent=1 // pred_check_branch
      %389 = sbr.rel (0) target = $region221
    $region220: #{block_generator_forward.1} parent=1 // pred_region
      _
    $region221: #{block_generator_forward.1} parent=1 // pred_fallthru
      _
    // Predicated region
    $region222: #{block_generator_forward.1} parent=1 // pred_check
      _
    $region223: #{block_generator_forward.1} parent=1 // pred_check_branch
      %391 = sbr.rel (0) target = $region225
    $region224: #{block_generator_forward.1} parent=1 // pred_region
      _
    $region225: #{block_generator_forward.1} parent=1 // pred_fallthru
      _
    // Predicated region
    $region226: #{block_generator_forward.1} parent=1 // pred_check
      _
    $region227: #{block_generator_forward.1} parent=1 // pred_check_branch
      %393 = sbr.rel (0) target = $region229
    $region228: #{block_generator_forward.1} parent=1 // pred_region
      %395 = vsyncadd [#allocation23], 0
      %s397 = sshll.u32 %s113, 4
      %s398 = int_to_ptr.hbm [resolvable:$true] %s397
      %s399 = sshll.u32 [#allocation24], 4
      %s400 = int_to_ptr.vmem [resolvable:$true] %s399
      %402 = dma.hbm_to_vmem [thread:$0]  %s398, 16, %s400, [#allocation23]
    $region229: #{block_generator_forward.1} parent=1 // pred_fallthru
      _
    // Predicated region
    $region230: #{block_generator_forward.1} parent=1 // pred_check
      _
    $region231: #{block_generator_forward.1} parent=1 // pred_check_branch
      %404 = sbr.rel (0) target = $region233
    $region232: #{block_generator_forward.1} parent=1 // pred_region
      _
    $region233: #{block_generator_forward.1} parent=1 // pred_fallthru
      _
    // Predicated region
    $region234: #{block_generator_forward.1} parent=1 // pred_check
      _
    $region235: #{block_generator_forward.1} parent=1 // pred_check_branch
      %406 = sbr.rel (0) target = $region237
    $region236: #{block_generator_forward.1} parent=1 // pred_region
      _
    $region237: #{block_generator_forward.1} parent=1 // pred_fallthru
      _
    // Predicated region
    $region238: #{block_generator_forward.1} parent=1 // pred_check
      _
    $region239: #{block_generator_forward.1} parent=1 // pred_check_branch
      %408 = sbr.rel (0) target = $region241
    $region240: #{block_generator_forward.1} parent=1 // pred_region
      _
    $region241: #{block_generator_forward.1} parent=1 // pred_fallthru
      _
    // Predicated region
    $region242: #{block_generator_forward.1} parent=1 // pred_check
      _
    $region243: #{block_generator_forward.1} parent=1 // pred_check_branch
      %410 = sbr.rel (0) target = $region245
    $region244: #{block_generator_forward.1} parent=1 // pred_region
      _
    $region245: #{block_generator_forward.1} parent=1 // pred_fallthru
      _
    // Predicated region
    $region246: #{block_generator_forward.1} parent=1 // pred_check
      _
    $region247: #{block_generator_forward.1} parent=1 // pred_check_branch
      %412 = sbr.rel (0) target = $region249
    $region248: #{block_generator_forward.1} parent=1 // pred_region
      _
    $region249: #{block_generator_forward.1} parent=1 // pred_fallthru
      _
    // Predicated region
    $region250: #{block_generator_forward.1} parent=1 // pred_check
      _
    $region251: #{block_generator_forward.1} parent=1 // pred_check_branch
      %414 = sbr.rel (0) target = $region253
    $region252: #{block_generator_forward.1} parent=1 // pred_region
      %416 = vsyncadd [#allocation26], 0
      %s418 = sshll.u32 %s125, 4
      %s419 = int_to_ptr.hbm [resolvable:$true] %s418
      %s420 = sshll.u32 [#allocation25], 4
      %s421 = int_to_ptr.vmem [resolvable:$true] %s420
      %423 = dma.hbm_to_vmem [thread:$0]  %s419, 16, %s421, [#allocation26]
    $region253: #{block_generator_forward.1} parent=1 // pred_fallthru
      _
    // Predicated region
    $region254: #{block_generator_forward.1} parent=1 // pred_check
      _
    $region255: #{block_generator_forward.1} parent=1 // pred_check_branch
      %425 = sbr.rel (0) target = $region257
    $region256: #{block_generator_forward.1} parent=1 // pred_region
      _
    $region257: #{block_generator_forward.1} parent=1 // pred_fallthru
      _
    // Predicated region
    $region258: #{block_generator_forward.1} parent=1 // pred_check
      _
    $region259: #{block_generator_forward.1} parent=1 // pred_check_branch
      %427 = sbr.rel (0) target = $region261
    $region260: #{block_generator_forward.1} parent=1 // pred_region
      %429 = vsyncadd [#allocation26], 0
      %s431 = sshll.u32 %s129, 4
      %s432 = int_to_ptr.hbm [resolvable:$true] %s431
      %s433 = sshll.u32 [#allocation27], 4
      %s434 = int_to_ptr.vmem [resolvable:$true] %s433
      %436 = dma.hbm_to_vmem [thread:$0]  %s432, 16, %s434, [#allocation26]
    $region261: #{block_generator_forward.1} parent=1 // pred_fallthru
      _
    // Predicated region
    $region262: #{block_generator_forward.1} parent=1 // pred_check
      _
    $region263: #{block_generator_forward.1} parent=1 // pred_check_branch
      %438 = sbr.rel (0) target = $region265
    $region264: #{block_generator_forward.1} parent=1 // pred_region
      _
    $region265: #{block_generator_forward.1} parent=1 // pred_fallthru
      _
    // Predicated region
    $region266: #{block_generator_forward.1} parent=1 // pred_check
      _
    $region267: #{block_generator_forward.1} parent=1 // pred_check_branch
      %440 = sbr.rel (0) target = $region269
    $region268: #{block_generator_forward.1} parent=1 // pred_region
      %442 = vsyncadd [#allocation29], 0
      %s444 = sshll.u32 %s133, 4
      %s445 = int_to_ptr.hbm [resolvable:$true] %s444
      %s446 = sshll.u32 [#allocation28], 4
      %s447 = int_to_ptr.vmem [resolvable:$true] %s446
      %449 = dma.hbm_to_vmem [thread:$0]  %s445, 16, %s447, [#allocation29]
    $region269: #{block_generator_forward.1} parent=1 // pred_fallthru
      _
    // Predicated region
    $region270: #{block_generator_forward.1} parent=1 // pred_check
      _
    $region271: #{block_generator_forward.1} parent=1 // pred_check_branch
      %451 = sbr.rel (0) target = $region273
    $region272: #{block_generator_forward.1} parent=1 // pred_region
      _
    $region273: #{block_generator_forward.1} parent=1 // pred_fallthru
      _
    // Predicated region
    $region274: #{block_generator_forward.1} parent=1 // pred_check
      _
    $region275: #{block_generator_forward.1} parent=1 // pred_check_branch
      %453 = sbr.rel (0) target = $region277
    $region276: #{block_generator_forward.1} parent=1 // pred_region
      _
    $region277: #{block_generator_forward.1} parent=1 // pred_fallthru
      _
    // Predicated region
    $region278: #{block_generator_forward.1} parent=1 // pred_check
      _
    $region279: #{block_generator_forward.1} parent=1 // pred_check_branch
      %455 = sbr.rel (0) target = $region281
    $region280: #{block_generator_forward.1} parent=1 // pred_region
      %457 = dma.done [#allocation5], 16
    $region281: #{block_generator_forward.1} parent=1 // pred_fallthru
      _
    // Predicated region
    $region282: #{block_generator_forward.1} parent=1 // pred_check
      _
    $region283: #{block_generator_forward.1} parent=1 // pred_check_branch
      %459 = sbr.rel (0) target = $region285
    $region284: #{block_generator_forward.1} parent=1 // pred_region
      %461 = dma.done [#allocation8], 16
    $region285: #{block_generator_forward.1} parent=1 // pred_fallthru
      _
    // Predicated region
    $region286: #{block_generator_forward.1} parent=1 // pred_check
      _
    $region287: #{block_generator_forward.1} parent=1 // pred_check_branch
      %463 = sbr.rel (0) target = $region289
    $region288: #{block_generator_forward.1} parent=1 // pred_region
      %465 = dma.done [#allocation8], 16
    $region289: #{block_generator_forward.1} parent=1 // pred_fallthru
      _
    // Predicated region
    $region290: #{block_generator_forward.1} parent=1 // pred_check
      _
    $region291: #{block_generator_forward.1} parent=1 // pred_check_branch
      %467 = sbr.rel (0) target = $region293
    $region292: #{block_generator_forward.1} parent=1 // pred_region
      %469 = dma.done [#allocation11], 16
    $region293: #{block_generator_forward.1} parent=1 // pred_fallthru
      _
    // Predicated region
    $region294: #{block_generator_forward.1} parent=1 // pred_check
      _
    $region295: #{block_generator_forward.1} parent=1 // pred_check_branch
      %471 = sbr.rel (0) target = $region297
    $region296: #{block_generator_forward.1} parent=1 // pred_region
      %473 = dma.done [#allocation11], 16
    $region297: #{block_generator_forward.1} parent=1 // pred_fallthru
      _
    // Predicated region
    $region298: #{block_generator_forward.1} parent=1 // pred_check
      _
    $region299: #{block_generator_forward.1} parent=1 // pred_check_branch
      %475 = sbr.rel (0) target = $region301
    $region300: #{block_generator_forward.1} parent=1 // pred_region
      %477 = dma.done [#allocation14], 16
    $region301: #{block_generator_forward.1} parent=1 // pred_fallthru
      _
    // Predicated region
    $region302: #{block_generator_forward.1} parent=1 // pred_check
      _
    $region303: #{block_generator_forward.1} parent=1 // pred_check_branch
      %479 = sbr.rel (0) target = $region305
    $region304: #{block_generator_forward.1} parent=1 // pred_region
      %481 = dma.done [#allocation14], 16
    $region305: #{block_generator_forward.1} parent=1 // pred_fallthru
      _
    // Predicated region
    $region306: #{block_generator_forward.1} parent=1 // pred_check
      _
    $region307: #{block_generator_forward.1} parent=1 // pred_check_branch
      %483 = sbr.rel (0) target = $region309
    $region308: #{block_generator_forward.1} parent=1 // pred_region
      %485 = dma.done [#allocation17], 16
    $region309: #{block_generator_forward.1} parent=1 // pred_fallthru
      _
    // Predicated region
    $region310: #{block_generator_forward.1} parent=1 // pred_check
      _
    $region311: #{block_generator_forward.1} parent=1 // pred_check_branch
      %487 = sbr.rel (0) target = $region313
    $region312: #{block_generator_forward.1} parent=1 // pred_region
      %489 = dma.done [#allocation17], 16
    $region313: #{block_generator_forward.1} parent=1 // pred_fallthru
      _
    // Predicated region
    $region314: #{block_generator_forward.1} parent=1 // pred_check
      _
    $region315: #{block_generator_forward.1} parent=1 // pred_check_branch
      %491 = sbr.rel (0) target = $region317
    $region316: #{block_generator_forward.1} parent=1 // pred_region
      %493 = dma.done [#allocation20], 16
    $region317: #{block_generator_forward.1} parent=1 // pred_fallthru
      _
    // Predicated region
    $region318: #{block_generator_forward.1} parent=1 // pred_check
      _
    $region319: #{block_generator_forward.1} parent=1 // pred_check_branch
      %495 = sbr.rel (0) target = $region321
    $region320: #{block_generator_forward.1} parent=1 // pred_region
      %497 = dma.done [#allocation20], 16
    $region321: #{block_generator_forward.1} parent=1 // pred_fallthru
      _
    // Predicated region
    $region322: #{block_generator_forward.1} parent=1 // pred_check
      _
    $region323: #{block_generator_forward.1} parent=1 // pred_check_branch
      %499 = sbr.rel (0) target = $region325
    $region324: #{block_generator_forward.1} parent=1 // pred_region
      %501 = dma.done [#allocation23], 16
    $region325: #{block_generator_forward.1} parent=1 // pred_fallthru
      _
    // Predicated region
    $region326: #{block_generator_forward.1} parent=1 // pred_check
      _
    $region327: #{block_generator_forward.1} parent=1 // pred_check_branch
      %503 = sbr.rel (0) target = $region329
    $region328: #{block_generator_forward.1} parent=1 // pred_region
      %505 = dma.done [#allocation23], 16
    $region329: #{block_generator_forward.1} parent=1 // pred_fallthru
      _
    // Predicated region
    $region330: #{block_generator_forward.1} parent=1 // pred_check
      _
    $region331: #{block_generator_forward.1} parent=1 // pred_check_branch
      %507 = sbr.rel (0) target = $region333
    $region332: #{block_generator_forward.1} parent=1 // pred_region
      %509 = dma.done [#allocation26], 16
    $region333: #{block_generator_forward.1} parent=1 // pred_fallthru
      _
    // Predicated region
    $region334: #{block_generator_forward.1} parent=1 // pred_check
      _
    $region335: #{block_generator_forward.1} parent=1 // pred_check_branch
      %511 = sbr.rel (0) target = $region337
    $region336: #{block_generator_forward.1} parent=1 // pred_region
      %513 = dma.done [#allocation26], 16
    $region337: #{block_generator_forward.1} parent=1 // pred_fallthru
      _
    // Predicated region
    $region338: #{block_generator_forward.1} parent=1 // pred_check
      _
    $region339: #{block_generator_forward.1} parent=1 // pred_check_branch
      %515 = sbr.rel (0) target = $region341
    $region340: #{block_generator_forward.1} parent=1 // pred_region
      %517 = dma.done [#allocation29], 16
    $region341: #{block_generator_forward.1} parent=1 // pred_fallthru
      _
    %v519 = vld [vmem:[%s17] sm:$0xff]
    %v520 = vld [vmem:[%s17 + $0x8] sm:$0xff]
    %v521 = vld [vmem:[%s19] sm:$0xff]
    %v522 = vld [vmem:[%s19 + $0x8] sm:$0xff]
    %v523 = vld [vmem:[%s1] sm:$0xff]
    %v524 = vld [vmem:[%s1 + $0x8] sm:$0xff]
    %v525 = vld [vmem:[%s23] sm:$0x7]
    %v526 = vpack.c.bf16 %v524, %v523
    %v527 = vld [vmem:[%s3] sm:$0xff]
    %v528 = vld [vmem:[%s3 + $0x8] sm:$0xff]
    %v529 = vld [vmem:[%s25] sm:$0x1]
    %v530 = vunpack.c.l.bf16 %v529
    %532 = vset.pattern.permute.xlu0 0
    %533 = vperm.xlu0 %532, %v527
    %v534 = vpop.permute.xlu0 %533
    %537 = vset.pattern.permute.xlu0 0
    %538 = vperm.xlu0 %537, %v528
    %v539 = vpop.permute.xlu0 %538
    %v541 = vperm.slane %v530, 0
    %v542 = vmul.f32 %v534, %v541
    %v543 = vmul.f32 %v539, %v541
    %vm544 = vcmask 48128
    %v546 = vsel %vm544, %v526, 0
    %vm548 = vcmask 1042432
    %v550 = vsel %vm548, %v525, 0
    %552 = vmatpush.bf16.msra.mxu0 0
    %553 = vmatpush.bf16.msra.mxu0 0
    %554 = vmatpush.bf16.msra.mxu0 0
    %555 = vmatpush.bf16.msra.mxu0 0
    %556 = vmatpush.bf16.msra.mxu0 0
    %557 = vmatpush.bf16.msra.mxu0 0
    %558 = vmatpush.bf16.msra.mxu0 0
    %559 = vmatpush.bf16.msra.mxu0 %v550
    %560 = vmatmul.bf16.gmra.mxu0 %v546
    %v561 = vpop.f32.mrf.mxu0
    %v562 = vadd.f32 %v542, %v561
    %v563 = vpop.f32.mrf.mxu0
    %v564 = vadd.f32 %v543, %v563
    %565 = vdwg.mxu0
    %v566 = vld [vmem:[%s5] sm:$0xff]
    %v567 = vld [vmem:[%s5 + $0x8] sm:$0xff]
    %v568 = vld [vmem:[%s27] sm:$0x1]
    %v569 = vpack.c.bf16 %v567, %v566
    %vm570 = vcmask 15360
    %v572 = vsel %vm570, %v569, 0
    %vm574 = vcmask 1040384
    %v576 = vsel %vm574, %v568, 0
    %578 = vmatpush.bf16.msra.mxu0 0
    %579 = vmatpush.bf16.msra.mxu0 0
    %580 = vmatpush.bf16.msra.mxu0 0
    %581 = vmatpush.bf16.msra.mxu0 0
    %582 = vmatpush.bf16.msra.mxu0 0
    %583 = vmatpush.bf16.msra.mxu0 0
    %584 = vmatpush.bf16.msra.mxu0 0
    %585 = vmatpush.bf16.msra.mxu0 %v576
    %586 = vmatmul.bf16.gmra.mxu0 %v572
    %v587 = vpop.f32.mrf.mxu0
    %v588 = vadd.f32 0.0, %v587
    %v589 = vpop.f32.mrf.mxu0
    %v590 = vadd.f32 0.0, %v589
    %591 = vdwg.mxu0
    %v592 = vadd.f32 %v562, %v588
    %v593 = vadd.f32 %v564, %v590
    %v594 = vld [vmem:[%s7] sm:$0xff]
    %v595 = vld [vmem:[%s7 + $0x8] sm:$0xff]
    %v596 = vld [vmem:[%s29] sm:$0x1]
    %v597 = vpack.c.bf16 %v595, %v594
    %v599 = vsel %vm570, %v597, 0
    %v602 = vsel %vm574, %v596, 0
    %604 = vmatpush.bf16.msra.mxu0 0
    %605 = vmatpush.bf16.msra.mxu0 0
    %606 = vmatpush.bf16.msra.mxu0 0
    %607 = vmatpush.bf16.msra.mxu0 0
    %608 = vmatpush.bf16.msra.mxu0 0
    %609 = vmatpush.bf16.msra.mxu0 0
    %610 = vmatpush.bf16.msra.mxu0 0
    %611 = vmatpush.bf16.msra.mxu0 %v602
    %612 = vmatmul.bf16.gmra.mxu0 %v599
    %v613 = vpop.f32.mrf.mxu0
    %v614 = vadd.f32 0.0, %v613
    %v615 = vpop.f32.mrf.mxu0
    %v616 = vadd.f32 0.0, %v615
    %617 = vdwg.mxu0
    %v618 = vadd.f32 %v592, %v614
    %v619 = vadd.f32 %v593, %v616
    %v620 = vld [vmem:[%s9] sm:$0xff]
    %v621 = vld [vmem:[%s9 + $0x8] sm:$0xff]
    %v622 = vld [vmem:[%s31] sm:$0x1]
    %v623 = vpack.c.bf16 %v621, %v620
    %v625 = vsel %vm570, %v623, 0
    %v628 = vsel %vm574, %v622, 0
    %630 = vmatpush.bf16.msra.mxu0 0
    %631 = vmatpush.bf16.msra.mxu0 0
    %632 = vmatpush.bf16.msra.mxu0 0
    %633 = vmatpush.bf16.msra.mxu0 0
    %634 = vmatpush.bf16.msra.mxu0 0
    %635 = vmatpush.bf16.msra.mxu0 0
    %636 = vmatpush.bf16.msra.mxu0 0
    %637 = vmatpush.bf16.msra.mxu0 %v628
    %638 = vmatmul.bf16.gmra.mxu0 %v625
    %v639 = vpop.f32.mrf.mxu0
    %v640 = vadd.f32 0.0, %v639
    %v641 = vpop.f32.mrf.mxu0
    %v642 = vadd.f32 0.0, %v641
    %643 = vdwg.mxu0
    %v644 = vadd.f32 %v618, %v640
    %v645 = vadd.f32 %v619, %v642
    %v646 = vld [vmem:[%s33] sm:$0xff]
    %v647 = vld [vmem:[%s33 + $0x8] sm:$0xff]
    %v648 = vadd.f32 %v644, %v646
    %v649 = vadd.f32 %v645, %v647
    %v650 = vlaneseq
    %v651 = vand.u32 %v650, 127
    %vm652 = vcmp.ge.s32.totalorder %v651, 16
    %v653 = vmax.f32 %v648, 0.0
    %v654 = vmax.f32 %v649, 0.0
    %v655 = vsel %vm652, %v653, %v648
    %v656 = vsel %vm652, %v654, %v649
    %v657 = vld [vmem:[%s35] sm:$0xf]
    %v658 = vld [vmem:[%s35 + $0x4] sm:$0xf]
    %v659 = vld [vmem:[%s35 + $0x8] sm:$0xf]
    %v660 = vld [vmem:[%s35 + $0xc] sm:$0xf]
    %v661 = vld [vmem:[%s35 + $0x10] sm:$0xf]
    %v662 = vld [vmem:[%s35 + $0x14] sm:$0xf]
    %v663 = vld [vmem:[%s35 + $0x18] sm:$0xf]
    %v664 = vld [vmem:[%s35 + $0x1c] sm:$0xf]
    %v665 = vld [vmem:[%s37] sm:$0xf]
    %v666 = vld [vmem:[%s37 + $0x4] sm:$0xf]
    %v667 = vld [vmem:[%s37 + $0x8] sm:$0xf]
    %v668 = vld [vmem:[%s37 + $0xc] sm:$0xf]
    %v669 = vld [vmem:[%s37 + $0x10] sm:$0xf]
    %v670 = vld [vmem:[%s37 + $0x14] sm:$0xf]
    %v671 = vld [vmem:[%s37 + $0x18] sm:$0xf]
    %v672 = vld [vmem:[%s37 + $0x1c] sm:$0xf]
    %v673 = vld [vmem:[#allocation4] sm:$0x1]
    %v674 = vpack.c.bf16 %v656, %v655
    %v683 = vunpack.c.l.b16 %v665
    %v684 = vunpack.c.l.b16 %v666
    %v685 = vunpack.c.l.b16 %v667
    %v686 = vunpack.c.l.b16 %v668
    %v687 = vunpack.c.l.b16 %v669
    %v688 = vunpack.c.l.b16 %v670
    %v689 = vunpack.c.l.b16 %v671
    %v690 = vunpack.c.l.b16 %v672
    %v691 = vpack.c.b16 %v684, %v683
    %v692 = vpack.c.b16 %v686, %v685
    %v693 = vpack.c.b16 %v688, %v687
    %v694 = vpack.c.b16 %v690, %v689
    %vm699 = vcmask 523264
    %v701 = vsel %vm699, %v674, 0
    %703 = vmatpush.bf16.msra.mxu0 0
    %704 = vmatpush.bf16.msra.mxu0 0
    %705 = vmatpush.bf16.msra.mxu0 0
    %706 = vmatpush.bf16.msra.mxu0 0
    %707 = vmatpush.bf16.msra.mxu0 %v694
    %708 = vmatpush.bf16.msra.mxu0 %v693
    %709 = vmatpush.bf16.msra.mxu0 %v692
    %710 = vmatpush.bf16.msra.mxu0 %v691
    %711 = vmatmul.bf16.gmra.mxu0 %v701
    %v712 = vpop.f32.mrf.mxu0
    %v713 = vadd.f32 0.0, %v712
    %v714 = vpop.f32.mrf.mxu0
    %v715 = vadd.f32 0.0, %v714
    %716 = vdwg.mxu0
    %vm717 = vcmask 130048
    %v719 = vsel %vm717, %v519, 0
    %v722 = vsel %vm717, %v520, 0
    %724 = vmatpush.msra.mxu0 0.0
    %725 = vmatpush.msra.mxu0 0.0
    %726 = vmatpush.msra.mxu0 0.0
    %727 = vmatpush.msra.mxu0 0.0
    %728 = vmatpush.msra.mxu0 0.0
    %729 = vmatpush.msra.mxu0 0.0
    %730 = vmatpush.msra.mxu0 0.0
    %731 = vmatpush.msra.mxu0 0.0
    %732 = vmatpush.msra.mxu0 0.0
    %733 = vmatpush.msra.mxu0 0.0
    %734 = vmatpush.msra.mxu0 0.0
    %735 = vmatpush.msra.mxu0 0.0
    %736 = vmatpush.msra.mxu0 0.0
    %737 = vmatpush.msra.mxu0 0.0
    %738 = vmatpush.msra.mxu0 %v715
    %739 = vmatpush.msra.mxu0 %v713
    %740 = vmatmul.f32.gmra.mxu0 %v719
    %v741 = vpop.f32.mrf.mxu0
    %v742 = vadd.f32 0.0, %v741
    %743 = vmatmul.f32.gmra.mxu0 %v722
    %v744 = vpop.f32.mrf.mxu0
    %v745 = vadd.f32 0.0, %v744
    %746 = vdwg.mxu0
    %v748 = vperm.slane %v673, 0
    %v758 = vunpack.c.l.b16 %v657
    %v759 = vunpack.c.l.b16 %v658
    %v760 = vunpack.c.l.b16 %v659
    %v761 = vunpack.c.l.b16 %v660
    %v762 = vunpack.c.l.b16 %v661
    %v763 = vunpack.c.l.b16 %v662
    %v764 = vunpack.c.l.b16 %v663
    %v765 = vunpack.c.l.b16 %v664
    %v766 = vpack.c.b16 %v759, %v758
    %v767 = vpack.c.b16 %v761, %v760
    %v768 = vpack.c.b16 %v763, %v762
    %v769 = vpack.c.b16 %v765, %v764
    %774 = vmatpush.bf16.msra.mxu0 0
    %775 = vmatpush.bf16.msra.mxu0 0
    %776 = vmatpush.bf16.msra.mxu0 0
    %777 = vmatpush.bf16.msra.mxu0 0
    %778 = vmatpush.bf16.msra.mxu0 %v769
    %779 = vmatpush.bf16.msra.mxu0 %v768
    %780 = vmatpush.bf16.msra.mxu0 %v767
    %781 = vmatpush.bf16.msra.mxu0 %v766
    %782 = vmatmul.bf16.gmra.mxu0 %v701
    %v783 = vpop.f32.mrf.mxu0
    %v784 = vadd.f32 %v748, %v783
    %v785 = vpop.f32.mrf.mxu0
    %v786 = vadd.f32 %v748, %v785
    %787 = vdwg.mxu0
    %789 = vset.pattern.permute.xlu0 0
    %790 = vperm.xlu0 %789, %v521
    %v791 = vpop.permute.xlu0 %790
    %794 = vset.pattern.permute.xlu0 0
    %795 = vperm.xlu0 %794, %v522
    %v796 = vpop.permute.xlu0 %795
    %v798 = vmul.f32 %v791, %v784
    %v799 = vmul.f32 %v796, %v786
    %v800 = vadd.f32 %v798, %v742
    %v801 = vadd.f32 %v799, %v745
    %v802 = vmax.f32 %v800, 0.0
    %v803 = vmax.f32 %v801, 0.0
    %v804 = vld [vmem:[%s41] sm:$0xf]
    %v805 = vld [vmem:[%s41 + $0x4] sm:$0xf]
    %v806 = vld [vmem:[%s41 + $0x8] sm:$0xf]
    %v807 = vld [vmem:[%s41 + $0xc] sm:$0xf]
    %v808 = vld [vmem:[%s43] sm:$0xf]
    %v809 = vld [vmem:[%s43 + $0x4] sm:$0xf]
    %v810 = vld [vmem:[%s43 + $0x8] sm:$0xf]
    %v811 = vld [vmem:[%s43 + $0xc] sm:$0xf]
    %v812 = vld [vmem:[#allocation7] sm:$0x1]
    %v813 = vpack.c.bf16 %v803, %v802
    %v818 = vunpack.c.l.b16 %v808
    %v819 = vunpack.c.l.b16 %v809
    %v820 = vunpack.c.l.b16 %v810
    %v821 = vunpack.c.l.b16 %v811
    %v822 = vpack.c.b16 %v819, %v818
    %v823 = vpack.c.b16 %v821, %v820
    %vm826 = vcmask 261120
    %v828 = vsel %vm826, %v813, 0
    %830 = vmatpush.bf16.msra.mxu0 0
    %831 = vmatpush.bf16.msra.mxu0 0
    %832 = vmatpush.bf16.msra.mxu0 0
    %833 = vmatpush.bf16.msra.mxu0 0
    %834 = vmatpush.bf16.msra.mxu0 0
    %835 = vmatpush.bf16.msra.mxu0 0
    %836 = vmatpush.bf16.msra.mxu0 %v823
    %837 = vmatpush.bf16.msra.mxu0 %v822
    %838 = vmatmul.bf16.gmra.mxu0 %v828
    %v839 = vpop.f32.mrf.mxu0
    %v840 = vadd.f32 0.0, %v839
    %v841 = vpop.f32.mrf.mxu0
    %v842 = vadd.f32 0.0, %v841
    %843 = vdwg.mxu0
    %844 = vmatpush.msra.mxu0 0.0
    %845 = vmatpush.msra.mxu0 0.0
    %846 = vmatpush.msra.mxu0 0.0
    %847 = vmatpush.msra.mxu0 0.0
    %848 = vmatpush.msra.mxu0 0.0
    %849 = vmatpush.msra.mxu0 0.0
    %850 = vmatpush.msra.mxu0 0.0
    %851 = vmatpush.msra.mxu0 0.0
    %852 = vmatpush.msra.mxu0 0.0
    %853 = vmatpush.msra.mxu0 0.0
    %854 = vmatpush.msra.mxu0 0.0
    %855 = vmatpush.msra.mxu0 0.0
    %856 = vmatpush.msra.mxu0 0.0
    %857 = vmatpush.msra.mxu0 0.0
    %858 = vmatpush.msra.mxu0 %v842
    %859 = vmatpush.msra.mxu0 %v840
    %860 = vmatmul.f32.gmra.mxu0 %v719
    %v861 = vpop.f32.mrf.mxu0
    %v862 = vadd.f32 0.0, %v861
    %863 = vmatmul.f32.gmra.mxu0 %v722
    %v864 = vpop.f32.mrf.mxu0
    %v865 = vadd.f32 0.0, %v864
    %866 = vdwg.mxu0
    %v868 = vperm.slane %v812, 0
    %v874 = vunpack.c.l.b16 %v804
    %v875 = vunpack.c.l.b16 %v805
    %v876 = vunpack.c.l.b16 %v806
    %v877 = vunpack.c.l.b16 %v807
    %v878 = vpack.c.b16 %v875, %v874
    %v879 = vpack.c.b16 %v877, %v876
    %882 = vmatpush.bf16.msra.mxu0 0
    %883 = vmatpush.bf16.msra.mxu0 0
    %884 = vmatpush.bf16.msra.mxu0 0
    %885 = vmatpush.bf16.msra.mxu0 0
    %886 = vmatpush.bf16.msra.mxu0 0
    %887 = vmatpush.bf16.msra.mxu0 0
    %888 = vmatpush.bf16.msra.mxu0 %v879
    %889 = vmatpush.bf16.msra.mxu0 %v878
    %890 = vmatmul.bf16.gmra.mxu0 %v828
    %v891 = vpop.f32.mrf.mxu0
    %v892 = vadd.f32 %v868, %v891
    %v893 = vpop.f32.mrf.mxu0
    %v894 = vadd.f32 %v868, %v893
    %895 = vdwg.mxu0
    %v896 = vmul.f32 %v791, %v892
    %v897 = vmul.f32 %v796, %v894
    %v898 = vadd.f32 %v896, %v862
    %v899 = vadd.f32 %v897, %v865
    %v900 = vmax.f32 %v898, 0.0
    %v901 = vmax.f32 %v899, 0.0
    %v902 = vld [vmem:[%s47] sm:$0xf]
    %v903 = vld [vmem:[%s47 + $0x4] sm:$0xf]
    %v904 = vld [vmem:[%s47 + $0x8] sm:$0xf]
    %v905 = vld [vmem:[%s47 + $0xc] sm:$0xf]
    %v906 = vld [vmem:[%s49] sm:$0xf]
    %v907 = vld [vmem:[%s49 + $0x4] sm:$0xf]
    %v908 = vld [vmem:[%s49 + $0x8] sm:$0xf]
    %v909 = vld [vmem:[%s49 + $0xc] sm:$0xf]
    %v910 = vld [vmem:[#allocation9] sm:$0x1]
    %v911 = vpack.c.bf16 %v901, %v900
    %v916 = vunpack.c.l.b16 %v906
    %v917 = vunpack.c.l.b16 %v907
    %v918 = vunpack.c.l.b16 %v908
    %v919 = vunpack.c.l.b16 %v909
    %v920 = vpack.c.b16 %v917, %v916
    %v921 = vpack.c.b16 %v919, %v918
    %v925 = vsel %vm826, %v911, 0
    %927 = vmatpush.bf16.msra.mxu0 0
    %928 = vmatpush.bf16.msra.mxu0 0
    %929 = vmatpush.bf16.msra.mxu0 0
    %930 = vmatpush.bf16.msra.mxu0 0
    %931 = vmatpush.bf16.msra.mxu0 0
    %932 = vmatpush.bf16.msra.mxu0 0
    %933 = vmatpush.bf16.msra.mxu0 %v921
    %934 = vmatpush.bf16.msra.mxu0 %v920
    %935 = vmatmul.bf16.gmra.mxu0 %v925
    %v936 = vpop.f32.mrf.mxu0
    %v937 = vadd.f32 0.0, %v936
    %v938 = vpop.f32.mrf.mxu0
    %v939 = vadd.f32 0.0, %v938
    %940 = vdwg.mxu0
    %941 = vmatpush.msra.mxu0 0.0
    %942 = vmatpush.msra.mxu0 0.0
    %943 = vmatpush.msra.mxu0 0.0
    %944 = vmatpush.msra.mxu0 0.0
    %945 = vmatpush.msra.mxu0 0.0
    %946 = vmatpush.msra.mxu0 0.0
    %947 = vmatpush.msra.mxu0 0.0
    %948 = vmatpush.msra.mxu0 0.0
    %949 = vmatpush.msra.mxu0 0.0
    %950 = vmatpush.msra.mxu0 0.0
    %951 = vmatpush.msra.mxu0 0.0
    %952 = vmatpush.msra.mxu0 0.0
    %953 = vmatpush.msra.mxu0 0.0
    %954 = vmatpush.msra.mxu0 0.0
    %955 = vmatpush.msra.mxu0 %v939
    %956 = vmatpush.msra.mxu0 %v937
    %957 = vmatmul.f32.gmra.mxu0 %v719
    %v958 = vpop.f32.mrf.mxu0
    %v959 = vadd.f32 0.0, %v958
    %960 = vmatmul.f32.gmra.mxu0 %v722
    %v961 = vpop.f32.mrf.mxu0
    %v962 = vadd.f32 0.0, %v961
    %963 = vdwg.mxu0
    %v965 = vperm.slane %v910, 0
    %v971 = vunpack.c.l.b16 %v902
    %v972 = vunpack.c.l.b16 %v903
    %v973 = vunpack.c.l.b16 %v904
    %v974 = vunpack.c.l.b16 %v905
    %v975 = vpack.c.b16 %v972, %v971
    %v976 = vpack.c.b16 %v974, %v973
    %979 = vmatpush.bf16.msra.mxu0 0
    %980 = vmatpush.bf16.msra.mxu0 0
    %981 = vmatpush.bf16.msra.mxu0 0
    %982 = vmatpush.bf16.msra.mxu0 0
    %983 = vmatpush.bf16.msra.mxu0 0
    %984 = vmatpush.bf16.msra.mxu0 0
    %985 = vmatpush.bf16.msra.mxu0 %v976
    %986 = vmatpush.bf16.msra.mxu0 %v975
    %987 = vmatmul.bf16.gmra.mxu0 %v925
    %v988 = vpop.f32.mrf.mxu0
    %v989 = vadd.f32 %v965, %v988
    %v990 = vpop.f32.mrf.mxu0
    %v991 = vadd.f32 %v965, %v990
    %992 = vdwg.mxu0
    %v993 = vmul.f32 %v791, %v989
    %v994 = vmul.f32 %v796, %v991
    %v995 = vadd.f32 %v993, %v959
    %v996 = vadd.f32 %v994, %v962
    %v997 = vmax.f32 %v995, 0.0
    %v998 = vmax.f32 %v996, 0.0
    %v999 = vld [vmem:[%s65] sm:$0xf]
    %v1000 = vld [vmem:[%s65 + $0x4] sm:$0xf]
    %v1001 = vld [vmem:[%s65 + $0x8] sm:$0xf]
    %v1002 = vld [vmem:[%s65 + $0xc] sm:$0xf]
    %v1003 = vld [vmem:[%s65 + $0x10] sm:$0xf]
    %v1004 = vld [vmem:[%s65 + $0x14] sm:$0xf]
    %v1005 = vld [vmem:[%s65 + $0x18] sm:$0xf]
    %v1006 = vld [vmem:[%s65 + $0x1c] sm:$0xf]
    %v1007 = vld [vmem:[%s67] sm:$0xf]
    %v1008 = vld [vmem:[%s67 + $0x4] sm:$0xf]
    %v1009 = vld [vmem:[%s67 + $0x8] sm:$0xf]
    %v1010 = vld [vmem:[%s67 + $0xc] sm:$0xf]
    %v1015 = vunpack.c.l.b16 %v1007
    %v1016 = vunpack.c.l.b16 %v1008
    %v1017 = vunpack.c.l.b16 %v1009
    %v1018 = vunpack.c.l.b16 %v1010
    %v1019 = vpack.c.b16 %v1016, %v1015
    %v1020 = vpack.c.b16 %v1018, %v1017
    %1023 = vmatpush.bf16.msra.mxu0 0
    %1024 = vmatpush.bf16.msra.mxu0 0
    %1025 = vmatpush.bf16.msra.mxu0 0
    %1026 = vmatpush.bf16.msra.mxu0 0
    %1027 = vmatpush.bf16.msra.mxu0 0
    %1028 = vmatpush.bf16.msra.mxu0 0
    %1029 = vmatpush.bf16.msra.mxu0 %v1020
    %1030 = vmatpush.bf16.msra.mxu0 %v1019
    %1031 = vmatmul.bf16.gmra.mxu0 %v828
    %v1032 = vpop.f32.mrf.mxu0
    %v1033 = vadd.f32 0.0, %v1032
    %v1034 = vpop.f32.mrf.mxu0
    %v1035 = vadd.f32 0.0, %v1034
    %1036 = vdwg.mxu0
    %v1045 = vunpack.c.l.b16 %v999
    %v1046 = vunpack.c.l.b16 %v1000
    %v1047 = vunpack.c.l.b16 %v1001
    %v1048 = vunpack.c.l.b16 %v1002
    %v1049 = vunpack.c.l.b16 %v1003
    %v1050 = vunpack.c.l.b16 %v1004
    %v1051 = vunpack.c.l.b16 %v1005
    %v1052 = vunpack.c.l.b16 %v1006
    %v1053 = vpack.c.b16 %v1046, %v1045
    %v1054 = vpack.c.b16 %v1048, %v1047
    %v1055 = vpack.c.b16 %v1050, %v1049
    %v1056 = vpack.c.b16 %v1052, %v1051
    %1061 = vmatpush.bf16.msra.mxu0 0
    %1062 = vmatpush.bf16.msra.mxu0 0
    %1063 = vmatpush.bf16.msra.mxu0 0
    %1064 = vmatpush.bf16.msra.mxu0 0
    %1065 = vmatpush.bf16.msra.mxu0 %v1056
    %1066 = vmatpush.bf16.msra.mxu0 %v1055
    %1067 = vmatpush.bf16.msra.mxu0 %v1054
    %1068 = vmatpush.bf16.msra.mxu0 %v1053
    %1069 = vmatmul.bf16.gmra.mxu0 %v701
    %v1070 = vpop.f32.mrf.mxu0
    %v1071 = vadd.f32 %v1033, %v1070
    %v1072 = vpop.f32.mrf.mxu0
    %v1073 = vadd.f32 %v1035, %v1072
    %1074 = vdwg.mxu0
    %v1075 = vld [vmem:[%s69] sm:$0xf]
    %v1076 = vld [vmem:[%s69 + $0x4] sm:$0xf]
    %v1077 = vld [vmem:[%s69 + $0x8] sm:$0xf]
    %v1078 = vld [vmem:[%s69 + $0xc] sm:$0xf]
    %v1083 = vunpack.c.l.b16 %v1075
    %v1084 = vunpack.c.l.b16 %v1076
    %v1085 = vunpack.c.l.b16 %v1077
    %v1086 = vunpack.c.l.b16 %v1078
    %v1087 = vpack.c.b16 %v1084, %v1083
    %v1088 = vpack.c.b16 %v1086, %v1085
    %1091 = vmatpush.bf16.msra.mxu0 0
    %1092 = vmatpush.bf16.msra.mxu0 0
    %1093 = vmatpush.bf16.msra.mxu0 0
    %1094 = vmatpush.bf16.msra.mxu0 0
    %1095 = vmatpush.bf16.msra.mxu0 0
    %1096 = vmatpush.bf16.msra.mxu0 0
    %1097 = vmatpush.bf16.msra.mxu0 %v1088
    %1098 = vmatpush.bf16.msra.mxu0 %v1087
    %1099 = vmatmul.bf16.gmra.mxu0 %v925
    %v1100 = vpop.f32.mrf.mxu0
    %v1101 = vadd.f32 0.0, %v1100
    %v1102 = vpop.f32.mrf.mxu0
    %v1103 = vadd.f32 0.0, %v1102
    %1104 = vdwg.mxu0
    %v1105 = vadd.f32 %v1071, %v1101
    %v1106 = vadd.f32 %v1073, %v1103
    %v1107 = vld [vmem:[%s71] sm:$0xf]
    %v1108 = vld [vmem:[%s71 + $0x4] sm:$0xf]
    %v1109 = vld [vmem:[%s71 + $0x8] sm:$0xf]
    %v1110 = vld [vmem:[%s71 + $0xc] sm:$0xf]
    %v1111 = vpack.c.bf16 %v998, %v997
    %v1116 = vunpack.c.l.b16 %v1107
    %v1117 = vunpack.c.l.b16 %v1108
    %v1118 = vunpack.c.l.b16 %v1109
    %v1119 = vunpack.c.l.b16 %v1110
    %v1120 = vpack.c.b16 %v1117, %v1116
    %v1121 = vpack.c.b16 %v1119, %v1118
    %v1125 = vsel %vm826, %v1111, 0
    %1127 = vmatpush.bf16.msra.mxu0 0
    %1128 = vmatpush.bf16.msra.mxu0 0
    %1129 = vmatpush.bf16.msra.mxu0 0
    %1130 = vmatpush.bf16.msra.mxu0 0
    %1131 = vmatpush.bf16.msra.mxu0 0
    %1132 = vmatpush.bf16.msra.mxu0 0
    %1133 = vmatpush.bf16.msra.mxu0 %v1121
    %1134 = vmatpush.bf16.msra.mxu0 %v1120
    %1135 = vmatmul.bf16.gmra.mxu0 %v1125
    %v1136 = vpop.f32.mrf.mxu0
    %v1137 = vadd.f32 0.0, %v1136
    %v1138 = vpop.f32.mrf.mxu0
    %v1139 = vadd.f32 0.0, %v1138
    %1140 = vdwg.mxu0
    %v1141 = vadd.f32 %v1105, %v1137
    %v1142 = vadd.f32 %v1106, %v1139
    %v1143 = vld [vmem:[%s21] sm:$0x3]
    %v1144 = vld [vmem:[%s11] sm:$0x3]
    %v1145 = vld [vmem:[%s53] sm:$0xf]
    %v1146 = vld [vmem:[%s53 + $0x4] sm:$0xf]
    %v1147 = vpack.c.bf16 %v1144, %v1144
    %v1148 = vld [vmem:[#allocation10] sm:$0x1]
    %v1150 = vperm.slane %v1148, 0
    %v1154 = vunpack.c.l.b16 %v1145
    %v1155 = vunpack.c.l.b16 %v1146
    %v1156 = vpack.c.b16 %v1155, %v1154
    %v1159 = vsel %vm717, %v1147, 0
    %1161 = vmatpush.bf16.msra.mxu0 0
    %1162 = vmatpush.bf16.msra.mxu0 0
    %1163 = vmatpush.bf16.msra.mxu0 0
    %1164 = vmatpush.bf16.msra.mxu0 0
    %1165 = vmatpush.bf16.msra.mxu0 0
    %1166 = vmatpush.bf16.msra.mxu0 0
    %1167 = vmatpush.bf16.msra.mxu0 0
    %1168 = vmatpush.bf16.msra.mxu0 %v1156
    %1169 = vmatmul.bf16.gmra.mxu0 %v1159
    %v1170 = vpop.f32.mrf.mxu0
    %v1171 = vadd.f32 %v1150, %v1170
    %v1172 = vpop.f32.mrf.mxu0
    %1173 = vdwg.mxu0
    %v1174 = vmax.f32 %v1171, 0.0
    %v1175 = vld [vmem:[%s57] sm:$0xf]
    %v1176 = vpack.c.bf16 %v1174, %v1174
    %v1177 = vld [vmem:[#allocation12] sm:$0x1]
    %v1179 = vperm.slane %v1177, 0
    %vm1181 = vcmask 64512
    %v1183 = vsel %vm1181, %v1176, 0
    %vm1185 = vcmask 1043456
    %v1187 = vsel %vm1185, %v1175, 0
    %1189 = vmatpush.bf16.msra.mxu0 0
    %1190 = vmatpush.bf16.msra.mxu0 0
    %1191 = vmatpush.bf16.msra.mxu0 0
    %1192 = vmatpush.bf16.msra.mxu0 0
    %1193 = vmatpush.bf16.msra.mxu0 0
    %1194 = vmatpush.bf16.msra.mxu0 0
    %1195 = vmatpush.bf16.msra.mxu0 0
    %1196 = vmatpush.bf16.msra.mxu0 %v1187
    %1197 = vmatmul.bf16.gmra.mxu0 %v1183
    %v1198 = vpop.f32.mrf.mxu0
    %v1199 = vadd.f32 %v1179, %v1198
    %v1200 = vpop.f32.mrf.mxu0
    %1201 = vdwg.mxu0
    %v1202 = vld [vmem:[%s13] sm:$0x3]
    %v1203 = vld [vmem:[#allocation13] sm:$0x1]
    %v1204 = vunpack.c.l.bf16 %v1203
    %1206 = vset.pattern.permute.xlu0 0
    %1207 = vperm.xlu0 %1206, %v1202
    %v1208 = vpop.permute.xlu0 %1207
    %v1210 = vperm.slane %v1204, 0
    %v1211 = vmul.f32 %v1208, %v1210
    %v1212 = vld [vmem:[#allocation15] sm:$0x1]
    %v1214 = vperm.slane %v1212, 0
    %v1216 = vadd.f32 %v1211, %v1214
    %v1217 = vld [vmem:[%s73] sm:$0xf]
    %v1218 = vpack.c.bf16 %v1199, %v1199
    %v1220 = vsel %vm1181, %v1218, 0
    %v1223 = vsel %vm1185, %v1217, 0
    %1225 = vmatpush.bf16.msra.mxu0 0
    %1226 = vmatpush.bf16.msra.mxu0 0
    %1227 = vmatpush.bf16.msra.mxu0 0
    %1228 = vmatpush.bf16.msra.mxu0 0
    %1229 = vmatpush.bf16.msra.mxu0 0
    %1230 = vmatpush.bf16.msra.mxu0 0
    %1231 = vmatpush.bf16.msra.mxu0 0
    %1232 = vmatpush.bf16.msra.mxu0 %v1223
    %1233 = vmatmul.bf16.gmra.mxu0 %v1220
    %v1234 = vpop.f32.mrf.mxu0
    %v1235 = vadd.f32 0.0, %v1234
    %v1236 = vpop.f32.mrf.mxu0
    %1237 = vdwg.mxu0
    %v1239 = vsel %vm717, %v1143, 0
    %1241 = vmatpush.msra.mxu0 0.0
    %1242 = vmatpush.msra.mxu0 0.0
    %1243 = vmatpush.msra.mxu0 0.0
    %1244 = vmatpush.msra.mxu0 0.0
    %1245 = vmatpush.msra.mxu0 0.0
    %1246 = vmatpush.msra.mxu0 0.0
    %1247 = vmatpush.msra.mxu0 0.0
    %1248 = vmatpush.msra.mxu0 0.0
    %1249 = vmatpush.msra.mxu0 0.0
    %1250 = vmatpush.msra.mxu0 0.0
    %1251 = vmatpush.msra.mxu0 0.0
    %1252 = vmatpush.msra.mxu0 0.0
    %1253 = vmatpush.msra.mxu0 0.0
    %1254 = vmatpush.msra.mxu0 0.0
    %1255 = vmatpush.msra.mxu0 %v1142
    %1256 = vmatpush.msra.mxu0 %v1141
    %1257 = vmatmul.f32.gmra.mxu0 %v1239
    %v1258 = vpop.f32.mrf.mxu0
    %v1259 = vadd.f32 %v1235, %v1258
    %1260 = vdwg.mxu0
    %v1261 = vld [vmem:[%s75] sm:$0xf]
    %v1262 = vpack.c.bf16 %v1216, %v1216
    %v1264 = vsel %vm1181, %v1262, 0
    %v1267 = vsel %vm1185, %v1261, 0
    %1269 = vmatpush.bf16.msra.mxu0 0
    %1270 = vmatpush.bf16.msra.mxu0 0
    %1271 = vmatpush.bf16.msra.mxu0 0
    %1272 = vmatpush.bf16.msra.mxu0 0
    %1273 = vmatpush.bf16.msra.mxu0 0
    %1274 = vmatpush.bf16.msra.mxu0 0
    %1275 = vmatpush.bf16.msra.mxu0 0
    %1276 = vmatpush.bf16.msra.mxu0 %v1267
    %1277 = vmatmul.bf16.gmra.mxu0 %v1264
    %v1278 = vpop.f32.mrf.mxu0
    %v1279 = vadd.f32 0.0, %v1278
    %v1280 = vpop.f32.mrf.mxu0
    %1281 = vdwg.mxu0
    %v1282 = vadd.f32 %v1259, %v1279
    %v1283 = vld [vmem:[#allocation16] sm:$0x1]
    %v1285 = vperm.slane %v1283, 0
    %v1287 = vadd.f32 %v1282, %v1285
    %v1288 = vld [vmem:[%s79] sm:$0xf]
    %v1289 = vld [vmem:[%s79 + $0x4] sm:$0xf]
    %v1290 = vld [vmem:[%s79 + $0x8] sm:$0xf]
    %v1291 = vld [vmem:[%s79 + $0xc] sm:$0xf]
    %v1292 = vpack.c.bf16 %v1287, %v1287
    %v1293 = vld [vmem:[#allocation18] sm:$0x1]
    %v1295 = vperm.slane %v1293, 0
    %v1301 = vunpack.c.l.b16 %v1288
    %v1302 = vunpack.c.l.b16 %v1289
    %v1303 = vunpack.c.l.b16 %v1290
    %v1304 = vunpack.c.l.b16 %v1291
    %v1305 = vpack.c.b16 %v1302, %v1301
    %v1306 = vpack.c.b16 %v1304, %v1303
    %v1310 = vsel %vm826, %v1292, 0
    %1312 = vmatpush.bf16.msra.mxu0 0
    %1313 = vmatpush.bf16.msra.mxu0 0
    %1314 = vmatpush.bf16.msra.mxu0 0
    %1315 = vmatpush.bf16.msra.mxu0 0
    %1316 = vmatpush.bf16.msra.mxu0 0
    %1317 = vmatpush.bf16.msra.mxu0 0
    %1318 = vmatpush.bf16.msra.mxu0 %v1306
    %1319 = vmatpush.bf16.msra.mxu0 %v1305
    %1320 = vmatmul.bf16.gmra.mxu0 %v1310
    %v1321 = vpop.f32.mrf.mxu0
    %v1322 = vadd.f32 %v1295, %v1321
    %v1323 = vpop.f32.mrf.mxu0
    %1324 = vdwg.mxu0
    %v1325 = vld [vmem:[%s83] sm:$0xf]
    %v1326 = vld [vmem:[%s83 + $0x4] sm:$0xf]
    %v1327 = vld [vmem:[%s83 + $0x8] sm:$0xf]
    %v1328 = vld [vmem:[%s83 + $0xc] sm:$0xf]
    %v1329 = vld [vmem:[#allocation19] sm:$0x1]
    %v1331 = vperm.slane %v1329, 0
    %v1337 = vunpack.c.l.b16 %v1325
    %v1338 = vunpack.c.l.b16 %v1326
    %v1339 = vunpack.c.l.b16 %v1327
    %v1340 = vunpack.c.l.b16 %v1328
    %v1341 = vpack.c.b16 %v1338, %v1337
    %v1342 = vpack.c.b16 %v1340, %v1339
    %1345 = vmatpush.bf16.msra.mxu0 0
    %1346 = vmatpush.bf16.msra.mxu0 0
    %1347 = vmatpush.bf16.msra.mxu0 0
    %1348 = vmatpush.bf16.msra.mxu0 0
    %1349 = vmatpush.bf16.msra.mxu0 0
    %1350 = vmatpush.bf16.msra.mxu0 0
    %1351 = vmatpush.bf16.msra.mxu0 %v1342
    %1352 = vmatpush.bf16.msra.mxu0 %v1341
    %1353 = vmatmul.bf16.gmra.mxu0 %v1310
    %v1354 = vpop.f32.mrf.mxu0
    %v1355 = vadd.f32 %v1331, %v1354
    %v1356 = vpop.f32.mrf.mxu0
    %1357 = vdwg.mxu0
    %vm1358 = vcmask 254976
    %1359 = vst.msk [vmem:[#allocation30] sm:$0x3] %vm1358, %v1322
    %1360 = vst.msk [vmem:[#allocation31] sm:$0x3] %vm1358, %v1355
    %v1361 = vld [vmem:[%s15] sm:$0x3]
    %v1362 = vmul.f32 %v1355, 0.5
    %v1363 = vmul.f32 %v1362, 1.442695
    %v1364 = vpow.pop %v1363
    %v1365 = vmul.f32 %v1361, %v1364
    %v1366 = vadd.f32 %v1365, %v1322
    %v1367 = vld [vmem:[%s91] sm:$0xff]
    %v1368 = vld [vmem:[%s91 + $0x8] sm:$0xff]
    %v1369 = vld [vmem:[%s87] sm:$0xf]
    %v1370 = vld [vmem:[%s87 + $0x4] sm:$0xf]
    %v1371 = vld [vmem:[%s87 + $0x8] sm:$0xf]
    %v1372 = vld [vmem:[%s87 + $0xc] sm:$0xf]
    %v1373 = vpack.c.bf16 %v1366, %v1366
    %v1378 = vunpack.c.l.b16 %v1369
    %v1379 = vunpack.c.l.b16 %v1370
    %v1380 = vunpack.c.l.b16 %v1371
    %v1381 = vunpack.c.l.b16 %v1372
    %v1382 = vpack.c.b16 %v1379, %v1378
    %v1383 = vpack.c.b16 %v1381, %v1380
    %v1387 = vsel %vm826, %v1373, 0
    %1389 = vmatpush.bf16.msra.mxu0 0
    %1390 = vmatpush.bf16.msra.mxu0 0
    %1391 = vmatpush.bf16.msra.mxu0 0
    %1392 = vmatpush.bf16.msra.mxu0 0
    %1393 = vmatpush.bf16.msra.mxu0 0
    %1394 = vmatpush.bf16.msra.mxu0 0
    %1395 = vmatpush.bf16.msra.mxu0 %v1383
    %1396 = vmatpush.bf16.msra.mxu0 %v1382
    %1397 = vmatmul.bf16.gmra.mxu0 %v1387
    %v1398 = vpop.f32.mrf.mxu0
    %v1399 = vadd.f32 0.0, %v1398
    %v1400 = vpop.f32.mrf.mxu0
    %1401 = vdwg.mxu0
    %v1402 = vld [vmem:[%s89] sm:$0xff]
    %v1403 = vld [vmem:[%s89 + $0x8] sm:$0xff]
    %v1405 = vsel %vm570, %v1402, 0
    %v1408 = vsel %vm570, %v1403, 0
    %vm1410 = vcmask 1041408
    %v1412 = vsel %vm1410, %v1399, 0
    %1414 = vmatpush.msra.mxu0 0.0
    %1415 = vmatpush.msra.mxu0 0.0
    %1416 = vmatpush.msra.mxu0 0.0
    %1417 = vmatpush.msra.mxu0 0.0
    %1418 = vmatpush.msra.mxu0 0.0
    %1419 = vmatpush.msra.mxu0 0.0
    %1420 = vmatpush.msra.mxu0 0.0
    %1421 = vmatpush.msra.mxu0 0.0
    %1422 = vmatpush.msra.mxu0 0.0
    %1423 = vmatpush.msra.mxu0 0.0
    %1424 = vmatpush.msra.mxu0 0.0
    %1425 = vmatpush.msra.mxu0 0.0
    %1426 = vmatpush.msra.mxu0 0.0
    %1427 = vmatpush.msra.mxu0 0.0
    %1428 = vmatpush.msra.mxu0 0.0
    %1429 = vmatpush.msra.mxu0 %v1412
    %1430 = vmatmul.f32.gmra.mxu0 %v1405
    %v1431 = vpop.f32.mrf.mxu0
    %v1432 = vadd.f32 0.0, %v1431
    %1433 = vmatmul.f32.gmra.mxu0 %v1408
    %v1434 = vpop.f32.mrf.mxu0
    %v1435 = vadd.f32 0.0, %v1434
    %1436 = vdwg.mxu0
    %v1437 = vadd.f32 %v1367, %v1432
    %v1438 = vadd.f32 %v1368, %v1435
    %s1439 = scalar_lea.vmem %s87, 16
    %v1440 = vld [vmem:[%s1439] sm:$0xf]
    %v1441 = vld [vmem:[%s1439 + $0x4] sm:$0xf]
    %v1442 = vld [vmem:[%s1439 + $0x8] sm:$0xf]
    %v1443 = vld [vmem:[%s1439 + $0xc] sm:$0xf]
    %v1448 = vunpack.c.l.b16 %v1440
    %v1449 = vunpack.c.l.b16 %v1441
    %v1450 = vunpack.c.l.b16 %v1442
    %v1451 = vunpack.c.l.b16 %v1443
    %v1452 = vpack.c.b16 %v1449, %v1448
    %v1453 = vpack.c.b16 %v1451, %v1450
    %1456 = vmatpush.bf16.msra.mxu0 0
    %1457 = vmatpush.bf16.msra.mxu0 0
    %1458 = vmatpush.bf16.msra.mxu0 0
    %1459 = vmatpush.bf16.msra.mxu0 0
    %1460 = vmatpush.bf16.msra.mxu0 0
    %1461 = vmatpush.bf16.msra.mxu0 0
    %1462 = vmatpush.bf16.msra.mxu0 %v1453
    %1463 = vmatpush.bf16.msra.mxu0 %v1452
    %1464 = vmatmul.bf16.gmra.mxu0 %v1387
    %v1465 = vpop.f32.mrf.mxu0
    %v1466 = vadd.f32 0.0, %v1465
    %v1467 = vpop.f32.mrf.mxu0
    %1468 = vdwg.mxu0
    %s1469 = scalar_lea.vmem %s89, 16
    %v1470 = vld [vmem:[%s1469] sm:$0xff]
    %v1471 = vld [vmem:[%s1469 + $0x8] sm:$0xff]
    %v1473 = vsel %vm570, %v1470, 0
    %v1476 = vsel %vm570, %v1471, 0
    %v1479 = vsel %vm1410, %v1466, 0
    %1481 = vmatpush.msra.mxu0 0.0
    %1482 = vmatpush.msra.mxu0 0.0
    %1483 = vmatpush.msra.mxu0 0.0
    %1484 = vmatpush.msra.mxu0 0.0
    %1485 = vmatpush.msra.mxu0 0.0
    %1486 = vmatpush.msra.mxu0 0.0
    %1487 = vmatpush.msra.mxu0 0.0
    %1488 = vmatpush.msra.mxu0 0.0
    %1489 = vmatpush.msra.mxu0 0.0
    %1490 = vmatpush.msra.mxu0 0.0
    %1491 = vmatpush.msra.mxu0 0.0
    %1492 = vmatpush.msra.mxu0 0.0
    %1493 = vmatpush.msra.mxu0 0.0
    %1494 = vmatpush.msra.mxu0 0.0
    %1495 = vmatpush.msra.mxu0 0.0
    %1496 = vmatpush.msra.mxu0 %v1479
    %1497 = vmatmul.f32.gmra.mxu0 %v1473
    %v1498 = vpop.f32.mrf.mxu0
    %v1499 = vadd.f32 0.0, %v1498
    %1500 = vmatmul.f32.gmra.mxu0 %v1476
    %v1501 = vpop.f32.mrf.mxu0
    %v1502 = vadd.f32 0.0, %v1501
    %1503 = vdwg.mxu0
    %v1504 = vadd.f32 %v1437, %v1499
    %v1505 = vadd.f32 %v1438, %v1502
    %s1506 = scalar_lea.vmem %s87, 32
    %v1507 = vld [vmem:[%s1506] sm:$0xf]
    %v1508 = vld [vmem:[%s1506 + $0x4] sm:$0xf]
    %v1509 = vld [vmem:[%s1506 + $0x8] sm:$0xf]
    %v1510 = vld [vmem:[%s1506 + $0xc] sm:$0xf]
    %v1515 = vunpack.c.l.b16 %v1507
    %v1516 = vunpack.c.l.b16 %v1508
    %v1517 = vunpack.c.l.b16 %v1509
    %v1518 = vunpack.c.l.b16 %v1510
    %v1519 = vpack.c.b16 %v1516, %v1515
    %v1520 = vpack.c.b16 %v1518, %v1517
    %1523 = vmatpush.bf16.msra.mxu0 0
    %1524 = vmatpush.bf16.msra.mxu0 0
    %1525 = vmatpush.bf16.msra.mxu0 0
    %1526 = vmatpush.bf16.msra.mxu0 0
    %1527 = vmatpush.bf16.msra.mxu0 0
    %1528 = vmatpush.bf16.msra.mxu0 0
    %1529 = vmatpush.bf16.msra.mxu0 %v1520
    %1530 = vmatpush.bf16.msra.mxu0 %v1519
    %1531 = vmatmul.bf16.gmra.mxu0 %v1387
    %v1532 = vpop.f32.mrf.mxu0
    %v1533 = vadd.f32 0.0, %v1532
    %v1534 = vpop.f32.mrf.mxu0
    %1535 = vdwg.mxu0
    %s1536 = scalar_lea.vmem %s89, 32
    %v1537 = vld [vmem:[%s1536] sm:$0xff]
    %v1538 = vld [vmem:[%s1536 + $0x8] sm:$0xff]
    %v1540 = vsel %vm570, %v1537, 0
    %v1543 = vsel %vm570, %v1538, 0
    %v1546 = vsel %vm1410, %v1533, 0
    %1548 = vmatpush.msra.mxu0 0.0
    %1549 = vmatpush.msra.mxu0 0.0
    %1550 = vmatpush.msra.mxu0 0.0
    %1551 = vmatpush.msra.mxu0 0.0
    %1552 = vmatpush.msra.mxu0 0.0
    %1553 = vmatpush.msra.mxu0 0.0
    %1554 = vmatpush.msra.mxu0 0.0
    %1555 = vmatpush.msra.mxu0 0.0
    %1556 = vmatpush.msra.mxu0 0.0
    %1557 = vmatpush.msra.mxu0 0.0
    %1558 = vmatpush.msra.mxu0 0.0
    %1559 = vmatpush.msra.mxu0 0.0
    %1560 = vmatpush.msra.mxu0 0.0
    %1561 = vmatpush.msra.mxu0 0.0
    %1562 = vmatpush.msra.mxu0 0.0
    %1563 = vmatpush.msra.mxu0 %v1546
    %1564 = vmatmul.f32.gmra.mxu0 %v1540
    %v1565 = vpop.f32.mrf.mxu0
    %v1566 = vadd.f32 0.0, %v1565
    %1567 = vmatmul.f32.gmra.mxu0 %v1543
    %v1568 = vpop.f32.mrf.mxu0
    %v1569 = vadd.f32 0.0, %v1568
    %1570 = vdwg.mxu0
    %v1571 = vadd.f32 %v1504, %v1566
    %v1572 = vadd.f32 %v1505, %v1569
    %s1573 = scalar_lea.vmem %s87, 48
    %v1574 = vld [vmem:[%s1573] sm:$0xf]
    %v1575 = vld [vmem:[%s1573 + $0x4] sm:$0xf]
    %v1576 = vld [vmem:[%s1573 + $0x8] sm:$0xf]
    %v1577 = vld [vmem:[%s1573 + $0xc] sm:$0xf]
    %v1582 = vunpack.c.l.b16 %v1574
    %v1583 = vunpack.c.l.b16 %v1575
    %v1584 = vunpack.c.l.b16 %v1576
    %v1585 = vunpack.c.l.b16 %v1577
    %v1586 = vpack.c.b16 %v1583, %v1582
    %v1587 = vpack.c.b16 %v1585, %v1584
    %1590 = vmatpush.bf16.msra.mxu0 0
    %1591 = vmatpush.bf16.msra.mxu0 0
    %1592 = vmatpush.bf16.msra.mxu0 0
    %1593 = vmatpush.bf16.msra.mxu0 0
    %1594 = vmatpush.bf16.msra.mxu0 0
    %1595 = vmatpush.bf16.msra.mxu0 0
    %1596 = vmatpush.bf16.msra.mxu0 %v1587
    %1597 = vmatpush.bf16.msra.mxu0 %v1586
    %1598 = vmatmul.bf16.gmra.mxu0 %v1387
    %v1599 = vpop.f32.mrf.mxu0
    %v1600 = vadd.f32 0.0, %v1599
    %v1601 = vpop.f32.mrf.mxu0
    %1602 = vdwg.mxu0
    %s1603 = scalar_lea.vmem %s89, 48
    %v1604 = vld [vmem:[%s1603] sm:$0xff]
    %v1605 = vld [vmem:[%s1603 + $0x8] sm:$0xff]
    %v1607 = vsel %vm570, %v1604, 0
    %v1610 = vsel %vm570, %v1605, 0
    %v1613 = vsel %vm1410, %v1600, 0
    %1615 = vmatpush.msra.mxu0 0.0
    %1616 = vmatpush.msra.mxu0 0.0
    %1617 = vmatpush.msra.mxu0 0.0
    %1618 = vmatpush.msra.mxu0 0.0
    %1619 = vmatpush.msra.mxu0 0.0
    %1620 = vmatpush.msra.mxu0 0.0
    %1621 = vmatpush.msra.mxu0 0.0
    %1622 = vmatpush.msra.mxu0 0.0
    %1623 = vmatpush.msra.mxu0 0.0
    %1624 = vmatpush.msra.mxu0 0.0
    %1625 = vmatpush.msra.mxu0 0.0
    %1626 = vmatpush.msra.mxu0 0.0
    %1627 = vmatpush.msra.mxu0 0.0
    %1628 = vmatpush.msra.mxu0 0.0
    %1629 = vmatpush.msra.mxu0 0.0
    %1630 = vmatpush.msra.mxu0 %v1613
    %1631 = vmatmul.f32.gmra.mxu0 %v1607
    %v1632 = vpop.f32.mrf.mxu0
    %v1633 = vadd.f32 0.0, %v1632
    %1634 = vmatmul.f32.gmra.mxu0 %v1610
    %v1635 = vpop.f32.mrf.mxu0
    %v1636 = vadd.f32 0.0, %v1635
    %1637 = vdwg.mxu0
    %v1638 = vadd.f32 %v1571, %v1633
    %v1639 = vadd.f32 %v1572, %v1636
    %s1640 = scalar_lea.vmem %s87, 64
    %v1641 = vld [vmem:[%s1640] sm:$0xf]
    %v1642 = vld [vmem:[%s1640 + $0x4] sm:$0xf]
    %v1643 = vld [vmem:[%s1640 + $0x8] sm:$0xf]
    %v1644 = vld [vmem:[%s1640 + $0xc] sm:$0xf]
    %v1649 = vunpack.c.l.b16 %v1641
    %v1650 = vunpack.c.l.b16 %v1642
    %v1651 = vunpack.c.l.b16 %v1643
    %v1652 = vunpack.c.l.b16 %v1644
    %v1653 = vpack.c.b16 %v1650, %v1649
    %v1654 = vpack.c.b16 %v1652, %v1651
    %1657 = vmatpush.bf16.msra.mxu0 0
    %1658 = vmatpush.bf16.msra.mxu0 0
    %1659 = vmatpush.bf16.msra.mxu0 0
    %1660 = vmatpush.bf16.msra.mxu0 0
    %1661 = vmatpush.bf16.msra.mxu0 0
    %1662 = vmatpush.bf16.msra.mxu0 0
    %1663 = vmatpush.bf16.msra.mxu0 %v1654
    %1664 = vmatpush.bf16.msra.mxu0 %v1653
    %1665 = vmatmul.bf16.gmra.mxu0 %v1387
    %v1666 = vpop.f32.mrf.mxu0
    %v1667 = vadd.f32 0.0, %v1666
    %v1668 = vpop.f32.mrf.mxu0
    %1669 = vdwg.mxu0
    %s1670 = scalar_lea.vmem %s89, 64
    %v1671 = vld [vmem:[%s1670] sm:$0xff]
    %v1672 = vld [vmem:[%s1670 + $0x8] sm:$0xff]
    %v1674 = vsel %vm570, %v1671, 0
    %v1677 = vsel %vm570, %v1672, 0
    %v1680 = vsel %vm1410, %v1667, 0
    %1682 = vmatpush.msra.mxu0 0.0
    %1683 = vmatpush.msra.mxu0 0.0
    %1684 = vmatpush.msra.mxu0 0.0
    %1685 = vmatpush.msra.mxu0 0.0
    %1686 = vmatpush.msra.mxu0 0.0
    %1687 = vmatpush.msra.mxu0 0.0
    %1688 = vmatpush.msra.mxu0 0.0
    %1689 = vmatpush.msra.mxu0 0.0
    %1690 = vmatpush.msra.mxu0 0.0
    %1691 = vmatpush.msra.mxu0 0.0
    %1692 = vmatpush.msra.mxu0 0.0
    %1693 = vmatpush.msra.mxu0 0.0
    %1694 = vmatpush.msra.mxu0 0.0
    %1695 = vmatpush.msra.mxu0 0.0
    %1696 = vmatpush.msra.mxu0 0.0
    %1697 = vmatpush.msra.mxu0 %v1680
    %1698 = vmatmul.f32.gmra.mxu0 %v1674
    %v1699 = vpop.f32.mrf.mxu0
    %v1700 = vadd.f32 0.0, %v1699
    %1701 = vmatmul.f32.gmra.mxu0 %v1677
    %v1702 = vpop.f32.mrf.mxu0
    %v1703 = vadd.f32 0.0, %v1702
    %1704 = vdwg.mxu0
    %v1705 = vadd.f32 %v1638, %v1700
    %v1706 = vadd.f32 %v1639, %v1703
    %s1707 = scalar_lea.vmem %s87, 80
    %v1708 = vld [vmem:[%s1707] sm:$0xf]
    %v1709 = vld [vmem:[%s1707 + $0x4] sm:$0xf]
    %v1710 = vld [vmem:[%s1707 + $0x8] sm:$0xf]
    %v1711 = vld [vmem:[%s1707 + $0xc] sm:$0xf]
    %v1716 = vunpack.c.l.b16 %v1708
    %v1717 = vunpack.c.l.b16 %v1709
    %v1718 = vunpack.c.l.b16 %v1710
    %v1719 = vunpack.c.l.b16 %v1711
    %v1720 = vpack.c.b16 %v1717, %v1716
    %v1721 = vpack.c.b16 %v1719, %v1718
    %1724 = vmatpush.bf16.msra.mxu0 0
    %1725 = vmatpush.bf16.msra.mxu0 0
    %1726 = vmatpush.bf16.msra.mxu0 0
    %1727 = vmatpush.bf16.msra.mxu0 0
    %1728 = vmatpush.bf16.msra.mxu0 0
    %1729 = vmatpush.bf16.msra.mxu0 0
    %1730 = vmatpush.bf16.msra.mxu0 %v1721
    %1731 = vmatpush.bf16.msra.mxu0 %v1720
    %1732 = vmatmul.bf16.gmra.mxu0 %v1387
    %v1733 = vpop.f32.mrf.mxu0
    %v1734 = vadd.f32 0.0, %v1733
    %v1735 = vpop.f32.mrf.mxu0
    %1736 = vdwg.mxu0
    %s1737 = scalar_lea.vmem %s89, 80
    %v1738 = vld [vmem:[%s1737] sm:$0xff]
    %v1739 = vld [vmem:[%s1737 + $0x8] sm:$0xff]
    %v1741 = vsel %vm570, %v1738, 0
    %v1744 = vsel %vm570, %v1739, 0
    %v1747 = vsel %vm1410, %v1734, 0
    %1749 = vmatpush.msra.mxu0 0.0
    %1750 = vmatpush.msra.mxu0 0.0
    %1751 = vmatpush.msra.mxu0 0.0
    %1752 = vmatpush.msra.mxu0 0.0
    %1753 = vmatpush.msra.mxu0 0.0
    %1754 = vmatpush.msra.mxu0 0.0
    %1755 = vmatpush.msra.mxu0 0.0
    %1756 = vmatpush.msra.mxu0 0.0
    %1757 = vmatpush.msra.mxu0 0.0
    %1758 = vmatpush.msra.mxu0 0.0
    %1759 = vmatpush.msra.mxu0 0.0
    %1760 = vmatpush.msra.mxu0 0.0
    %1761 = vmatpush.msra.mxu0 0.0
    %1762 = vmatpush.msra.mxu0 0.0
    %1763 = vmatpush.msra.mxu0 0.0
    %1764 = vmatpush.msra.mxu0 %v1747
    %1765 = vmatmul.f32.gmra.mxu0 %v1741
    %v1766 = vpop.f32.mrf.mxu0
    %v1767 = vadd.f32 0.0, %v1766
    %1768 = vmatmul.f32.gmra.mxu0 %v1744
    %v1769 = vpop.f32.mrf.mxu0
    %v1770 = vadd.f32 0.0, %v1769
    %1771 = vdwg.mxu0
    %v1772 = vadd.f32 %v1705, %v1767
    %v1773 = vadd.f32 %v1706, %v1770
    %s1774 = scalar_lea.vmem %s87, 96
    %v1775 = vld [vmem:[%s1774] sm:$0xf]
    %v1776 = vld [vmem:[%s1774 + $0x4] sm:$0xf]
    %v1777 = vld [vmem:[%s1774 + $0x8] sm:$0xf]
    %v1778 = vld [vmem:[%s1774 + $0xc] sm:$0xf]
    %v1783 = vunpack.c.l.b16 %v1775
    %v1784 = vunpack.c.l.b16 %v1776
    %v1785 = vunpack.c.l.b16 %v1777
    %v1786 = vunpack.c.l.b16 %v1778
    %v1787 = vpack.c.b16 %v1784, %v1783
    %v1788 = vpack.c.b16 %v1786, %v1785
    %1791 = vmatpush.bf16.msra.mxu0 0
    %1792 = vmatpush.bf16.msra.mxu0 0
    %1793 = vmatpush.bf16.msra.mxu0 0
    %1794 = vmatpush.bf16.msra.mxu0 0
    %1795 = vmatpush.bf16.msra.mxu0 0
    %1796 = vmatpush.bf16.msra.mxu0 0
    %1797 = vmatpush.bf16.msra.mxu0 %v1788
    %1798 = vmatpush.bf16.msra.mxu0 %v1787
    %1799 = vmatmul.bf16.gmra.mxu0 %v1387
    %v1800 = vpop.f32.mrf.mxu0
    %v1801 = vadd.f32 0.0, %v1800
    %v1802 = vpop.f32.mrf.mxu0
    %1803 = vdwg.mxu0
    %s1804 = scalar_lea.vmem %s89, 96
    %v1805 = vld [vmem:[%s1804] sm:$0xff]
    %v1806 = vld [vmem:[%s1804 + $0x8] sm:$0xff]
    %v1808 = vsel %vm570, %v1805, 0
    %v1811 = vsel %vm570, %v1806, 0
    %v1814 = vsel %vm1410, %v1801, 0
    %1816 = vmatpush.msra.mxu0 0.0
    %1817 = vmatpush.msra.mxu0 0.0
    %1818 = vmatpush.msra.mxu0 0.0
    %1819 = vmatpush.msra.mxu0 0.0
    %1820 = vmatpush.msra.mxu0 0.0
    %1821 = vmatpush.msra.mxu0 0.0
    %1822 = vmatpush.msra.mxu0 0.0
    %1823 = vmatpush.msra.mxu0 0.0
    %1824 = vmatpush.msra.mxu0 0.0
    %1825 = vmatpush.msra.mxu0 0.0
    %1826 = vmatpush.msra.mxu0 0.0
    %1827 = vmatpush.msra.mxu0 0.0
    %1828 = vmatpush.msra.mxu0 0.0
    %1829 = vmatpush.msra.mxu0 0.0
    %1830 = vmatpush.msra.mxu0 0.0
    %1831 = vmatpush.msra.mxu0 %v1814
    %1832 = vmatmul.f32.gmra.mxu0 %v1808
    %v1833 = vpop.f32.mrf.mxu0
    %v1834 = vadd.f32 0.0, %v1833
    %1835 = vmatmul.f32.gmra.mxu0 %v1811
    %v1836 = vpop.f32.mrf.mxu0
    %v1837 = vadd.f32 0.0, %v1836
    %1838 = vdwg.mxu0
    %v1839 = vadd.f32 %v1772, %v1834
    %v1840 = vadd.f32 %v1773, %v1837
    %s1841 = scalar_lea.vmem %s87, 112
    %v1842 = vld [vmem:[%s1841] sm:$0xf]
    %v1843 = vld [vmem:[%s1841 + $0x4] sm:$0xf]
    %v1844 = vld [vmem:[%s1841 + $0x8] sm:$0xf]
    %v1845 = vld [vmem:[%s1841 + $0xc] sm:$0xf]
    %v1850 = vunpack.c.l.b16 %v1842
    %v1851 = vunpack.c.l.b16 %v1843
    %v1852 = vunpack.c.l.b16 %v1844
    %v1853 = vunpack.c.l.b16 %v1845
    %v1854 = vpack.c.b16 %v1851, %v1850
    %v1855 = vpack.c.b16 %v1853, %v1852
    %1858 = vmatpush.bf16.msra.mxu0 0
    %1859 = vmatpush.bf16.msra.mxu0 0
    %1860 = vmatpush.bf16.msra.mxu0 0
    %1861 = vmatpush.bf16.msra.mxu0 0
    %1862 = vmatpush.bf16.msra.mxu0 0
    %1863 = vmatpush.bf16.msra.mxu0 0
    %1864 = vmatpush.bf16.msra.mxu0 %v1855
    %1865 = vmatpush.bf16.msra.mxu0 %v1854
    %1866 = vmatmul.bf16.gmra.mxu0 %v1387
    %v1867 = vpop.f32.mrf.mxu0
    %v1868 = vadd.f32 0.0, %v1867
    %v1869 = vpop.f32.mrf.mxu0
    %1870 = vdwg.mxu0
    %s1871 = scalar_lea.vmem %s89, 112
    %v1872 = vld [vmem:[%s1871] sm:$0xff]
    %v1873 = vld [vmem:[%s1871 + $0x8] sm:$0xff]
    %v1875 = vsel %vm570, %v1872, 0
    %v1878 = vsel %vm570, %v1873, 0
    %v1881 = vsel %vm1410, %v1868, 0
    %1883 = vmatpush.msra.mxu0 0.0
    %1884 = vmatpush.msra.mxu0 0.0
    %1885 = vmatpush.msra.mxu0 0.0
    %1886 = vmatpush.msra.mxu0 0.0
    %1887 = vmatpush.msra.mxu0 0.0
    %1888 = vmatpush.msra.mxu0 0.0
    %1889 = vmatpush.msra.mxu0 0.0
    %1890 = vmatpush.msra.mxu0 0.0
    %1891 = vmatpush.msra.mxu0 0.0
    %1892 = vmatpush.msra.mxu0 0.0
    %1893 = vmatpush.msra.mxu0 0.0
    %1894 = vmatpush.msra.mxu0 0.0
    %1895 = vmatpush.msra.mxu0 0.0
    %1896 = vmatpush.msra.mxu0 0.0
    %1897 = vmatpush.msra.mxu0 0.0
    %1898 = vmatpush.msra.mxu0 %v1881
    %1899 = vmatmul.f32.gmra.mxu0 %v1875
    %v1900 = vpop.f32.mrf.mxu0
    %v1901 = vadd.f32 0.0, %v1900
    %1902 = vmatmul.f32.gmra.mxu0 %v1878
    %v1903 = vpop.f32.mrf.mxu0
    %v1904 = vadd.f32 0.0, %v1903
    %1905 = vdwg.mxu0
    %v1906 = vadd.f32 %v1839, %v1901
    %v1907 = vadd.f32 %v1840, %v1904
    %v1908 = vmax.f32 %v1906, 0.0
    %v1909 = vmax.f32 %v1907, 0.0
    %v1910 = vld [vmem:[%s93] sm:$0xf]
    %v1911 = vld [vmem:[%s93 + $0x4] sm:$0xf]
    %v1912 = vld [vmem:[%s93 + $0x8] sm:$0xf]
    %v1913 = vld [vmem:[%s93 + $0xc] sm:$0xf]
    %v1914 = vpack.c.bf16 %v1909, %v1908
    %v1915 = vld [vmem:[%s97] sm:$0xff]
    %v1916 = vld [vmem:[%s97 + $0x8] sm:$0xff]
    %v1921 = vunpack.c.l.b16 %v1910
    %v1922 = vunpack.c.l.b16 %v1911
    %v1923 = vunpack.c.l.b16 %v1912
    %v1924 = vunpack.c.l.b16 %v1913
    %v1925 = vpack.c.b16 %v1922, %v1921
    %v1926 = vpack.c.b16 %v1924, %v1923
    %v1930 = vsel %vm826, %v1914, 0
    %1932 = vmatpush.bf16.msra.mxu0 0
    %1933 = vmatpush.bf16.msra.mxu0 0
    %1934 = vmatpush.bf16.msra.mxu0 0
    %1935 = vmatpush.bf16.msra.mxu0 0
    %1936 = vmatpush.bf16.msra.mxu0 0
    %1937 = vmatpush.bf16.msra.mxu0 0
    %1938 = vmatpush.bf16.msra.mxu0 %v1926
    %1939 = vmatpush.bf16.msra.mxu0 %v1925
    %1940 = vmatmul.bf16.gmra.mxu0 %v1930
    %v1941 = vpop.f32.mrf.mxu0
    %v1942 = vadd.f32 %v1915, %v1941
    %v1943 = vpop.f32.mrf.mxu0
    %v1944 = vadd.f32 %v1916, %v1943
    %1945 = vdwg.mxu0
    %v1946 = vld [vmem:[%s95] sm:$0xf]
    %v1947 = vld [vmem:[%s95 + $0x4] sm:$0xf]
    %v1948 = vld [vmem:[%s95 + $0x8] sm:$0xf]
    %v1949 = vld [vmem:[%s95 + $0xc] sm:$0xf]
    %v1950 = vld [vmem:[%s99] sm:$0xff]
    %v1951 = vld [vmem:[%s99 + $0x8] sm:$0xff]
    %v1956 = vunpack.c.l.b16 %v1946
    %v1957 = vunpack.c.l.b16 %v1947
    %v1958 = vunpack.c.l.b16 %v1948
    %v1959 = vunpack.c.l.b16 %v1949
    %v1960 = vpack.c.b16 %v1957, %v1956
    %v1961 = vpack.c.b16 %v1959, %v1958
    %1964 = vmatpush.bf16.msra.mxu0 0
    %1965 = vmatpush.bf16.msra.mxu0 0
    %1966 = vmatpush.bf16.msra.mxu0 0
    %1967 = vmatpush.bf16.msra.mxu0 0
    %1968 = vmatpush.bf16.msra.mxu0 0
    %1969 = vmatpush.bf16.msra.mxu0 0
    %1970 = vmatpush.bf16.msra.mxu0 %v1961
    %1971 = vmatpush.bf16.msra.mxu0 %v1960
    %1972 = vmatmul.bf16.gmra.mxu0 %v1930
    %v1973 = vpop.f32.mrf.mxu0
    %v1974 = vadd.f32 %v1950, %v1973
    %v1975 = vpop.f32.mrf.mxu0
    %v1976 = vadd.f32 %v1951, %v1975
    %1977 = vdwg.mxu0
    %v1978 = vld [vmem:[#allocation21] sm:$0x1]
    %v1980 = vperm.slane %v1978, 0
    %v1982 = vadd.f32 %v1942, %v1980
    %v1983 = vadd.f32 %v1944, %v1980
    %v1984 = vmul.f32 %v791, %v1982
    %v1985 = vmul.f32 %v796, %v1983
    %1986 = vmatpush.msra.mxu0 0.0
    %1987 = vmatpush.msra.mxu0 0.0
    %1988 = vmatpush.msra.mxu0 0.0
    %1989 = vmatpush.msra.mxu0 0.0
    %1990 = vmatpush.msra.mxu0 0.0
    %1991 = vmatpush.msra.mxu0 0.0
    %1992 = vmatpush.msra.mxu0 0.0
    %1993 = vmatpush.msra.mxu0 0.0
    %1994 = vmatpush.msra.mxu0 0.0
    %1995 = vmatpush.msra.mxu0 0.0
    %1996 = vmatpush.msra.mxu0 0.0
    %1997 = vmatpush.msra.mxu0 0.0
    %1998 = vmatpush.msra.mxu0 0.0
    %1999 = vmatpush.msra.mxu0 0.0
    %2000 = vmatpush.msra.mxu0 %v1976
    %2001 = vmatpush.msra.mxu0 %v1974
    %2002 = vmatmul.f32.gmra.mxu0 %v719
    %v2003 = vpop.f32.mrf.mxu0
    %v2004 = vadd.f32 0.0, %v2003
    %2005 = vmatmul.f32.gmra.mxu0 %v722
    %v2006 = vpop.f32.mrf.mxu0
    %v2007 = vadd.f32 0.0, %v2006
    %2008 = vdwg.mxu0
    %v2009 = vadd.f32 %v1984, %v2004
    %v2010 = vadd.f32 %v1985, %v2007
    %v2011 = vmax.f32 %v2009, 0.0
    %v2012 = vmax.f32 %v2010, 0.0
    %v2013 = vld [vmem:[%s103] sm:$0xf]
    %v2014 = vld [vmem:[%s103 + $0x4] sm:$0xf]
    %v2015 = vld [vmem:[%s103 + $0x8] sm:$0xf]
    %v2016 = vld [vmem:[%s103 + $0xc] sm:$0xf]
    %v2017 = vld [vmem:[%s105] sm:$0xf]
    %v2018 = vld [vmem:[%s105 + $0x4] sm:$0xf]
    %v2019 = vld [vmem:[%s105 + $0x8] sm:$0xf]
    %v2020 = vld [vmem:[%s105 + $0xc] sm:$0xf]
    %v2021 = vld [vmem:[#allocation22] sm:$0x1]
    %v2022 = vpack.c.bf16 %v2012, %v2011
    %v2027 = vunpack.c.l.b16 %v2017
    %v2028 = vunpack.c.l.b16 %v2018
    %v2029 = vunpack.c.l.b16 %v2019
    %v2030 = vunpack.c.l.b16 %v2020
    %v2031 = vpack.c.b16 %v2028, %v2027
    %v2032 = vpack.c.b16 %v2030, %v2029
    %v2036 = vsel %vm826, %v2022, 0
    %2038 = vmatpush.bf16.msra.mxu0 0
    %2039 = vmatpush.bf16.msra.mxu0 0
    %2040 = vmatpush.bf16.msra.mxu0 0
    %2041 = vmatpush.bf16.msra.mxu0 0
    %2042 = vmatpush.bf16.msra.mxu0 0
    %2043 = vmatpush.bf16.msra.mxu0 0
    %2044 = vmatpush.bf16.msra.mxu0 %v2032
    %2045 = vmatpush.bf16.msra.mxu0 %v2031
    %2046 = vmatmul.bf16.gmra.mxu0 %v2036
    %v2047 = vpop.f32.mrf.mxu0
    %v2048 = vadd.f32 0.0, %v2047
    %v2049 = vpop.f32.mrf.mxu0
    %v2050 = vadd.f32 0.0, %v2049
    %2051 = vdwg.mxu0
    %2052 = vmatpush.msra.mxu0 0.0
    %2053 = vmatpush.msra.mxu0 0.0
    %2054 = vmatpush.msra.mxu0 0.0
    %2055 = vmatpush.msra.mxu0 0.0
    %2056 = vmatpush.msra.mxu0 0.0
    %2057 = vmatpush.msra.mxu0 0.0
    %2058 = vmatpush.msra.mxu0 0.0
    %2059 = vmatpush.msra.mxu0 0.0
    %2060 = vmatpush.msra.mxu0 0.0
    %2061 = vmatpush.msra.mxu0 0.0
    %2062 = vmatpush.msra.mxu0 0.0
    %2063 = vmatpush.msra.mxu0 0.0
    %2064 = vmatpush.msra.mxu0 0.0
    %2065 = vmatpush.msra.mxu0 0.0
    %2066 = vmatpush.msra.mxu0 %v2050
    %2067 = vmatpush.msra.mxu0 %v2048
    %2068 = vmatmul.f32.gmra.mxu0 %v719
    %v2069 = vpop.f32.mrf.mxu0
    %v2070 = vadd.f32 0.0, %v2069
    %2071 = vmatmul.f32.gmra.mxu0 %v722
    %v2072 = vpop.f32.mrf.mxu0
    %v2073 = vadd.f32 0.0, %v2072
    %2074 = vdwg.mxu0
    %v2076 = vperm.slane %v2021, 0
    %v2082 = vunpack.c.l.b16 %v2013
    %v2083 = vunpack.c.l.b16 %v2014
    %v2084 = vunpack.c.l.b16 %v2015
    %v2085 = vunpack.c.l.b16 %v2016
    %v2086 = vpack.c.b16 %v2083, %v2082
    %v2087 = vpack.c.b16 %v2085, %v2084
    %2090 = vmatpush.bf16.msra.mxu0 0
    %2091 = vmatpush.bf16.msra.mxu0 0
    %2092 = vmatpush.bf16.msra.mxu0 0
    %2093 = vmatpush.bf16.msra.mxu0 0
    %2094 = vmatpush.bf16.msra.mxu0 0
    %2095 = vmatpush.bf16.msra.mxu0 0
    %2096 = vmatpush.bf16.msra.mxu0 %v2087
    %2097 = vmatpush.bf16.msra.mxu0 %v2086
    %2098 = vmatmul.bf16.gmra.mxu0 %v2036
    %v2099 = vpop.f32.mrf.mxu0
    %v2100 = vadd.f32 %v2076, %v2099
    %v2101 = vpop.f32.mrf.mxu0
    %v2102 = vadd.f32 %v2076, %v2101
    %2103 = vdwg.mxu0
    %v2104 = vmul.f32 %v791, %v2100
    %v2105 = vmul.f32 %v796, %v2102
    %v2106 = vadd.f32 %v2104, %v2070
    %v2107 = vadd.f32 %v2105, %v2073
    %v2108 = vmax.f32 %v2106, 0.0
    %v2109 = vmax.f32 %v2107, 0.0
    %v2110 = vld [vmem:[%s109] sm:$0xf]
    %v2111 = vld [vmem:[%s109 + $0x4] sm:$0xf]
    %v2112 = vld [vmem:[%s109 + $0x8] sm:$0xf]
    %v2113 = vld [vmem:[%s109 + $0xc] sm:$0xf]
    %v2114 = vld [vmem:[%s111] sm:$0xf]
    %v2115 = vld [vmem:[%s111 + $0x4] sm:$0xf]
    %v2116 = vld [vmem:[%s111 + $0x8] sm:$0xf]
    %v2117 = vld [vmem:[%s111 + $0xc] sm:$0xf]
    %v2118 = vld [vmem:[#allocation24] sm:$0x1]
    %v2119 = vpack.c.bf16 %v2109, %v2108
    %v2124 = vunpack.c.l.b16 %v2114
    %v2125 = vunpack.c.l.b16 %v2115
    %v2126 = vunpack.c.l.b16 %v2116
    %v2127 = vunpack.c.l.b16 %v2117
    %v2128 = vpack.c.b16 %v2125, %v2124
    %v2129 = vpack.c.b16 %v2127, %v2126
    %v2133 = vsel %vm826, %v2119, 0
    %2135 = vmatpush.bf16.msra.mxu0 0
    %2136 = vmatpush.bf16.msra.mxu0 0
    %2137 = vmatpush.bf16.msra.mxu0 0
    %2138 = vmatpush.bf16.msra.mxu0 0
    %2139 = vmatpush.bf16.msra.mxu0 0
    %2140 = vmatpush.bf16.msra.mxu0 0
    %2141 = vmatpush.bf16.msra.mxu0 %v2129
    %2142 = vmatpush.bf16.msra.mxu0 %v2128
    %2143 = vmatmul.bf16.gmra.mxu0 %v2133
    %v2144 = vpop.f32.mrf.mxu0
    %v2145 = vadd.f32 0.0, %v2144
    %v2146 = vpop.f32.mrf.mxu0
    %v2147 = vadd.f32 0.0, %v2146
    %2148 = vdwg.mxu0
    %2149 = vmatpush.msra.mxu0 0.0
    %2150 = vmatpush.msra.mxu0 0.0
    %2151 = vmatpush.msra.mxu0 0.0
    %2152 = vmatpush.msra.mxu0 0.0
    %2153 = vmatpush.msra.mxu0 0.0
    %2154 = vmatpush.msra.mxu0 0.0
    %2155 = vmatpush.msra.mxu0 0.0
    %2156 = vmatpush.msra.mxu0 0.0
    %2157 = vmatpush.msra.mxu0 0.0
    %2158 = vmatpush.msra.mxu0 0.0
    %2159 = vmatpush.msra.mxu0 0.0
    %2160 = vmatpush.msra.mxu0 0.0
    %2161 = vmatpush.msra.mxu0 0.0
    %2162 = vmatpush.msra.mxu0 0.0
    %2163 = vmatpush.msra.mxu0 %v2147
    %2164 = vmatpush.msra.mxu0 %v2145
    %2165 = vmatmul.f32.gmra.mxu0 %v719
    %v2166 = vpop.f32.mrf.mxu0
    %v2167 = vadd.f32 0.0, %v2166
    %2168 = vmatmul.f32.gmra.mxu0 %v722
    %v2169 = vpop.f32.mrf.mxu0
    %v2170 = vadd.f32 0.0, %v2169
    %2171 = vdwg.mxu0
    %v2173 = vperm.slane %v2118, 0
    %v2179 = vunpack.c.l.b16 %v2110
    %v2180 = vunpack.c.l.b16 %v2111
    %v2181 = vunpack.c.l.b16 %v2112
    %v2182 = vunpack.c.l.b16 %v2113
    %v2183 = vpack.c.b16 %v2180, %v2179
    %v2184 = vpack.c.b16 %v2182, %v2181
    %2187 = vmatpush.bf16.msra.mxu0 0
    %2188 = vmatpush.bf16.msra.mxu0 0
    %2189 = vmatpush.bf16.msra.mxu0 0
    %2190 = vmatpush.bf16.msra.mxu0 0
    %2191 = vmatpush.bf16.msra.mxu0 0
    %2192 = vmatpush.bf16.msra.mxu0 0
    %2193 = vmatpush.bf16.msra.mxu0 %v2184
    %2194 = vmatpush.bf16.msra.mxu0 %v2183
    %2195 = vmatmul.bf16.gmra.mxu0 %v2133
    %v2196 = vpop.f32.mrf.mxu0
    %v2197 = vadd.f32 %v2173, %v2196
    %v2198 = vpop.f32.mrf.mxu0
    %v2199 = vadd.f32 %v2173, %v2198
    %2200 = vdwg.mxu0
    %v2201 = vmul.f32 %v791, %v2197
    %v2202 = vmul.f32 %v796, %v2199
    %v2203 = vadd.f32 %v2201, %v2167
    %v2204 = vadd.f32 %v2202, %v2170
    %v2205 = vmax.f32 %v2203, 0.0
    %v2206 = vmax.f32 %v2204, 0.0
    %v2207 = vld [vmem:[%s115] sm:$0xff]
    %v2208 = vld [vmem:[%s115 + $0x8] sm:$0xff]
    %v2209 = vld [vmem:[%s115 + $0x10] sm:$0xff]
    %v2210 = vld [vmem:[%s115 + $0x18] sm:$0xff]
    %v2211 = vpack.c.bf16 %v2206, %v2205
    %v2212 = vld [vmem:[%s117] sm:$0x3]
    %v2214 = vperm.slane %v2212, 0
    %v2215 = vperm.slane %v2212, 1
    %v2222 = vunpack.c.l.b16 %v2207
    %v2223 = vunpack.c.h.b16 %v2207
    %v2224 = vunpack.c.l.b16 %v2208
    %v2225 = vunpack.c.h.b16 %v2208
    %v2226 = vunpack.c.l.b16 %v2209
    %v2227 = vunpack.c.h.b16 %v2209
    %v2228 = vunpack.c.l.b16 %v2210
    %v2229 = vunpack.c.h.b16 %v2210
    %v2230 = vpack.c.b16 %v2224, %v2222
    %v2231 = vpack.c.b16 %v2225, %v2223
    %v2232 = vpack.c.b16 %v2228, %v2226
    %v2233 = vpack.c.b16 %v2229, %v2227
    %v2239 = vsel %vm826, %v2211, 0
    %2241 = vmatpush.bf16.msra.mxu0 0
    %2242 = vmatpush.bf16.msra.mxu0 0
    %2243 = vmatpush.bf16.msra.mxu0 0
    %2244 = vmatpush.bf16.msra.mxu0 0
    %2245 = vmatpush.bf16.msra.mxu0 0
    %2246 = vmatpush.bf16.msra.mxu0 0
    %2247 = vmatpush.bf16.msra.mxu0 %v2232
    %2248 = vmatpush.bf16.msra.mxu0 %v2230
    %2249 = vmatmul.bf16.gmra.mxu0 %v2239
    %v2250 = vpop.f32.mrf.mxu0
    %v2251 = vadd.f32 %v2214, %v2250
    %v2252 = vpop.f32.mrf.mxu0
    %v2253 = vadd.f32 %v2214, %v2252
    %2254 = vdwg.mxu0
    %2255 = vmatpush.bf16.msra.mxu0 0
    %2256 = vmatpush.bf16.msra.mxu0 0
    %2257 = vmatpush.bf16.msra.mxu0 0
    %2258 = vmatpush.bf16.msra.mxu0 0
    %2259 = vmatpush.bf16.msra.mxu0 0
    %2260 = vmatpush.bf16.msra.mxu0 0
    %2261 = vmatpush.bf16.msra.mxu0 %v2233
    %2262 = vmatpush.bf16.msra.mxu0 %v2231
    %2263 = vmatmul.bf16.gmra.mxu0 %v2239
    %v2264 = vpop.f32.mrf.mxu0
    %v2265 = vadd.f32 %v2215, %v2264
    %v2266 = vpop.f32.mrf.mxu0
    %v2267 = vadd.f32 %v2215, %v2266
    %2268 = vdwg.mxu0
    %v2269 = vmax.f32 %v2251, 0.0
    %v2270 = vmax.f32 %v2265, 0.0
    %v2271 = vmax.f32 %v2253, 0.0
    %v2272 = vmax.f32 %v2267, 0.0
    %v2273 = vpack.c.bf16 %v2271, %v2269
    %v2274 = vpack.c.bf16 %v2272, %v2270
    %v2275 = vld [vmem:[%s119] sm:$0xf]
    %v2276 = vld [vmem:[%s119 + $0x4] sm:$0xf]
    %v2277 = vld [vmem:[%s119 + $0x8] sm:$0xf]
    %v2278 = vld [vmem:[%s119 + $0xc] sm:$0xf]
    %v2279 = vld [vmem:[%s119 + $0x10] sm:$0xf]
    %v2280 = vld [vmem:[%s119 + $0x14] sm:$0xf]
    %v2281 = vld [vmem:[%s119 + $0x18] sm:$0xf]
    %v2282 = vld [vmem:[%s119 + $0x1c] sm:$0xf]
    %v2283 = vld [vmem:[%s119 + $0x20] sm:$0xf]
    %v2284 = vld [vmem:[%s119 + $0x24] sm:$0xf]
    %v2285 = vld [vmem:[%s119 + $0x28] sm:$0xf]
    %v2286 = vld [vmem:[%s119 + $0x2c] sm:$0xf]
    %v2287 = vld [vmem:[%s119 + $0x30] sm:$0xf]
    %v2288 = vld [vmem:[%s119 + $0x34] sm:$0xf]
    %v2289 = vld [vmem:[%s119 + $0x38] sm:$0xf]
    %v2290 = vld [vmem:[%s119 + $0x3c] sm:$0xf]
    %v2291 = vld [vmem:[%s119 + $0x40] sm:$0xf]
    %v2292 = vld [vmem:[%s119 + $0x44] sm:$0xf]
    %v2293 = vld [vmem:[%s119 + $0x48] sm:$0xf]
    %v2294 = vld [vmem:[%s119 + $0x4c] sm:$0xf]
    %v2295 = vld [vmem:[%s119 + $0x50] sm:$0xf]
    %v2296 = vld [vmem:[%s119 + $0x54] sm:$0xf]
    %v2297 = vld [vmem:[%s119 + $0x58] sm:$0xf]
    %v2298 = vld [vmem:[%s119 + $0x5c] sm:$0xf]
    %v2299 = vld [vmem:[%s119 + $0x60] sm:$0xf]
    %v2300 = vld [vmem:[%s119 + $0x64] sm:$0xf]
    %v2301 = vld [vmem:[%s119 + $0x68] sm:$0xf]
    %v2302 = vld [vmem:[%s119 + $0x6c] sm:$0xf]
    %v2303 = vld [vmem:[#allocation2] sm:$0x1]
    %v2305 = vperm.slane %v2303, 0
    %v2335 = vunpack.c.l.b16 %v2275
    %v2336 = vunpack.c.l.b16 %v2276
    %v2337 = vunpack.c.l.b16 %v2277
    %v2338 = vunpack.c.l.b16 %v2278
    %v2339 = vunpack.c.l.b16 %v2279
    %v2340 = vunpack.c.l.b16 %v2280
    %v2341 = vunpack.c.l.b16 %v2281
    %v2342 = vunpack.c.l.b16 %v2282
    %v2343 = vunpack.c.l.b16 %v2283
    %v2344 = vunpack.c.l.b16 %v2284
    %v2345 = vunpack.c.l.b16 %v2285
    %v2346 = vunpack.c.l.b16 %v2286
    %v2347 = vunpack.c.l.b16 %v2287
    %v2348 = vunpack.c.l.b16 %v2288
    %v2349 = vunpack.c.l.b16 %v2289
    %v2350 = vunpack.c.l.b16 %v2290
    %v2351 = vunpack.c.l.b16 %v2291
    %v2352 = vunpack.c.l.b16 %v2292
    %v2353 = vunpack.c.l.b16 %v2293
    %v2354 = vunpack.c.l.b16 %v2294
    %v2355 = vunpack.c.l.b16 %v2295
    %v2356 = vunpack.c.l.b16 %v2296
    %v2357 = vunpack.c.l.b16 %v2297
    %v2358 = vunpack.c.l.b16 %v2298
    %v2359 = vunpack.c.l.b16 %v2299
    %v2360 = vunpack.c.l.b16 %v2300
    %v2361 = vunpack.c.l.b16 %v2301
    %v2362 = vunpack.c.l.b16 %v2302
    %v2363 = vpack.c.b16 %v2336, %v2335
    %v2364 = vpack.c.b16 %v2338, %v2337
    %v2365 = vpack.c.b16 %v2340, %v2339
    %v2366 = vpack.c.b16 %v2342, %v2341
    %v2367 = vpack.c.b16 %v2344, %v2343
    %v2368 = vpack.c.b16 %v2346, %v2345
    %v2369 = vpack.c.b16 %v2348, %v2347
    %v2370 = vpack.c.b16 %v2350, %v2349
    %v2371 = vpack.c.b16 %v2352, %v2351
    %v2372 = vpack.c.b16 %v2354, %v2353
    %v2373 = vpack.c.b16 %v2356, %v2355
    %v2374 = vpack.c.b16 %v2358, %v2357
    %v2375 = vpack.c.b16 %v2360, %v2359
    %v2376 = vpack.c.b16 %v2362, %v2361
    %vm2391 = vcmask 785408
    %v2393 = vsel %vm2391, %v2274, 0
    %2395 = vmatpush.bf16.msra.mxu0 %v2370
    %2396 = vmatpush.bf16.msra.mxu0 %v2369
    %2397 = vmatpush.bf16.msra.mxu0 %v2368
    %2398 = vmatpush.bf16.msra.mxu0 %v2367
    %2399 = vmatpush.bf16.msra.mxu0 %v2366
    %2400 = vmatpush.bf16.msra.mxu0 %v2365
    %2401 = vmatpush.bf16.msra.mxu0 %v2364
    %2402 = vmatpush.bf16.msra.mxu0 %v2363
    %2403 = vmatmul.bf16.gmra.mxu0 %v2273
    %v2404 = vpop.f32.mrf.mxu0
    %v2405 = vadd.f32 %v2305, %v2404
    %v2406 = vpop.f32.mrf.mxu0
    %v2407 = vadd.f32 %v2305, %v2406
    %2408 = vdwg.mxu0
    %2409 = vmatpush.bf16.msra.mxu0 0
    %2410 = vmatpush.bf16.msra.mxu0 0
    %2411 = vmatpush.bf16.msra.mxu0 %v2376
    %2412 = vmatpush.bf16.msra.mxu0 %v2375
    %2413 = vmatpush.bf16.msra.mxu0 %v2374
    %2414 = vmatpush.bf16.msra.mxu0 %v2373
    %2415 = vmatpush.bf16.msra.mxu0 %v2372
    %2416 = vmatpush.bf16.msra.mxu0 %v2371
    %2417 = vmatmul.bf16.gmra.mxu0 %v2393
    %v2418 = vpop.f32.mrf.mxu0
    %v2419 = vadd.f32 %v2405, %v2418
    %v2420 = vpop.f32.mrf.mxu0
    %v2421 = vadd.f32 %v2407, %v2420
    %2422 = vdwg.mxu0
    %vm2423 = vcmask 7168
    %2424 = vst.msk [vmem:[%s139] sm:$0xff] %vm2423, %v2419
    %2425 = vst.msk [vmem:[%s139 + $0x8] sm:$0xff] %vm2423, %v2421
    %v2426 = vld [vmem:[%s123] sm:$0xf]
    %v2427 = vld [vmem:[%s123 + $0x4] sm:$0xf]
    %v2428 = vld [vmem:[%s123 + $0x8] sm:$0xf]
    %v2429 = vld [vmem:[%s123 + $0xc] sm:$0xf]
    %v2430 = vld [vmem:[%s123 + $0x10] sm:$0xf]
    %v2431 = vld [vmem:[%s123 + $0x14] sm:$0xf]
    %v2432 = vld [vmem:[%s123 + $0x18] sm:$0xf]
    %v2433 = vld [vmem:[%s123 + $0x1c] sm:$0xf]
    %v2434 = vld [vmem:[%s123 + $0x20] sm:$0xf]
    %v2435 = vld [vmem:[%s123 + $0x24] sm:$0xf]
    %v2436 = vld [vmem:[%s123 + $0x28] sm:$0xf]
    %v2437 = vld [vmem:[%s123 + $0x2c] sm:$0xf]
    %v2438 = vld [vmem:[%s123 + $0x30] sm:$0xf]
    %v2439 = vld [vmem:[%s123 + $0x34] sm:$0xf]
    %v2440 = vld [vmem:[%s123 + $0x38] sm:$0xf]
    %v2441 = vld [vmem:[%s123 + $0x3c] sm:$0xf]
    %v2442 = vld [vmem:[%s123 + $0x40] sm:$0xf]
    %v2443 = vld [vmem:[%s123 + $0x44] sm:$0xf]
    %v2444 = vld [vmem:[%s123 + $0x48] sm:$0xf]
    %v2445 = vld [vmem:[%s123 + $0x4c] sm:$0xf]
    %v2446 = vld [vmem:[%s123 + $0x50] sm:$0xf]
    %v2447 = vld [vmem:[%s123 + $0x54] sm:$0xf]
    %v2448 = vld [vmem:[%s123 + $0x58] sm:$0xf]
    %v2449 = vld [vmem:[%s123 + $0x5c] sm:$0xf]
    %v2450 = vld [vmem:[%s123 + $0x60] sm:$0xf]
    %v2451 = vld [vmem:[%s123 + $0x64] sm:$0xf]
    %v2452 = vld [vmem:[%s123 + $0x68] sm:$0xf]
    %v2453 = vld [vmem:[%s123 + $0x6c] sm:$0xf]
    %v2454 = vld [vmem:[#allocation25] sm:$0x1]
    %v2456 = vperm.slane %v2454, 0
    %v2486 = vunpack.c.l.b16 %v2426
    %v2487 = vunpack.c.l.b16 %v2427
    %v2488 = vunpack.c.l.b16 %v2428
    %v2489 = vunpack.c.l.b16 %v2429
    %v2490 = vunpack.c.l.b16 %v2430
    %v2491 = vunpack.c.l.b16 %v2431
    %v2492 = vunpack.c.l.b16 %v2432
    %v2493 = vunpack.c.l.b16 %v2433
    %v2494 = vunpack.c.l.b16 %v2434
    %v2495 = vunpack.c.l.b16 %v2435
    %v2496 = vunpack.c.l.b16 %v2436
    %v2497 = vunpack.c.l.b16 %v2437
    %v2498 = vunpack.c.l.b16 %v2438
    %v2499 = vunpack.c.l.b16 %v2439
    %v2500 = vunpack.c.l.b16 %v2440
    %v2501 = vunpack.c.l.b16 %v2441
    %v2502 = vunpack.c.l.b16 %v2442
    %v2503 = vunpack.c.l.b16 %v2443
    %v2504 = vunpack.c.l.b16 %v2444
    %v2505 = vunpack.c.l.b16 %v2445
    %v2506 = vunpack.c.l.b16 %v2446
    %v2507 = vunpack.c.l.b16 %v2447
    %v2508 = vunpack.c.l.b16 %v2448
    %v2509 = vunpack.c.l.b16 %v2449
    %v2510 = vunpack.c.l.b16 %v2450
    %v2511 = vunpack.c.l.b16 %v2451
    %v2512 = vunpack.c.l.b16 %v2452
    %v2513 = vunpack.c.l.b16 %v2453
    %v2514 = vpack.c.b16 %v2487, %v2486
    %v2515 = vpack.c.b16 %v2489, %v2488
    %v2516 = vpack.c.b16 %v2491, %v2490
    %v2517 = vpack.c.b16 %v2493, %v2492
    %v2518 = vpack.c.b16 %v2495, %v2494
    %v2519 = vpack.c.b16 %v2497, %v2496
    %v2520 = vpack.c.b16 %v2499, %v2498
    %v2521 = vpack.c.b16 %v2501, %v2500
    %v2522 = vpack.c.b16 %v2503, %v2502
    %v2523 = vpack.c.b16 %v2505, %v2504
    %v2524 = vpack.c.b16 %v2507, %v2506
    %v2525 = vpack.c.b16 %v2509, %v2508
    %v2526 = vpack.c.b16 %v2511, %v2510
    %v2527 = vpack.c.b16 %v2513, %v2512
    %2542 = vmatpush.bf16.msra.mxu0 %v2521
    %2543 = vmatpush.bf16.msra.mxu0 %v2520
    %2544 = vmatpush.bf16.msra.mxu0 %v2519
    %2545 = vmatpush.bf16.msra.mxu0 %v2518
    %2546 = vmatpush.bf16.msra.mxu0 %v2517
    %2547 = vmatpush.bf16.msra.mxu0 %v2516
    %2548 = vmatpush.bf16.msra.mxu0 %v2515
    %2549 = vmatpush.bf16.msra.mxu0 %v2514
    %2550 = vmatmul.bf16.gmra.mxu0 %v2273
    %v2551 = vpop.f32.mrf.mxu0
    %v2552 = vadd.f32 %v2456, %v2551
    %v2553 = vpop.f32.mrf.mxu0
    %v2554 = vadd.f32 %v2456, %v2553
    %2555 = vdwg.mxu0
    %2556 = vmatpush.bf16.msra.mxu0 0
    %2557 = vmatpush.bf16.msra.mxu0 0
    %2558 = vmatpush.bf16.msra.mxu0 %v2527
    %2559 = vmatpush.bf16.msra.mxu0 %v2526
    %2560 = vmatpush.bf16.msra.mxu0 %v2525
    %2561 = vmatpush.bf16.msra.mxu0 %v2524
    %2562 = vmatpush.bf16.msra.mxu0 %v2523
    %2563 = vmatpush.bf16.msra.mxu0 %v2522
    %2564 = vmatmul.bf16.gmra.mxu0 %v2393
    %v2565 = vpop.f32.mrf.mxu0
    %v2566 = vadd.f32 %v2552, %v2565
    %v2567 = vpop.f32.mrf.mxu0
    %v2568 = vadd.f32 %v2554, %v2567
    %2569 = vdwg.mxu0
    %2570 = vst.msk [vmem:[%s141] sm:$0xff] %vm570, %v2566
    %2571 = vst.msk [vmem:[%s141 + $0x8] sm:$0xff] %vm570, %v2568
    %v2572 = vld [vmem:[%s127] sm:$0xf]
    %v2573 = vld [vmem:[%s127 + $0x4] sm:$0xf]
    %v2574 = vld [vmem:[%s127 + $0x8] sm:$0xf]
    %v2575 = vld [vmem:[%s127 + $0xc] sm:$0xf]
    %v2576 = vld [vmem:[%s127 + $0x10] sm:$0xf]
    %v2577 = vld [vmem:[%s127 + $0x14] sm:$0xf]
    %v2578 = vld [vmem:[%s127 + $0x18] sm:$0xf]
    %v2579 = vld [vmem:[%s127 + $0x1c] sm:$0xf]
    %v2580 = vld [vmem:[%s127 + $0x20] sm:$0xf]
    %v2581 = vld [vmem:[%s127 + $0x24] sm:$0xf]
    %v2582 = vld [vmem:[%s127 + $0x28] sm:$0xf]
    %v2583 = vld [vmem:[%s127 + $0x2c] sm:$0xf]
    %v2584 = vld [vmem:[%s127 + $0x30] sm:$0xf]
    %v2585 = vld [vmem:[%s127 + $0x34] sm:$0xf]
    %v2586 = vld [vmem:[%s127 + $0x38] sm:$0xf]
    %v2587 = vld [vmem:[%s127 + $0x3c] sm:$0xf]
    %v2588 = vld [vmem:[%s127 + $0x40] sm:$0xf]
    %v2589 = vld [vmem:[%s127 + $0x44] sm:$0xf]
    %v2590 = vld [vmem:[%s127 + $0x48] sm:$0xf]
    %v2591 = vld [vmem:[%s127 + $0x4c] sm:$0xf]
    %v2592 = vld [vmem:[%s127 + $0x50] sm:$0xf]
    %v2593 = vld [vmem:[%s127 + $0x54] sm:$0xf]
    %v2594 = vld [vmem:[%s127 + $0x58] sm:$0xf]
    %v2595 = vld [vmem:[%s127 + $0x5c] sm:$0xf]
    %v2596 = vld [vmem:[%s127 + $0x60] sm:$0xf]
    %v2597 = vld [vmem:[%s127 + $0x64] sm:$0xf]
    %v2598 = vld [vmem:[%s127 + $0x68] sm:$0xf]
    %v2599 = vld [vmem:[%s127 + $0x6c] sm:$0xf]
    %v2600 = vld [vmem:[#allocation27] sm:$0x1]
    %v2602 = vperm.slane %v2600, 0
    %v2632 = vunpack.c.l.b16 %v2572
    %v2633 = vunpack.c.l.b16 %v2573
    %v2634 = vunpack.c.l.b16 %v2574
    %v2635 = vunpack.c.l.b16 %v2575
    %v2636 = vunpack.c.l.b16 %v2576
    %v2637 = vunpack.c.l.b16 %v2577
    %v2638 = vunpack.c.l.b16 %v2578
    %v2639 = vunpack.c.l.b16 %v2579
    %v2640 = vunpack.c.l.b16 %v2580
    %v2641 = vunpack.c.l.b16 %v2581
    %v2642 = vunpack.c.l.b16 %v2582
    %v2643 = vunpack.c.l.b16 %v2583
    %v2644 = vunpack.c.l.b16 %v2584
    %v2645 = vunpack.c.l.b16 %v2585
    %v2646 = vunpack.c.l.b16 %v2586
    %v2647 = vunpack.c.l.b16 %v2587
    %v2648 = vunpack.c.l.b16 %v2588
    %v2649 = vunpack.c.l.b16 %v2589
    %v2650 = vunpack.c.l.b16 %v2590
    %v2651 = vunpack.c.l.b16 %v2591
    %v2652 = vunpack.c.l.b16 %v2592
    %v2653 = vunpack.c.l.b16 %v2593
    %v2654 = vunpack.c.l.b16 %v2594
    %v2655 = vunpack.c.l.b16 %v2595
    %v2656 = vunpack.c.l.b16 %v2596
    %v2657 = vunpack.c.l.b16 %v2597
    %v2658 = vunpack.c.l.b16 %v2598
    %v2659 = vunpack.c.l.b16 %v2599
    %v2660 = vpack.c.b16 %v2633, %v2632
    %v2661 = vpack.c.b16 %v2635, %v2634
    %v2662 = vpack.c.b16 %v2637, %v2636
    %v2663 = vpack.c.b16 %v2639, %v2638
    %v2664 = vpack.c.b16 %v2641, %v2640
    %v2665 = vpack.c.b16 %v2643, %v2642
    %v2666 = vpack.c.b16 %v2645, %v2644
    %v2667 = vpack.c.b16 %v2647, %v2646
    %v2668 = vpack.c.b16 %v2649, %v2648
    %v2669 = vpack.c.b16 %v2651, %v2650
    %v2670 = vpack.c.b16 %v2653, %v2652
    %v2671 = vpack.c.b16 %v2655, %v2654
    %v2672 = vpack.c.b16 %v2657, %v2656
    %v2673 = vpack.c.b16 %v2659, %v2658
    %2688 = vmatpush.bf16.msra.mxu0 %v2667
    %2689 = vmatpush.bf16.msra.mxu0 %v2666
    %2690 = vmatpush.bf16.msra.mxu0 %v2665
    %2691 = vmatpush.bf16.msra.mxu0 %v2664
    %2692 = vmatpush.bf16.msra.mxu0 %v2663
    %2693 = vmatpush.bf16.msra.mxu0 %v2662
    %2694 = vmatpush.bf16.msra.mxu0 %v2661
    %2695 = vmatpush.bf16.msra.mxu0 %v2660
    %2696 = vmatmul.bf16.gmra.mxu0 %v2273
    %v2697 = vpop.f32.mrf.mxu0
    %v2698 = vadd.f32 %v2602, %v2697
    %v2699 = vpop.f32.mrf.mxu0
    %v2700 = vadd.f32 %v2602, %v2699
    %2701 = vdwg.mxu0
    %2702 = vmatpush.bf16.msra.mxu0 0
    %2703 = vmatpush.bf16.msra.mxu0 0
    %2704 = vmatpush.bf16.msra.mxu0 %v2673
    %2705 = vmatpush.bf16.msra.mxu0 %v2672
    %2706 = vmatpush.bf16.msra.mxu0 %v2671
    %2707 = vmatpush.bf16.msra.mxu0 %v2670
    %2708 = vmatpush.bf16.msra.mxu0 %v2669
    %2709 = vmatpush.bf16.msra.mxu0 %v2668
    %2710 = vmatmul.bf16.gmra.mxu0 %v2393
    %v2711 = vpop.f32.mrf.mxu0
    %v2712 = vadd.f32 %v2698, %v2711
    %v2713 = vpop.f32.mrf.mxu0
    %v2714 = vadd.f32 %v2700, %v2713
    %2715 = vdwg.mxu0
    %2716 = vst.msk [vmem:[%s143] sm:$0xff] %vm570, %v2712
    %2717 = vst.msk [vmem:[%s143 + $0x8] sm:$0xff] %vm570, %v2714
    %v2718 = vld [vmem:[%s131] sm:$0xf]
    %v2719 = vld [vmem:[%s131 + $0x4] sm:$0xf]
    %v2720 = vld [vmem:[%s131 + $0x8] sm:$0xf]
    %v2721 = vld [vmem:[%s131 + $0xc] sm:$0xf]
    %v2722 = vld [vmem:[%s131 + $0x10] sm:$0xf]
    %v2723 = vld [vmem:[%s131 + $0x14] sm:$0xf]
    %v2724 = vld [vmem:[%s131 + $0x18] sm:$0xf]
    %v2725 = vld [vmem:[%s131 + $0x1c] sm:$0xf]
    %v2726 = vld [vmem:[%s131 + $0x20] sm:$0xf]
    %v2727 = vld [vmem:[%s131 + $0x24] sm:$0xf]
    %v2728 = vld [vmem:[%s131 + $0x28] sm:$0xf]
    %v2729 = vld [vmem:[%s131 + $0x2c] sm:$0xf]
    %v2730 = vld [vmem:[%s131 + $0x30] sm:$0xf]
    %v2731 = vld [vmem:[%s131 + $0x34] sm:$0xf]
    %v2732 = vld [vmem:[%s131 + $0x38] sm:$0xf]
    %v2733 = vld [vmem:[%s131 + $0x3c] sm:$0xf]
    %v2734 = vld [vmem:[%s131 + $0x40] sm:$0xf]
    %v2735 = vld [vmem:[%s131 + $0x44] sm:$0xf]
    %v2736 = vld [vmem:[%s131 + $0x48] sm:$0xf]
    %v2737 = vld [vmem:[%s131 + $0x4c] sm:$0xf]
    %v2738 = vld [vmem:[%s131 + $0x50] sm:$0xf]
    %v2739 = vld [vmem:[%s131 + $0x54] sm:$0xf]
    %v2740 = vld [vmem:[%s131 + $0x58] sm:$0xf]
    %v2741 = vld [vmem:[%s131 + $0x5c] sm:$0xf]
    %v2742 = vld [vmem:[%s131 + $0x60] sm:$0xf]
    %v2743 = vld [vmem:[%s131 + $0x64] sm:$0xf]
    %v2744 = vld [vmem:[%s131 + $0x68] sm:$0xf]
    %v2745 = vld [vmem:[%s131 + $0x6c] sm:$0xf]
    %v2746 = vld [vmem:[#allocation28] sm:$0x1]
    %v2748 = vperm.slane %v2746, 0
    %v2778 = vunpack.c.l.b16 %v2718
    %v2779 = vunpack.c.l.b16 %v2719
    %v2780 = vunpack.c.l.b16 %v2720
    %v2781 = vunpack.c.l.b16 %v2721
    %v2782 = vunpack.c.l.b16 %v2722
    %v2783 = vunpack.c.l.b16 %v2723
    %v2784 = vunpack.c.l.b16 %v2724
    %v2785 = vunpack.c.l.b16 %v2725
    %v2786 = vunpack.c.l.b16 %v2726
    %v2787 = vunpack.c.l.b16 %v2727
    %v2788 = vunpack.c.l.b16 %v2728
    %v2789 = vunpack.c.l.b16 %v2729
    %v2790 = vunpack.c.l.b16 %v2730
    %v2791 = vunpack.c.l.b16 %v2731
    %v2792 = vunpack.c.l.b16 %v2732
    %v2793 = vunpack.c.l.b16 %v2733
    %v2794 = vunpack.c.l.b16 %v2734
    %v2795 = vunpack.c.l.b16 %v2735
    %v2796 = vunpack.c.l.b16 %v2736
    %v2797 = vunpack.c.l.b16 %v2737
    %v2798 = vunpack.c.l.b16 %v2738
    %v2799 = vunpack.c.l.b16 %v2739
    %v2800 = vunpack.c.l.b16 %v2740
    %v2801 = vunpack.c.l.b16 %v2741
    %v2802 = vunpack.c.l.b16 %v2742
    %v2803 = vunpack.c.l.b16 %v2743
    %v2804 = vunpack.c.l.b16 %v2744
    %v2805 = vunpack.c.l.b16 %v2745
    %v2806 = vpack.c.b16 %v2779, %v2778
    %v2807 = vpack.c.b16 %v2781, %v2780
    %v2808 = vpack.c.b16 %v2783, %v2782
    %v2809 = vpack.c.b16 %v2785, %v2784
    %v2810 = vpack.c.b16 %v2787, %v2786
    %v2811 = vpack.c.b16 %v2789, %v2788
    %v2812 = vpack.c.b16 %v2791, %v2790
    %v2813 = vpack.c.b16 %v2793, %v2792
    %v2814 = vpack.c.b16 %v2795, %v2794
    %v2815 = vpack.c.b16 %v2797, %v2796
    %v2816 = vpack.c.b16 %v2799, %v2798
    %v2817 = vpack.c.b16 %v2801, %v2800
    %v2818 = vpack.c.b16 %v2803, %v2802
    %v2819 = vpack.c.b16 %v2805, %v2804
    %2834 = vmatpush.bf16.msra.mxu0 %v2813
    %2835 = vmatpush.bf16.msra.mxu0 %v2812
    %2836 = vmatpush.bf16.msra.mxu0 %v2811
    %2837 = vmatpush.bf16.msra.mxu0 %v2810
    %2838 = vmatpush.bf16.msra.mxu0 %v2809
    %2839 = vmatpush.bf16.msra.mxu0 %v2808
    %2840 = vmatpush.bf16.msra.mxu0 %v2807
    %2841 = vmatpush.bf16.msra.mxu0 %v2806
    %2842 = vmatmul.bf16.gmra.mxu0 %v2273
    %v2843 = vpop.f32.mrf.mxu0
    %v2844 = vadd.f32 %v2748, %v2843
    %v2845 = vpop.f32.mrf.mxu0
    %v2846 = vadd.f32 %v2748, %v2845
    %2847 = vdwg.mxu0
    %2848 = vmatpush.bf16.msra.mxu0 0
    %2849 = vmatpush.bf16.msra.mxu0 0
    %2850 = vmatpush.bf16.msra.mxu0 %v2819
    %2851 = vmatpush.bf16.msra.mxu0 %v2818
    %2852 = vmatpush.bf16.msra.mxu0 %v2817
    %2853 = vmatpush.bf16.msra.mxu0 %v2816
    %2854 = vmatpush.bf16.msra.mxu0 %v2815
    %2855 = vmatpush.bf16.msra.mxu0 %v2814
    %2856 = vmatmul.bf16.gmra.mxu0 %v2393
    %v2857 = vpop.f32.mrf.mxu0
    %v2858 = vadd.f32 %v2844, %v2857
    %v2859 = vpop.f32.mrf.mxu0
    %v2860 = vadd.f32 %v2846, %v2859
    %2861 = vdwg.mxu0
    %2862 = vst.msk [vmem:[%s149] sm:$0xff] %vm544, %v2858
    %2863 = vst.msk [vmem:[%s149 + $0x8] sm:$0xff] %vm544, %v2860
    %v2864 = vld [vmem:[%s135] sm:$0xf]
    %v2865 = vld [vmem:[%s135 + $0x4] sm:$0xf]
    %v2866 = vld [vmem:[%s135 + $0x8] sm:$0xf]
    %v2867 = vld [vmem:[%s135 + $0xc] sm:$0xf]
    %v2868 = vld [vmem:[%s135 + $0x10] sm:$0xf]
    %v2869 = vld [vmem:[%s135 + $0x14] sm:$0xf]
    %v2870 = vld [vmem:[%s135 + $0x18] sm:$0xf]
    %v2871 = vld [vmem:[%s135 + $0x1c] sm:$0xf]
    %v2872 = vld [vmem:[%s135 + $0x20] sm:$0xf]
    %v2873 = vld [vmem:[%s135 + $0x24] sm:$0xf]
    %v2874 = vld [vmem:[%s135 + $0x28] sm:$0xf]
    %v2875 = vld [vmem:[%s135 + $0x2c] sm:$0xf]
    %v2876 = vld [vmem:[%s135 + $0x30] sm:$0xf]
    %v2877 = vld [vmem:[%s135 + $0x34] sm:$0xf]
    %v2878 = vld [vmem:[%s135 + $0x38] sm:$0xf]
    %v2879 = vld [vmem:[%s135 + $0x3c] sm:$0xf]
    %v2880 = vld [vmem:[%s135 + $0x40] sm:$0xf]
    %v2881 = vld [vmem:[%s135 + $0x44] sm:$0xf]
    %v2882 = vld [vmem:[%s135 + $0x48] sm:$0xf]
    %v2883 = vld [vmem:[%s135 + $0x4c] sm:$0xf]
    %v2884 = vld [vmem:[%s135 + $0x50] sm:$0xf]
    %v2885 = vld [vmem:[%s135 + $0x54] sm:$0xf]
    %v2886 = vld [vmem:[%s135 + $0x58] sm:$0xf]
    %v2887 = vld [vmem:[%s135 + $0x5c] sm:$0xf]
    %v2888 = vld [vmem:[%s135 + $0x60] sm:$0xf]
    %v2889 = vld [vmem:[%s135 + $0x64] sm:$0xf]
    %v2890 = vld [vmem:[%s135 + $0x68] sm:$0xf]
    %v2891 = vld [vmem:[%s135 + $0x6c] sm:$0xf]
    %v2892 = vld [vmem:[#allocation3] sm:$0x1]
    %v2894 = vperm.slane %v2892, 0
    %v2924 = vunpack.c.l.b16 %v2864
    %v2925 = vunpack.c.l.b16 %v2865
    %v2926 = vunpack.c.l.b16 %v2866
    %v2927 = vunpack.c.l.b16 %v2867
    %v2928 = vunpack.c.l.b16 %v2868
    %v2929 = vunpack.c.l.b16 %v2869
    %v2930 = vunpack.c.l.b16 %v2870
    %v2931 = vunpack.c.l.b16 %v2871
    %v2932 = vunpack.c.l.b16 %v2872
    %v2933 = vunpack.c.l.b16 %v2873
    %v2934 = vunpack.c.l.b16 %v2874
    %v2935 = vunpack.c.l.b16 %v2875
    %v2936 = vunpack.c.l.b16 %v2876
    %v2937 = vunpack.c.l.b16 %v2877
    %v2938 = vunpack.c.l.b16 %v2878
    %v2939 = vunpack.c.l.b16 %v2879
    %v2940 = vunpack.c.l.b16 %v2880
    %v2941 = vunpack.c.l.b16 %v2881
    %v2942 = vunpack.c.l.b16 %v2882
    %v2943 = vunpack.c.l.b16 %v2883
    %v2944 = vunpack.c.l.b16 %v2884
    %v2945 = vunpack.c.l.b16 %v2885
    %v2946 = vunpack.c.l.b16 %v2886
    %v2947 = vunpack.c.l.b16 %v2887
    %v2948 = vunpack.c.l.b16 %v2888
    %v2949 = vunpack.c.l.b16 %v2889
    %v2950 = vunpack.c.l.b16 %v2890
    %v2951 = vunpack.c.l.b16 %v2891
    %v2952 = vpack.c.b16 %v2925, %v2924
    %v2953 = vpack.c.b16 %v2927, %v2926
    %v2954 = vpack.c.b16 %v2929, %v2928
    %v2955 = vpack.c.b16 %v2931, %v2930
    %v2956 = vpack.c.b16 %v2933, %v2932
    %v2957 = vpack.c.b16 %v2935, %v2934
    %v2958 = vpack.c.b16 %v2937, %v2936
    %v2959 = vpack.c.b16 %v2939, %v2938
    %v2960 = vpack.c.b16 %v2941, %v2940
    %v2961 = vpack.c.b16 %v2943, %v2942
    %v2962 = vpack.c.b16 %v2945, %v2944
    %v2963 = vpack.c.b16 %v2947, %v2946
    %v2964 = vpack.c.b16 %v2949, %v2948
    %v2965 = vpack.c.b16 %v2951, %v2950
    %2980 = vmatpush.bf16.msra.mxu0 %v2959
    %2981 = vmatpush.bf16.msra.mxu0 %v2958
    %2982 = vmatpush.bf16.msra.mxu0 %v2957
    %2983 = vmatpush.bf16.msra.mxu0 %v2956
    %2984 = vmatpush.bf16.msra.mxu0 %v2955
    %2985 = vmatpush.bf16.msra.mxu0 %v2954
    %2986 = vmatpush.bf16.msra.mxu0 %v2953
    %2987 = vmatpush.bf16.msra.mxu0 %v2952
    %2988 = vmatmul.bf16.gmra.mxu0 %v2273
    %v2989 = vpop.f32.mrf.mxu0
    %v2990 = vadd.f32 %v2894, %v2989
    %v2991 = vpop.f32.mrf.mxu0
    %v2992 = vadd.f32 %v2894, %v2991
    %2993 = vdwg.mxu0
    %2994 = vmatpush.bf16.msra.mxu0 0
    %2995 = vmatpush.bf16.msra.mxu0 0
    %2996 = vmatpush.bf16.msra.mxu0 %v2965
    %2997 = vmatpush.bf16.msra.mxu0 %v2964
    %2998 = vmatpush.bf16.msra.mxu0 %v2963
    %2999 = vmatpush.bf16.msra.mxu0 %v2962
    %3000 = vmatpush.bf16.msra.mxu0 %v2961
    %3001 = vmatpush.bf16.msra.mxu0 %v2960
    %3002 = vmatmul.bf16.gmra.mxu0 %v2393
    %v3003 = vpop.f32.mrf.mxu0
    %v3004 = vadd.f32 %v2990, %v3003
    %v3005 = vpop.f32.mrf.mxu0
    %v3006 = vadd.f32 %v2992, %v3005
    %3007 = vdwg.mxu0
    %3008 = vst.msk [vmem:[%s151] sm:$0xff] %vm2423, %v3004
    %3009 = vst.msk [vmem:[%s151 + $0x8] sm:$0xff] %vm2423, %v3006
    // Predicated region
    $region342: #{block_generator_forward.1} parent=1 // pred_check
      _
    $region343: #{block_generator_forward.1} parent=1 // pred_check_branch
      %3011 = sbr.rel (0) target = $region345
    $region344: #{block_generator_forward.1} parent=1 // pred_region
      _
    $region345: #{block_generator_forward.1} parent=1 // pred_fallthru
      _
    // Predicated region
    $region346: #{block_generator_forward.1} parent=1 // pred_check
      _
    $region347: #{block_generator_forward.1} parent=1 // pred_check_branch
      %3013 = sbr.rel (0) target = $region349
    $region348: #{block_generator_forward.1} parent=1 // pred_region
      _
    $region349: #{block_generator_forward.1} parent=1 // pred_fallthru
      _
    // Predicated region
    $region350: #{block_generator_forward.1} parent=1 // pred_check
      _
    $region351: #{block_generator_forward.1} parent=1 // pred_check_branch
      %3015 = sbr.rel (0) target = $region353
    $region352: #{block_generator_forward.1} parent=1 // pred_region
      _
    $region353: #{block_generator_forward.1} parent=1 // pred_fallthru
      _
    // Predicated region
    $region354: #{block_generator_forward.1} parent=1 // pred_check
      _
    $region355: #{block_generator_forward.1} parent=1 // pred_check_branch
      %3017 = sbr.rel (0) target = $region357
    $region356: #{block_generator_forward.1} parent=1 // pred_region
      %3019 = vsyncadd [#allocation6], 0
      %s3021 = sshll.u32 [#allocation30], 4
      %s3022 = int_to_ptr.vmem [resolvable:$true] %s3021
      %s3023 = sshll.u32 %s145, 4
      %s3024 = int_to_ptr.hbm [resolvable:$true] %s3023
      %3026 = dma.vmem_to_hbm [thread:$0]  %s3022, 32, %s3024, [#allocation6]
    $region357: #{block_generator_forward.1} parent=1 // pred_fallthru
      _
    // Predicated region
    $region358: #{block_generator_forward.1} parent=1 // pred_check
      _
    $region359: #{block_generator_forward.1} parent=1 // pred_check_branch
      %3028 = sbr.rel (0) target = $region361
    $region360: #{block_generator_forward.1} parent=1 // pred_region
      %3030 = vsyncadd [#allocation32], 0
      %s3032 = sshll.u32 [#allocation31], 4
      %s3033 = int_to_ptr.vmem [resolvable:$true] %s3032
      %s3034 = sshll.u32 %s147, 4
      %s3035 = int_to_ptr.hbm [resolvable:$true] %s3034
      %3037 = dma.vmem_to_hbm [thread:$0]  %s3033, 32, %s3035, [#allocation32]
    $region361: #{block_generator_forward.1} parent=1 // pred_fallthru
      _
    // Predicated region
    $region362: #{block_generator_forward.1} parent=1 // pred_check
      _
    $region363: #{block_generator_forward.1} parent=1 // pred_check_branch
      %3039 = sbr.rel (0) target = $region365
    $region364: #{block_generator_forward.1} parent=1 // pred_region
      _
    $region365: #{block_generator_forward.1} parent=1 // pred_fallthru
      _
    // Predicated region
    $region366: #{block_generator_forward.1} parent=1 // pred_check
      _
    $region367: #{block_generator_forward.1} parent=1 // pred_check_branch
      %3041 = sbr.rel (0) target = $region369
    $region368: #{block_generator_forward.1} parent=1 // pred_region
      _
    $region369: #{block_generator_forward.1} parent=1 // pred_fallthru
      _
    // Predicated region
    $region370: #{block_generator_forward.1} parent=1 // pred_check
      _
    $region371: #{block_generator_forward.1} parent=1 // pred_check_branch
      %3043 = sbr.rel (0) target = $region373
    $region372: #{block_generator_forward.1} parent=1 // pred_region
      _
    $region373: #{block_generator_forward.1} parent=1 // pred_fallthru
      _
    // Predicated region
    $region374: #{block_generator_forward.1} parent=1 // pred_check
      _
    $region375: #{block_generator_forward.1} parent=1 // pred_check_branch
      %3045 = sbr.rel (0) target = $region377
    $region376: #{block_generator_forward.1} parent=1 // pred_region
      _
    $region377: #{block_generator_forward.1} parent=1 // pred_fallthru
      _
    // Predicated region
    $region378: #{block_generator_forward.1} parent=1 // pred_check
      _
    $region379: #{block_generator_forward.1} parent=1 // pred_check_branch
      %3047 = sbr.rel (0) target = $region381
    $region380: #{block_generator_forward.1} parent=1 // pred_region
      _
    $region381: #{block_generator_forward.1} parent=1 // pred_fallthru
      _
    // Predicated region
    $region382: #{block_generator_forward.1} parent=1 // pred_check
      _
    $region383: #{block_generator_forward.1} parent=1 // pred_check_branch
      %3049 = sbr.rel (0) target = $region385
    $region384: #{block_generator_forward.1} parent=1 // pred_region
      %3051 = dma.done [#allocation6], 32
    $region385: #{block_generator_forward.1} parent=1 // pred_fallthru
      _
    // Predicated region
    $region386: #{block_generator_forward.1} parent=1 // pred_check
      _
    $region387: #{block_generator_forward.1} parent=1 // pred_check_branch
      %3053 = sbr.rel (0) target = $region389
    $region388: #{block_generator_forward.1} parent=1 // pred_region
      %3055 = dma.done [#allocation32], 32
    $region389: #{block_generator_forward.1} parent=1 // pred_fallthru
      _
    // Predicated region
    $region390: #{block_generator_forward.1} parent=1 // pred_check
      _
    $region391: #{block_generator_forward.1} parent=1 // pred_check_branch
      %3057 = sbr.rel (0) target = $region393
    $region392: #{block_generator_forward.1} parent=1 // pred_region
      _
    $region393: #{block_generator_forward.1} parent=1 // pred_fallthru
      _
    // Predicated region
    $region394: #{block_generator_forward.1} parent=1 // pred_check
      _
    $region395: #{block_generator_forward.1} parent=1 // pred_check_branch
      %3059 = sbr.rel (0) target = $region397
    $region396: #{block_generator_forward.1} parent=1 // pred_region
      _
    $region397: #{block_generator_forward.1} parent=1 // pred_fallthru
      _
    %3060 = vsyncpa [#allocation5], 1
    %3061 = vsyncpa [#allocation8], 1
    %3062 = vsyncpa [#allocation11], 1
    %3063 = vsyncpa [#allocation14], 1
    %3064 = vsyncpa [#allocation17], 1
    %3065 = vsyncpa [#allocation20], 1
    %3066 = vsyncpa [#allocation23], 1
    %3067 = vsyncpa [#allocation26], 1
    %3068 = vsyncpa [#allocation29], 1
    %3069 = vsyncpa [#allocation6], 1
    %3070 = vsyncpa [#allocation32], 1

</llo_original>
